<compile_context>
chip_gen: v5e
topology: v5e:2x2
jax: 0.10.0
libtpu: 0.0.40
codegen_flags: <defaults>
</compile_context>

<pallas_src>
import functools
import math

import jax
import jax.numpy as jnp
from jax.experimental import pallas as pl
from jax.experimental.pallas import tpu as pltpu


# ---------------------------------------------------------------------------
# constants / small helpers
# ---------------------------------------------------------------------------

_GELU_C = math.sqrt(2.0 / math.pi)
_LN_EPS = 1e-6


def _gelu_tanh(x):
    # torch.nn.GELU(approximate='tanh')
    return 0.5 * x * (1.0 + jnp.tanh(_GELU_C * (x + 0.044715 * x * x * x)))


@functools.lru_cache(maxsize=None)
def _tpu_vmem_capacity():
    try:
        return int(pltpu.get_tpu_info().vmem_capacity_bytes)
    except Exception:
        return 64 << 20  # conservative fallback


def _vmem_budget():
    cap = _tpu_vmem_capacity()
    # ~45% of physical VMEM, capped; explicit vmem_limit_bytes below means we
    # are not bound by the 16/32 MiB scoped defaults.
    return max(12 << 20, min(int(cap * 0.45), 48 << 20))


def _vmem_limit():
    cap = _tpu_vmem_capacity()
    return int(min(cap, _vmem_budget() + (16 << 20)))


def _pick_tm(m, weight_bytes, per_row_bytes, budget, dtype):
    """Row tile: a divisor of M (multiple of the sublane pack) fitting budget;
    prefer >=2 grid steps so both v7x TensorCores get work."""
    align = 16 if jnp.dtype(dtype).itemsize < 4 else 8
    cands = [t for t in range(align, m + 1, align) if m % t == 0]
    cands.sort(reverse=True)
    if not cands:
        return m  # full-extent block (allowed: equals the full array dim)
    fit = [t for t in cands
           if weight_bytes + 2 * t * per_row_bytes <= budget] or [cands[-1]]
    multi = [t for t in fit if m // t >= 2]
    return (multi or fit)[0]


def _row_call(kernel, row_inputs, consts, out_dims, out_dtypes, *, tm,
              cost_estimate=None):
    """Run `kernel` over row tiles of the (M, d_i) `row_inputs`; `consts` use a
    constant index_map so they stay VMEM-resident across grid steps."""
    m = row_inputs[0].shape[0]
    grid = (m // tm,)

    in_specs = [pl.BlockSpec((tm, a.shape[1]), lambda i: (i, 0))
                for a in row_inputs]
    in_specs += [pl.BlockSpec(c.shape, lambda i, nd=c.ndim: (0,) * nd)
                 for c in consts]

    out_shape = [jax.ShapeDtypeStruct((m, dd), dt)
                 for dd, dt in zip(out_dims, out_dtypes)]
    out_specs = [pl.BlockSpec((tm, dd), lambda i: (i, 0)) for dd in out_dims]
    if len(out_shape) == 1:
        out_shape, out_specs = out_shape[0], out_specs[0]
    else:
        out_shape, out_specs = tuple(out_shape), tuple(out_specs)

    return pl.pallas_call(
        kernel,
        out_shape=out_shape,
        grid=grid,
        in_specs=in_specs,
        out_specs=out_specs,
        compiler_params=pltpu.CompilerParams(
            dimension_semantics=("parallel",),
            vmem_limit_bytes=_vmem_limit()),
        cost_estimate=cost_estimate,
    )(*row_inputs, *consts)


# ---------------------------------------------------------------------------
# kernels
# ---------------------------------------------------------------------------

def _ln_qkv_kernel(x_ref, g_ref, b_ref, wqkv_ref, bqkv_ref,
                   xln_ref, qkv_ref, *, eps):
    """xln = LN1(x); qkv = xln @ Wqkv + bqkv  (fused, weights resident)."""
    x = x_ref[...].astype(jnp.float32)
    mu = jnp.mean(x, axis=-1, keepdims=True)
    xc = x - mu
    var = jnp.mean(xc * xc, axis=-1, keepdims=True)
    xln = xc * jax.lax.rsqrt(var + eps)
    xln = xln * g_ref[...].astype(jnp.float32) + b_ref[...].astype(jnp.float32)
    xln_c = xln.astype(xln_ref.dtype)
    xln_ref[...] = xln_c
    w = wqkv_ref[...]
    qkv = jnp.dot(xln_c.astype(w.dtype), w, preferred_element_type=jnp.float32)
    qkv_ref[...] = (qkv + bqkv_ref[...].astype(jnp.float32)).astype(qkv_ref.dtype)


def _attention_kernel(qkv_ref, bias_ref, o_ref, *, num_heads, depth, scale):
    """Per-batch attention.  Heads are split from the lane-dense (S, 3D) qkv
    block in VMEM; bias (1,S,S) is broadcast over heads in-kernel; the output
    is written back already concatenated as (S, D)."""
    d = num_heads * depth
    qkv = qkv_ref[...]                              # (S, 3D), storage dtype
    bias = bias_ref[0].astype(jnp.float32)          # (S, S)  mask*-1e9 + adjoin
    outs = []
    for h in range(num_heads):
        lo = h * depth
        q = qkv[:, lo:lo + depth]
        k = qkv[:, d + lo:d + lo + depth]
        v = qkv[:, 2 * d + lo:2 * d + lo + depth]
        s_log = jax.lax.dot_general(
            q, k, (((1,), (1,)), ((), ())),
            preferred_element_type=jnp.float32) * scale + bias
        m = jnp.max(s_log, axis=-1, keepdims=True)
        p = jnp.exp(s_log - m)
        p = p / jnp.sum(p, axis=-1, keepdims=True)
        outs.append(jnp.dot(p.astype(v.dtype), v,
                            preferred_element_type=jnp.float32))
    o_ref[...] = jnp.concatenate(outs, axis=-1).astype(o_ref.dtype)


def _post_attn_ffn_kernel(attn_ref, xln_ref, wo_ref, bo_ref, g2_ref, be2_ref,
                          w1_ref, b1_ref, w2_ref, b2_ref, g3_ref, be3_ref,
                          o_ref, *, eps):
    """x3 = LN3(x2 + FFN(x2)),  x2 = LN2(xln + attn @ Wo + bo)  (fused)."""
    def ln(v, g_ref_, b_ref_):
        mu = jnp.mean(v, axis=-1, keepdims=True)
        vc = v - mu
        var = jnp.mean(vc * vc, axis=-1, keepdims=True)
        return (vc * jax.lax.rsqrt(var + eps)
                * g_ref_[...].astype(jnp.float32)
                + b_ref_[...].astype(jnp.float32))

    wo = wo_ref[...]
    attn_out = jnp.dot(attn_ref[...].astype(wo.dtype), wo,
                       preferred_element_type=jnp.float32)
    attn_out = attn_out + bo_ref[...].astype(jnp.float32)
    x2 = ln(xln_ref[...].astype(jnp.float32) + attn_out, g2_ref, be2_ref)

    w1 = w1_ref[...]
    h = jnp.dot(x2.astype(w1.dtype), w1, preferred_element_type=jnp.float32)
    h = _gelu_tanh(h + b1_ref[...].astype(jnp.float32))
    ff = jnp.dot(h.astype(w2_ref.dtype), w2_ref[...],
                 preferred_element_type=jnp.float32)
    ff = ff + b2_ref[...].astype(jnp.float32)

    x3 = ln(x2 + ff, g3_ref, be3_ref)
    o_ref[...] = x3.astype(o_ref.dtype)


def _head_kernel(x_ref, w1_ref, b1_ref, g_ref, be_ref, w2row_ref, b2_ref,
                 o_ref, *, eps):
    """f2(LN(gelu_tanh(f1(x)))) fused head.  w2row is f2.weight as (1, d)."""
    w1 = w1_ref[...]
    h = jnp.dot(x_ref[...].astype(w1.dtype), w1,
                preferred_element_type=jnp.float32)
    h = _gelu_tanh(h + b1_ref[...].astype(jnp.float32))
    mu = jnp.mean(h, axis=-1, keepdims=True)
    hc = h - mu
    var = jnp.mean(hc * hc, axis=-1, keepdims=True)
    h = hc * jax.lax.rsqrt(var + eps)
    h = h * g_ref[...].astype(jnp.float32) + be_ref[...].astype(jnp.float32)
    # [TM, d] x [d, 1] as elementwise-mul + lane reduce (avoids a degenerate
    # 1-column MXU matmul).
    y = jnp.sum(h * w2row_ref[...].astype(jnp.float32), axis=-1, keepdims=True)
    o_ref[...] = (y + b2_ref[...].astype(jnp.float32)).astype(o_ref.dtype)


# ---------------------------------------------------------------------------
# wrappers
# ---------------------------------------------------------------------------

def _attention(qkv3, bias, num_heads):
    """qkv3: (B, S, 3D) storage dtype; bias: (B, 1, S, S) f32 additive bias."""
    b, s, d3 = qkv3.shape
    d = d3 // 3
    depth = d // num_heads
    dt = qkv3.dtype
    it = jnp.dtype(dt).itemsize
    cost = pl.CostEstimate(
        flops=int(4 * b * num_heads * s * s * depth),
        transcendentals=int(b * num_heads * s * s),
        bytes_accessed=int(b * s * (d3 + d) * it + b * s * s * 4))
    return pl.pallas_call(
        functools.partial(_attention_kernel, num_heads=num_heads, depth=depth,
                          scale=1.0 / math.sqrt(depth)),
        out_shape=jax.ShapeDtypeStruct((b, s, d), dt),
        grid=(b,),
        in_specs=[pl.BlockSpec((None, s, d3), lambda i: (i, 0, 0)),
                  pl.BlockSpec((None, 1, s, s), lambda i: (i, 0, 0, 0))],
        out_specs=pl.BlockSpec((None, s, d), lambda i: (i, 0, 0)),
        compiler_params=pltpu.CompilerParams(
            dimension_semantics=("parallel",),
            vmem_limit_bytes=_vmem_limit()),
        cost_estimate=cost,
    )(qkv3, bias)


def _encoder_layer(x2d, lp, bias, b, s, num_heads):
    m, d = x2d.shape
    dff = lp['w1'].shape[1]
    dt = x2d.dtype
    act_it = jnp.dtype(dt).itemsize
    w_it = jnp.dtype(lp['wqkv'].dtype).itemsize
    budget = _vmem_budget()

    # --- A) LN1 + QKV projection ------------------------------------------
    consts_a = (lp['ln1_g'].reshape(1, d), lp['ln1_b'].reshape(1, d),
                lp['wqkv'], lp['bqkv'].reshape(1, 3 * d))
    wbytes_a = (3 * d * d + 5 * d) * w_it
    per_row_a = 5 * d * act_it + 8 * d * 4
    tm_a = _pick_tm(m, wbytes_a, per_row_a, budget, dt)
    cost_a = pl.CostEstimate(
        flops=int(6 * m * d * d), transcendentals=0,
        bytes_accessed=int(m * 5 * d * act_it + wbytes_a))
    xln, qkv = _row_call(functools.partial(_ln_qkv_kernel, eps=_LN_EPS),
                         [x2d], consts_a, [d, 3 * d], [dt, dt],
                         tm=tm_a, cost_estimate=cost_a)

    # --- B) attention (per-batch, in-kernel head split / bias broadcast) ---
    attn = _attention(qkv.reshape(b, s, 3 * d), bias, num_heads)

    # --- C) WO-proj + residual + LN2 + FFN + residual + LN3 ----------------
    consts_c = (lp['wo'], lp['bo'].reshape(1, d),
                lp['ln2_g'].reshape(1, d), lp['ln2_b'].reshape(1, d),
                lp['w1'], lp['b1'].reshape(1, dff),
                lp['w2'], lp['b2'].reshape(1, d),
                lp['ln3_g'].reshape(1, d), lp['ln3_b'].reshape(1, d))
    wbytes_c = (d * d + 2 * d * dff + 6 * d + dff) * w_it
    per_row_c = 3 * d * act_it + (6 * d + 2 * dff) * 4
    tm_c = _pick_tm(m, wbytes_c, per_row_c, budget, dt)
    cost_c = pl.CostEstimate(
        flops=int(2 * m * d * d + 4 * m * d * dff),
        transcendentals=int(m * dff),
        bytes_accessed=int(3 * m * d * act_it + wbytes_c))
    x3 = _row_call(functools.partial(_post_attn_ffn_kernel, eps=_LN_EPS),
                   [attn.reshape(m, d), xln], consts_c, [d], [dt],
                   tm=tm_c, cost_estimate=cost_c)
    return x3


def _head(cls2d, params):
    mrows, d = cls2d.shape
    dt = cls2d.dtype
    act_it = jnp.dtype(dt).itemsize
    w_it = jnp.dtype(params['f1_w'].dtype).itemsize
    consts = (params['f1_w'], params['f1_b'].reshape(1, d),
              params['ln_g'].reshape(1, d), params['ln_b'].reshape(1, d),
              params['f2_w'].reshape(1, d), params['f2_b'].reshape(1, 1))
    tm = _pick_tm(mrows, (d * d + 5 * d + 1) * w_it,
                  (d + 1) * act_it + 4 * d * 4, _vmem_budget(), dt)
    cost = pl.CostEstimate(
        flops=int(2 * mrows * d * d + 2 * mrows * d),
        transcendentals=int(mrows * d),
        bytes_accessed=int(mrows * (d + 1) * act_it + (d * d + 5 * d) * w_it))
    return _row_call(functools.partial(_head_kernel, eps=_LN_EPS),
                     [cls2d], consts, [1], [dt], tm=tm, cost_estimate=cost)


def predict_model_forward(params, ids, mask, adjoin_matrix, num_heads):
    """Pallas forward of Predict_Model (inference: dropout = identity)."""
    emb = params['embedding']
    d_model = emb.shape[1]
    b, s = ids.shape
    # Embedding gather stays in plain JAX (see TODO at top of file).
    x = (emb[ids] * math.sqrt(d_model)).reshape(b * s, d_model)
    # Attention bias kept in f32 (mask*-1e9 + adjoin); never broadcast over H
    # in HBM — the kernel broadcast-adds it per head.
    bias = (mask * (-1000000000.0)
            + adjoin_matrix[:, None, :, :]).astype(jnp.float32)
    for lp in params['layers']:
        x = _encoder_layer(x, lp, bias, b, s, num_heads)
    cls2d = x.reshape(b, s, d_model)[:, 0, :]
    return _head(cls2d, params)                              # [B, 1]


# ---------------------------------------------------------------------------
# params init (mimics PyTorch defaults, stored in "math" [in, out] layout)
# ---------------------------------------------------------------------------

def _init_linear(key, fan_in, fan_out, dtype=jnp.float32):
    kw, kb = jax.random.split(key)
    bound = 1.0 / math.sqrt(fan_in)
    w = jax.random.uniform(kw, (fan_in, fan_out), dtype, -bound, bound)
    b = jax.random.uniform(kb, (fan_out,), dtype, -bound, bound)
    return w, b


def init_params(key, num_layers, d_model, num_heads, d_ff, vocab_size,
                dtype=jnp.float32):
    keys = jax.random.split(key, num_layers + 3)
    params = {'embedding': jax.random.normal(keys[0], (vocab_size, d_model),
                                             dtype)}
    layers = []
    for i in range(num_layers):
        lk = jax.random.split(keys[1 + i], 6)
        wq, bq = _init_linear(lk[0], d_model, d_model, dtype)
        wk, bk = _init_linear(lk[1], d_model, d_model, dtype)
        wv, bv = _init_linear(lk[2], d_model, d_model, dtype)
        wo, bo = _init_linear(lk[3], d_model, d_model, dtype)
        w1, b1 = _init_linear(lk[4], d_model, d_ff, dtype)
        w2, b2 = _init_linear(lk[5], d_ff, d_model, dtype)
        layers.append(dict(
            wqkv=jnp.concatenate([wq, wk, wv], axis=1),
            bqkv=jnp.concatenate([bq, bk, bv], axis=0),
            wo=wo, bo=bo, w1=w1, b1=b1, w2=w2, b2=b2,
            ln1_g=jnp.ones((d_model,), dtype), ln1_b=jnp.zeros((d_model,), dtype),
            ln2_g=jnp.ones((d_model,), dtype), ln2_b=jnp.zeros((d_model,), dtype),
            ln3_g=jnp.ones((d_model,), dtype), ln3_b=jnp.zeros((d_model,), dtype),
        ))
    params['layers'] = layers
    f1_w, f1_b = _init_linear(keys[num_layers + 1], d_model, d_model, dtype)
    f2_w, f2_b = _init_linear(keys[num_layers + 2], d_model, 1, dtype)
    params.update(f1_w=f1_w, f1_b=f1_b, f2_w=f2_w, f2_b=f2_b,
                  ln_g=jnp.ones((d_model,), dtype),
                  ln_b=jnp.zeros((d_model,), dtype))
    return params


# ---------------------------------------------------------------------------
# pure-JAX reference (eval/inference semantics)
# ---------------------------------------------------------------------------

def _ref_layer_norm(x, g, b, eps=_LN_EPS):
    mu = jnp.mean(x, axis=-1, keepdims=True)
    var = jnp.mean((x - mu) ** 2, axis=-1, keepdims=True)
    return (x - mu) * jax.lax.rsqrt(var + eps) * g + b


def _ref_forward(params, ids, mask, adjoin, num_heads):
    d_model = params['embedding'].shape[1]
    b, s = ids.shape
    depth = d_model // num_heads
    x = params['embedding'][ids] * math.sqrt(d_model)
    adjm = adjoin[:, None, :, :]

    def split_heads(t):
        return jnp.transpose(t.reshape(b, s, num_heads, depth), (0, 2, 1, 3))

    for lp in params['layers']:
        xl = _ref_layer_norm(x, lp['ln1_g'], lp['ln1_b'])
        qkv = xl @ lp['wqkv'] + lp['bqkv']
        q, k, v = jnp.split(qkv, 3, axis=-1)
        q, k, v = split_heads(q), split_heads(k), split_heads(v)
        logits = jnp.einsum('bhqd,bhkd->bhqk', q, k) / math.sqrt(depth)
        logits = logits + mask * (-1000000000.0) + adjm
        w = jax.nn.softmax(logits, axis=-1)
        attn = jnp.einsum('bhqk,bhkd->bhqd', w, v)
        attn = jnp.transpose(attn, (0, 2, 1, 3)).reshape(b, s, d_model)
        attn = attn @ lp['wo'] + lp['bo']
        x2 = _ref_layer_norm(xl + attn, lp['ln2_g'], lp['ln2_b'])
        h = _gelu_tanh(x2 @ lp['w1'] + lp['b1'])
        ff = h @ lp['w2'] + lp['b2']
        x = _ref_layer_norm(x2 + ff, lp['ln3_g'], lp['ln3_b'])

    cls = x[:, 0, :]
    h = _gelu_tanh(cls @ params['f1_w'] + params['f1_b'])
    h = _ref_layer_norm(h, params['ln_g'], params['ln_b'])
    return h @ params['f2_w'] + params['f2_b']


# ---------------------------------------------------------------------------
# demo / self-check
# ---------------------------------------------------------------------------

if __name__ == "__main__":
    jax.config.update("jax_default_matmul_precision", "highest")

    # Module-consistent dims (d_model=256, d_ff=512 are the model defaults and
    # give lane-dense last dims); small batch / seq / layers for the demo.
    num_layers, d_model, num_heads, d_ff, vocab_size = 2, 256, 8, 512, 18
    B, S = 2, 8

    key = jax.random.PRNGKey(0)
    kp, kid, km, ka = jax.random.split(key, 4)
    params = init_params(kp, num_layers, d_model, num_heads, d_ff, vocab_size)
    ids = jax.random.randint(kid, (B, S), 0, vocab_size)
    mask = (jax.random.uniform(km, (B, 1, 1, S)) < 0.15).astype(jnp.float32)
    adjoin = jax.random.normal(ka, (B, S, S), jnp.float32) * 0.1

    # --- f32 path: strict check against the pure-JAX reference -------------
    out = predict_model_forward(params, ids, mask, adjoin, num_heads)
    out = jax.block_until_ready(out)
    ref = _ref_forward(params, ids, mask, adjoin, num_heads)
    assert out.shape == (B, 1)
    assert jnp.allclose(out, ref, atol=2e-3, rtol=2e-3), "f32 mismatch vs ref"

    # --- bf16 path: MXU-friendly storage dtype (f32 accumulation / softmax /
    #     LayerNorm / GELU in-kernel); loose check vs f32 math on the same
    #     bf16-rounded weights. ---------------------------------------------
    params_bf16 = jax.tree_util.tree_map(
        lambda a: a.astype(jnp.bfloat16), params)
    out_bf16 = predict_model_forward(params_bf16, ids, mask, adjoin, num_heads)
    out_bf16 = jax.block_until_ready(out_bf16)
    params_rt = jax.tree_util.tree_map(
        lambda a: a.astype(jnp.float32), params_bf16)
    ref_bf16 = _ref_forward(params_rt, ids, mask, adjoin, num_heads)
    assert out_bf16.shape == (B, 1)
    scale_ = 1.0 + float(jnp.max(jnp.abs(ref_bf16)))
    err = float(jnp.max(jnp.abs(out_bf16.astype(jnp.float32) - ref_bf16)))
    assert err <= 6e-2 * scale_, f"bf16 mismatch: {err} vs {6e-2 * scale_}"

    print("KERNEL_OK")
</pallas_src>

<mosaic_0001>
module attributes {stable_mosaic.version = 11 : i64} {
  func.func @_ln_qkv_kernel(%arg0: i32, %arg1: memref<8x256xf32, #tpu.memory_space<vmem>>, %arg2: memref<1x256xf32, #tpu.memory_space<vmem>>, %arg3: memref<1x256xf32, #tpu.memory_space<vmem>>, %arg4: memref<256x768xf32, #tpu.memory_space<vmem>>, %arg5: memref<1x768xf32, #tpu.memory_space<vmem>>, %arg6: memref<8x256xf32, #tpu.memory_space<vmem>>, %arg7: memref<8x768xf32, #tpu.memory_space<vmem>>) attributes {dimension_semantics = [#tpu.dimension_semantics<parallel>], iteration_bounds = array<i64: 2>, scalar_prefetch = 0 : i64, scratch_operands = 0 : i64, tpu.core_type = #tpu.core_type<tc>, window_params = [{transform_indices = @transform_0, window_bounds = array<i64: 8, 256>}, {pipeline_mode = #tpu.pipeline_mode<synchronous>, transform_indices = @transform_1, window_bounds = array<i64: 1, 256>}, {pipeline_mode = #tpu.pipeline_mode<synchronous>, transform_indices = @transform_2, window_bounds = array<i64: 1, 256>}, {pipeline_mode = #tpu.pipeline_mode<synchronous>, transform_indices = @transform_3, window_bounds = array<i64: 256, 768>}, {pipeline_mode = #tpu.pipeline_mode<synchronous>, transform_indices = @transform_4, window_bounds = array<i64: 1, 768>}, {transform_indices = @transform_5, window_bounds = array<i64: 8, 256>}, {transform_indices = @transform_6, window_bounds = array<i64: 8, 768>}]} {
    %c0 = arith.constant 0 : index
    %c0_0 = arith.constant 0 : index
    %0 = vector.load %arg1[%c0, %c0_0] : memref<8x256xf32, #tpu.memory_space<vmem>>, vector<8x256xf32>
    %cst = arith.constant dense<0.000000e+00> : vector<8xf32>
    %1 = vector.multi_reduction <add>, %0, %cst [1] : vector<8x256xf32> to vector<8xf32>
    %2 = vector.shape_cast %1 : vector<8xf32> to vector<8x1xf32>
    %cst_1 = arith.constant 2.560000e+02 : f32
    %3 = vector.broadcast %cst_1 : f32 to vector<8x1xf32>
    %4 = arith.divf %2, %3 : vector<8x1xf32>
    %5 = vector.broadcast %4 : vector<8x1xf32> to vector<8x256xf32>
    %6 = arith.subf %0, %5 : vector<8x256xf32>
    %7 = arith.mulf %6, %6 : vector<8x256xf32>
    %cst_2 = arith.constant dense<0.000000e+00> : vector<8xf32>
    %8 = vector.multi_reduction <add>, %7, %cst_2 [1] : vector<8x256xf32> to vector<8xf32>
    %9 = vector.shape_cast %8 : vector<8xf32> to vector<8x1xf32>
    %cst_3 = arith.constant 2.560000e+02 : f32
    %10 = vector.broadcast %cst_3 : f32 to vector<8x1xf32>
    %11 = arith.divf %9, %10 : vector<8x1xf32>
    %cst_4 = arith.constant 9.99999997E-7 : f32
    %12 = vector.broadcast %cst_4 : f32 to vector<8x1xf32>
    %13 = arith.addf %11, %12 : vector<8x1xf32>
    %14 = math.rsqrt %13 : vector<8x1xf32>
    %15 = vector.broadcast %14 : vector<8x1xf32> to vector<8x256xf32>
    %16 = arith.mulf %6, %15 : vector<8x256xf32>
    %c0_5 = arith.constant 0 : index
    %c0_6 = arith.constant 0 : index
    %17 = vector.load %arg2[%c0_5, %c0_6] : memref<1x256xf32, #tpu.memory_space<vmem>>, vector<1x256xf32>
    %18 = vector.broadcast %17 : vector<1x256xf32> to vector<8x256xf32>
    %19 = arith.mulf %16, %18 : vector<8x256xf32>
    %c0_7 = arith.constant 0 : index
    %c0_8 = arith.constant 0 : index
    %20 = vector.load %arg3[%c0_7, %c0_8] : memref<1x256xf32, #tpu.memory_space<vmem>>, vector<1x256xf32>
    %21 = vector.broadcast %20 : vector<1x256xf32> to vector<8x256xf32>
    %22 = arith.addf %19, %21 : vector<8x256xf32>
    %c0_9 = arith.constant 0 : index
    %c0_10 = arith.constant 0 : index
    %23 = vector.load %arg6[%c0_9, %c0_10] : memref<8x256xf32, #tpu.memory_space<vmem>>, vector<8x256xf32>
    tpu.vector_store %arg6[%c0_9, %c0_10], %22 {strides = array<i32>} : memref<8x256xf32, #tpu.memory_space<vmem>>, vector<8x256xf32>,
    %c0_11 = arith.constant 0 : index
    %c0_12 = arith.constant 0 : index
    %24 = vector.load %arg4[%c0_11, %c0_12] : memref<256x768xf32, #tpu.memory_space<vmem>>, vector<256x768xf32>
    %cst_13 = arith.constant dense<0.000000e+00> : vector<8x768xf32>
    %25 = tpu.matmul %22, %24, %cst_13 {dimension_numbers = #tpu.dot_dimension_numbers<[1], [0], [0], [1], [0, 0, 1, 1], [], []>, precision = #tpu.contract_precision<fp32>} : vector<8x256xf32>, vector<256x768xf32>, vector<8x768xf32> -> vector<8x768xf32>
    %c0_14 = arith.constant 0 : index
    %c0_15 = arith.constant 0 : index
    %26 = vector.load %arg5[%c0_14, %c0_15] : memref<1x768xf32, #tpu.memory_space<vmem>>, vector<1x768xf32>
    %27 = vector.broadcast %26 : vector<1x768xf32> to vector<8x768xf32>
    %28 = arith.addf %25, %27 : vector<8x768xf32>
    %c0_16 = arith.constant 0 : index
    %c0_17 = arith.constant 0 : index
    %29 = vector.load %arg7[%c0_16, %c0_17] : memref<8x768xf32, #tpu.memory_space<vmem>>, vector<8x768xf32>
    tpu.vector_store %arg7[%c0_16, %c0_17], %28 {strides = array<i32>} : memref<8x768xf32, #tpu.memory_space<vmem>>, vector<8x768xf32>,
    return
  }
  func.func @transform_0(%arg0: i32) -> (i32, i32) {
    %c0_i32 = arith.constant 0 : i32
    %c0_i32_0 = arith.constant 0 : i32
    return %arg0, %c0_i32 : i32, i32
  }
  func.func @transform_1(%arg0: i32) -> (i32, i32) {
    %c0_i32 = arith.constant 0 : i32
    %c0_i32_0 = arith.constant 0 : i32
    %c0_i32_1 = arith.constant 0 : i32
    return %c0_i32, %c0_i32_0 : i32, i32
  }
  func.func @transform_2(%arg0: i32) -> (i32, i32) {
    %c0_i32 = arith.constant 0 : i32
    %c0_i32_0 = arith.constant 0 : i32
    %c0_i32_1 = arith.constant 0 : i32
    return %c0_i32, %c0_i32_0 : i32, i32
  }
  func.func @transform_3(%arg0: i32) -> (i32, i32) {
    %c0_i32 = arith.constant 0 : i32
    %c0_i32_0 = arith.constant 0 : i32
    %c0_i32_1 = arith.constant 0 : i32
    return %c0_i32, %c0_i32_0 : i32, i32
  }
  func.func @transform_4(%arg0: i32) -> (i32, i32) {
    %c0_i32 = arith.constant 0 : i32
    %c0_i32_0 = arith.constant 0 : i32
    %c0_i32_1 = arith.constant 0 : i32
    return %c0_i32, %c0_i32_0 : i32, i32
  }
  func.func @transform_5(%arg0: i32) -> (i32, i32) {
    %c0_i32 = arith.constant 0 : i32
    %c0_i32_0 = arith.constant 0 : i32
    return %arg0, %c0_i32 : i32, i32
  }
  func.func @transform_6(%arg0: i32) -> (i32, i32) {
    %c0_i32 = arith.constant 0 : i32
    %c0_i32_0 = arith.constant 0 : i32
    return %arg0, %c0_i32 : i32, i32
  }
}

</mosaic_0001>

<llo_original>
// kernel: tpu_custom_call.1
$region0: #{tpu_custom_call.1}
  #allocation0 [shape = 'u32[]', space=smem, size = 0x4, offset = 0x4, fixed_abs, tag = 'smem constant byte address 0x4 - core index']
  #allocation1 [shape = 'u32[72,128]{1,0:T(1,128)}', space=vmem, size = 0x9000, scoped, tag = 'internal scratch']
  %s0 = inlined_call_operand.hbm [shape: f32[16,256], index: 0, kind: input, shape index: {}]
  %s1 = inlined_call_operand.hbm [shape: f32[1,256], index: 1, kind: input, shape index: {}]
  %s2 = inlined_call_operand.hbm [shape: f32[1,256], index: 2, kind: input, shape index: {}]
  %s3 = inlined_call_operand.hbm [shape: f32[256,768], index: 3, kind: input, shape index: {}]
  %s4 = inlined_call_operand.hbm [shape: f32[1,768], index: 4, kind: input, shape index: {}]
  %s5 = inlined_call_operand.hbm [shape: f32[16,256], index: 5, kind: output, shape index: {0}]
  %s6 = inlined_call_operand.hbm [shape: f32[16,768], index: 6, kind: output, shape index: {1}]
  %7 = xla_tuple %s5, %s6
  %s8 = sld [smem:[#allocation0]]
  $region81: #{tpu_custom_call.1} parent=0
    _
  %s10 = ssub.s32 1, %s8
  %s11 = scalar_select 0, %s10, %s8
  $region1: #{tpu_custom_call.1} parent=0
    #allocation2 [shape = 'u8[16384]{0}', space=vmem, size = 0x4000, scoped, tag = 'input window, operand 0']
    #allocation3 [shape = 's32[2]{0}', space=sflag, size = 0x8, scoped, tag = 'scoped memory for tpu_custom_call.1']
    #allocation4 [shape = 's32[2]{0}', space=sflag, size = 0x8, scoped, tag = 'scoped memory for tpu_custom_call.1']
    #allocation5 [shape = 'u8[1024]{0}', space=vmem, size = 0x400, scoped, tag = 'input window, operand 1, single buffered']
    #allocation6 [shape = 's32[1]{0}', space=sflag, size = 0x4, scoped, tag = 'scoped memory for tpu_custom_call.1']
    #allocation7 [shape = 'u8[1024]{0}', space=vmem, size = 0x400, scoped, tag = 'input window, operand 2, single buffered']
    #allocation8 [shape = 'u8[786432]{0}', space=vmem, size = 0xc0000, scoped, tag = 'input window, operand 3, single buffered']
    #allocation9 [shape = 's32[1]{0}', space=sflag, size = 0x4, scoped, tag = 'scoped memory for tpu_custom_call.1']
    #allocation10 [shape = 'u8[3072]{0}', space=vmem, size = 0xc00, scoped, tag = 'input window, operand 4, single buffered']
    #allocation11 [shape = 'u8[16384]{0}', space=vmem, size = 0x4000, scoped, tag = 'output window, operand 0']
    #allocation12 [shape = 'u8[49152]{0}', space=vmem, size = 0xc000, scoped, tag = 'output window, operand 1']
    #allocation13 [shape = 's32[2]{0}', space=sflag, size = 0x8, scoped, tag = 'scoped memory for tpu_custom_call.1']
    %12 = vsyncpa [#allocation3], 0
    %s13 = scalar_lea.sflag [#allocation3], 1
    %14 = vsyncpa %s13, 0
    %15 = vsyncpa [#allocation6], 0
    %16 = vsyncpa [#allocation9], 0
    %17 = vsyncpa [#allocation4], 0
    %s18 = scalar_lea.sflag [#allocation4], 1
    %19 = vsyncpa %s18, 0
    %20 = vsyncpa [#allocation13], 0
    %s21 = scalar_lea.sflag [#allocation13], 1
    %22 = vsyncpa %s21, 0
    loop: start=0, step=1, limit=4
    $region2: #{tpu_custom_call.1} parent=1 // loop_pre_header
      _
    $region3: #{tpu_custom_call.1} parent=1 // loop_header
      %s24 = sphi 0, %s28
      %p25 = scmp.ge.s32.totalorder %s24, 4
      %s34 = sphi 0, %s36
      %s37 = sphi 0, %s34
      %s38 = sphi 0, %s37
      %s54 = sphi 0, %s38
      %s58 = sphi 0, %s58
      %s60 = sphi 0, %s58
      %s61 = sphi 0, %s60
      %s75 = sphi 0, %s61
      %s79 = sphi 0, %s79
      %s81 = sphi 0, %s79
      %s82 = sphi 0, %s81
      %s96 = sphi 0, %s82
      %s100 = sphi 0, %s100
      %s102 = sphi 0, %s100
      %s103 = sphi 0, %s102
      %s117 = sphi 0, %s103
      %s121 = sphi 0, %s121
      %s123 = sphi 0, %s121
      %s124 = sphi 0, %s123
      %s138 = sphi 0, %s124
      %s144 = sphi 0, %s146
      %s147 = sphi 0, %s144
      %s148 = sphi 0, %s147
      %s164 = sphi 0, %s148
      %s170 = sphi 0, %s172
      %s173 = sphi 0, %s170
      %s174 = sphi 0, %s173
      %s190 = sphi 0, %s174
    $region4: #{tpu_custom_call.1} parent=1 // loop_header_branch
      %27 = sbr.rel (%p25) target = $region8
    $region5: #{tpu_custom_call.1} parent=1 // loop_body
      %s29 = ssub.s32 %s24, 1
      %s30 = ssub.s32 %s24, 2
      %s31 = sadd.s32 %s24, 1
      %s32 = ssub.s32 %s24, %s31
      %p33 = scmp.eq.s32.totalorder %s32, 0
      %s35 = sadd.s32 %s34, 1
      %s36 = scalar_select %p33, %s34, %s35
      %p39 = pneg %p33
      %p40 = scmp.eq.s32.totalorder %s24, 1
      %p41 = por %p39, %p40
      %p42 = scmp.ne.s32.totalorder %s34, %s37
      %p43 = scmp.eq.s32.totalorder %s24, 0
      %p44 = por %p42, %p43
      %p45 = scmp.ne.s32.totalorder %s34, %s37
      %p46 = scmp.eq.s32.totalorder %s29, 1
      %p47 = por %p45, %p46
      %p48 = scmp.ne.s32.totalorder %s37, %s38
      %p49 = scmp.eq.s32.totalorder %s29, 0
      %p50 = por %p48, %p49
      %p51 = scmp.ne.s32.totalorder %s37, %s38
      %p52 = scmp.eq.s32.totalorder %s30, 1
      %p53 = por %p51, %p52
      %p55 = scmp.ne.s32.totalorder %s38, %s54
      %p56 = scmp.eq.s32.totalorder %s30, 0
      %p57 = por %p55, %p56
      %s59 = sadd.s32 %s58, 1
      %p62 = scmp.eq.s32.totalorder %s24, 1
      %p63 = scmp.ne.s32.totalorder %s58, %s60
      %p64 = scmp.eq.s32.totalorder %s24, 0
      %p65 = por %p63, %p64
      %p66 = scmp.ne.s32.totalorder %s58, %s60
      %p67 = scmp.eq.s32.totalorder %s29, 1
      %p68 = por %p66, %p67
      %p69 = scmp.ne.s32.totalorder %s60, %s61
      %p70 = scmp.eq.s32.totalorder %s29, 0
      %p71 = por %p69, %p70
      %p72 = scmp.ne.s32.totalorder %s60, %s61
      %p73 = scmp.eq.s32.totalorder %s30, 1
      %p74 = por %p72, %p73
      %p76 = scmp.ne.s32.totalorder %s61, %s75
      %p77 = scmp.eq.s32.totalorder %s30, 0
      %p78 = por %p76, %p77
      %s80 = sadd.s32 %s79, 1
      %p83 = scmp.eq.s32.totalorder %s24, 1
      %p84 = scmp.ne.s32.totalorder %s79, %s81
      %p85 = scmp.eq.s32.totalorder %s24, 0
      %p86 = por %p84, %p85
      %p87 = scmp.ne.s32.totalorder %s79, %s81
      %p88 = scmp.eq.s32.totalorder %s29, 1
      %p89 = por %p87, %p88
      %p90 = scmp.ne.s32.totalorder %s81, %s82
      %p91 = scmp.eq.s32.totalorder %s29, 0
      %p92 = por %p90, %p91
      %p93 = scmp.ne.s32.totalorder %s81, %s82
      %p94 = scmp.eq.s32.totalorder %s30, 1
      %p95 = por %p93, %p94
      %p97 = scmp.ne.s32.totalorder %s82, %s96
      %p98 = scmp.eq.s32.totalorder %s30, 0
      %p99 = por %p97, %p98
      %s101 = sadd.s32 %s100, 1
      %p104 = scmp.eq.s32.totalorder %s24, 1
      %p105 = scmp.ne.s32.totalorder %s100, %s102
      %p106 = scmp.eq.s32.totalorder %s24, 0
      %p107 = por %p105, %p106
      %p108 = scmp.ne.s32.totalorder %s100, %s102
      %p109 = scmp.eq.s32.totalorder %s29, 1
      %p110 = por %p108, %p109
      %p111 = scmp.ne.s32.totalorder %s102, %s103
      %p112 = scmp.eq.s32.totalorder %s29, 0
      %p113 = por %p111, %p112
      %p114 = scmp.ne.s32.totalorder %s102, %s103
      %p115 = scmp.eq.s32.totalorder %s30, 1
      %p116 = por %p114, %p115
      %p118 = scmp.ne.s32.totalorder %s103, %s117
      %p119 = scmp.eq.s32.totalorder %s30, 0
      %p120 = por %p118, %p119
      %s122 = sadd.s32 %s121, 1
      %p125 = scmp.eq.s32.totalorder %s24, 1
      %p126 = scmp.ne.s32.totalorder %s121, %s123
      %p127 = scmp.eq.s32.totalorder %s24, 0
      %p128 = por %p126, %p127
      %p129 = scmp.ne.s32.totalorder %s121, %s123
      %p130 = scmp.eq.s32.totalorder %s29, 1
      %p131 = por %p129, %p130
      %p132 = scmp.ne.s32.totalorder %s123, %s124
      %p133 = scmp.eq.s32.totalorder %s29, 0
      %p134 = por %p132, %p133
      %p135 = scmp.ne.s32.totalorder %s123, %s124
      %p136 = scmp.eq.s32.totalorder %s30, 1
      %p137 = por %p135, %p136
      %p139 = scmp.ne.s32.totalorder %s124, %s138
      %p140 = scmp.eq.s32.totalorder %s30, 0
      %p141 = por %p139, %p140
      %s142 = ssub.s32 %s24, %s31
      %p143 = scmp.eq.s32.totalorder %s142, 0
      %s145 = sadd.s32 %s144, 1
      %s146 = scalar_select %p143, %s144, %s145
      %p149 = pneg %p143
      %p150 = scmp.eq.s32.totalorder %s24, 1
      %p151 = por %p149, %p150
      %p152 = scmp.ne.s32.totalorder %s144, %s147
      %p153 = scmp.eq.s32.totalorder %s24, 0
      %p154 = por %p152, %p153
      %p155 = scmp.ne.s32.totalorder %s144, %s147
      %p156 = scmp.eq.s32.totalorder %s29, 1
      %p157 = por %p155, %p156
      %p158 = scmp.ne.s32.totalorder %s147, %s148
      %p159 = scmp.eq.s32.totalorder %s29, 0
      %p160 = por %p158, %p159
      %p161 = scmp.ne.s32.totalorder %s147, %s148
      %p162 = scmp.eq.s32.totalorder %s30, 1
      %p163 = por %p161, %p162
      %p165 = scmp.ne.s32.totalorder %s148, %s164
      %p166 = scmp.eq.s32.totalorder %s30, 0
      %p167 = por %p165, %p166
      %s168 = ssub.s32 %s24, %s31
      %p169 = scmp.eq.s32.totalorder %s168, 0
      %s171 = sadd.s32 %s170, 1
      %s172 = scalar_select %p169, %s170, %s171
      %p175 = pneg %p169
      %p176 = scmp.eq.s32.totalorder %s24, 1
      %p177 = por %p175, %p176
      %p178 = scmp.ne.s32.totalorder %s170, %s173
      %p179 = scmp.eq.s32.totalorder %s24, 0
      %p180 = por %p178, %p179
      %p181 = scmp.ne.s32.totalorder %s170, %s173
      %p182 = scmp.eq.s32.totalorder %s29, 1
      %p183 = por %p181, %p182
      %p184 = scmp.ne.s32.totalorder %s173, %s174
      %p185 = scmp.eq.s32.totalorder %s29, 0
      %p186 = por %p184, %p185
      %p187 = scmp.ne.s32.totalorder %s173, %s174
      %p188 = scmp.eq.s32.totalorder %s30, 1
      %p189 = por %p187, %p188
      %p191 = scmp.ne.s32.totalorder %s174, %s190
      %p192 = scmp.eq.s32.totalorder %s30, 0
      %p193 = por %p191, %p192
      %p194 = scmp.le.s32.totalorder 1, %s24
      %p195 = scmp.lt.s32.totalorder %s24, 3
      %p196 = pnand %p194, %p195
      %p197 = pneg %p196
      // Predicated region
      $region9: #{tpu_custom_call.1} parent=5 // pred_check
        _
      $region10: #{tpu_custom_call.1} parent=5 // pred_check_branch
        %199 = sbr.rel (%p196) target = $region12
      $region11: #{tpu_custom_call.1} parent=5 // pred_region
        %s200 = ssub.s32 %s24, 1
        // Predicated region
        $region13: #{tpu_custom_call.1} parent=11 // pred_check
          %p201 = pneg %p71
        $region14: #{tpu_custom_call.1} parent=11 // pred_check_branch
          %203 = sbr.rel (%p201) target = $region16
        $region15: #{tpu_custom_call.1} parent=11 // pred_region
          %205 = vsyncadd [#allocation6], 0
          %s207 = sshll.u32 %s1, 4
          %s208 = int_to_ptr.hbm [resolvable:$true] %s207
          %s209 = sshll.u32 [#allocation5], 4
          %s210 = int_to_ptr.vmem [resolvable:$true] %s209
          %212 = dma.hbm_to_vmem [thread:$0]  %s208, 32, %s210, [#allocation6]
        $region16: #{tpu_custom_call.1} parent=11 // pred_fallthru
          _
        // Predicated region
        $region17: #{tpu_custom_call.1} parent=11 // pred_check
          %p213 = pneg %p92
        $region18: #{tpu_custom_call.1} parent=11 // pred_check_branch
          %215 = sbr.rel (%p213) target = $region20
        $region19: #{tpu_custom_call.1} parent=11 // pred_region
          %217 = vsyncadd [#allocation6], 0
          %s219 = sshll.u32 %s2, 4
          %s220 = int_to_ptr.hbm [resolvable:$true] %s219
          %s221 = sshll.u32 [#allocation7], 4
          %s222 = int_to_ptr.vmem [resolvable:$true] %s221
          %224 = dma.hbm_to_vmem [thread:$0]  %s220, 32, %s222, [#allocation6]
        $region20: #{tpu_custom_call.1} parent=11 // pred_fallthru
          _
        // Predicated region
        $region21: #{tpu_custom_call.1} parent=11 // pred_check
          %p225 = pneg %p113
        $region22: #{tpu_custom_call.1} parent=11 // pred_check_branch
          %227 = sbr.rel (%p225) target = $region24
        $region23: #{tpu_custom_call.1} parent=11 // pred_region
          %229 = vsyncadd [#allocation9], 0
          %s230 = sshll.u32 %s3, 4
          %s231 = int_to_ptr.hbm [resolvable:$true] %s230
          %s232 = sshll.u32 [#allocation8], 4
          %s233 = int_to_ptr.vmem [resolvable:$true] %s232
          %238 = dma.hbm_to_vmem [thread:$0]  %s231, 24576, %s233, [#allocation9], 768, 768, 48
        $region24: #{tpu_custom_call.1} parent=11 // pred_fallthru
          _
        // Predicated region
        $region25: #{tpu_custom_call.1} parent=11 // pred_check
          %p239 = pneg %p134
        $region26: #{tpu_custom_call.1} parent=11 // pred_check_branch
          %241 = sbr.rel (%p239) target = $region28
        $region27: #{tpu_custom_call.1} parent=11 // pred_region
          %243 = vsyncadd [#allocation9], 0
          %s245 = sshll.u32 %s4, 4
          %s246 = int_to_ptr.hbm [resolvable:$true] %s245
          %s247 = sshll.u32 [#allocation10], 4
          %s248 = int_to_ptr.vmem [resolvable:$true] %s247
          %250 = dma.hbm_to_vmem [thread:$0]  %s246, 96, %s248, [#allocation9]
        $region28: #{tpu_custom_call.1} parent=11 // pred_fallthru
          _
      $region12: #{tpu_custom_call.1} parent=5 // pred_fallthru
        _
      %p251 = scmp.lt.s32.totalorder %s24, 2
      // Predicated region
      $region29: #{tpu_custom_call.1} parent=5 // pred_check
        %p252 = pneg %p251
      $region30: #{tpu_custom_call.1} parent=5 // pred_check_branch
        %254 = sbr.rel (%p252) target = $region32
      $region31: #{tpu_custom_call.1} parent=5 // pred_region
        // Predicated region
        $region33: #{tpu_custom_call.1} parent=31 // pred_check
          %p255 = pneg %p44
        $region34: #{tpu_custom_call.1} parent=31 // pred_check_branch
          %257 = sbr.rel (%p255) target = $region36
        $region35: #{tpu_custom_call.1} parent=31 // pred_region
          %s258 = sand.u32 %s34, 1
          %s259 = scalar_lea.sflag [#allocation3], %s258
          %s260 = sand.u32 %s34, 1
          %s261 = smul.addr %s260, 16
          %s262 = scalar_lea.vmem [#allocation2], %s261
          %264 = vsyncadd %s259, 0
          %s265 = smul.addr %s24, 2
          %s266 = smul.addr %s265, 8
          %s267 = scalar_lea.hbm %s0, %s266
          %s269 = sshll.u32 %s267, 4
          %s270 = int_to_ptr.hbm [resolvable:$true] %s269
          %s271 = sshll.u32 %s262, 4
          %s272 = int_to_ptr.vmem [resolvable:$true] %s271
          %274 = dma.hbm_to_vmem [thread:$0]  %s270, 256, %s272, %s259
        $region36: #{tpu_custom_call.1} parent=31 // pred_fallthru
          _
      $region32: #{tpu_custom_call.1} parent=5 // pred_fallthru
        _
      %p275 = scmp.le.s32.totalorder 1, %s24
      %p276 = scmp.lt.s32.totalorder %s24, 3
      %p277 = pnand %p275, %p276
      %p278 = pneg %p277
      // Predicated region
      $region37: #{tpu_custom_call.1} parent=5 // pred_check
        _
      $region38: #{tpu_custom_call.1} parent=5 // pred_check_branch
        %280 = sbr.rel (%p277) target = $region40
      $region39: #{tpu_custom_call.1} parent=5 // pred_region
        %s281 = ssub.s32 %s24, 1
        %s282 = sand.u32 %s37, 1
        %s283 = scalar_lea.sflag [#allocation3], %s282
        %s284 = sand.u32 %s37, 1
        %s285 = smul.addr %s284, 16
        %s286 = scalar_lea.vmem [#allocation2], %s285
        // Predicated region
        $region41: #{tpu_custom_call.1} parent=39 // pred_check
          %p287 = pneg %p50
        $region42: #{tpu_custom_call.1} parent=39 // pred_check_branch
          %289 = sbr.rel (%p287) target = $region44
        $region43: #{tpu_custom_call.1} parent=39 // pred_region
          %291 = dma.done %s283, 256
        $region44: #{tpu_custom_call.1} parent=39 // pred_fallthru
          _
        // Predicated region
        $region45: #{tpu_custom_call.1} parent=39 // pred_check
          %p292 = pneg %p71
        $region46: #{tpu_custom_call.1} parent=39 // pred_check_branch
          %294 = sbr.rel (%p292) target = $region48
        $region47: #{tpu_custom_call.1} parent=39 // pred_region
          %296 = dma.done [#allocation6], 32
        $region48: #{tpu_custom_call.1} parent=39 // pred_fallthru
          _
        // Predicated region
        $region49: #{tpu_custom_call.1} parent=39 // pred_check
          %p297 = pneg %p92
        $region50: #{tpu_custom_call.1} parent=39 // pred_check_branch
          %299 = sbr.rel (%p297) target = $region52
        $region51: #{tpu_custom_call.1} parent=39 // pred_region
          %301 = dma.done [#allocation6], 32
        $region52: #{tpu_custom_call.1} parent=39 // pred_fallthru
          _
        // Predicated region
        $region53: #{tpu_custom_call.1} parent=39 // pred_check
          %p302 = pneg %p113
        $region54: #{tpu_custom_call.1} parent=39 // pred_check_branch
          %304 = sbr.rel (%p302) target = $region56
        $region55: #{tpu_custom_call.1} parent=39 // pred_region
          %306 = dma.done [#allocation9], 24576
        $region56: #{tpu_custom_call.1} parent=39 // pred_fallthru
          _
        // Predicated region
        $region57: #{tpu_custom_call.1} parent=39 // pred_check
          %p307 = pneg %p134
        $region58: #{tpu_custom_call.1} parent=39 // pred_check_branch
          %309 = sbr.rel (%p307) target = $region60
        $region59: #{tpu_custom_call.1} parent=39 // pred_region
          %311 = dma.done [#allocation9], 96
        $region60: #{tpu_custom_call.1} parent=39 // pred_fallthru
          _
        %s312 = sand.u32 %s37, 1
        %s313 = scalar_lea.sflag [#allocation3], %s312
        %s314 = sand.u32 %s37, 1
        %s315 = smul.addr %s314, 16
        %s316 = scalar_lea.vmem [#allocation2], %s315
        %p317 = pneg %p50
        %p318 = pneg %p47
        %p319 = pneg %p71
        %p320 = pneg %p68
        %p321 = pneg %p92
        %p322 = pneg %p89
        %p323 = pneg %p113
        %p324 = pneg %p110
        %p325 = pneg %p134
        %p326 = pneg %p131
        %p327 = pneg %p160
        %p328 = pneg %p157
        %s329 = sand.u32 %s147, 1
        %s330 = scalar_lea.sflag [#allocation4], %s329
        %s331 = sand.u32 %s147, 1
        %s332 = smul.addr %s331, 16
        %s333 = scalar_lea.vmem [#allocation11], %s332
        %p334 = pneg %p186
        %p335 = pneg %p183
        %s336 = sand.u32 %s173, 1
        %s337 = scalar_lea.sflag [#allocation13], %s336
        %s338 = sand.u32 %s173, 1
        %s339 = smul.addr %s338, 48
        %s340 = scalar_lea.vmem [#allocation12], %s339
        %v341 = vld [vmem:[%s286] sm:$0xff]
        %v342 = vld [vmem:[%s286 + $0x8] sm:$0xff]
        %v343 = vadd.f32 %v341, %v342
        %344 = vadd.xlane.f32.xlu0 %v343
        %v345 = vpop.xlane.xlu0 %344
        %v346 = vrcp.pop 256.0
        %v347 = vmul.f32 256.0, %v346
        %v348 = vsub.f32 1.0, %v347
        %v349 = vmul.f32 %v346, %v348
        %v350 = vadd.f32 %v346, %v349
        %vm351 = vweird.f32 %v346
        %v352 = vsel %vm351, %v346, %v350
        %v353 = vmul.f32 %v345, %v352
        %v354 = vsub.f32 %v341, %v353
        %v355 = vsub.f32 %v342, %v353
        %v356 = vmul.f32 %v354, %v354
        %v357 = vmul.f32 %v355, %v355
        %v358 = vadd.f32 %v356, %v357
        %359 = vadd.xlane.f32.xlu0 %v358
        %v360 = vpop.xlane.xlu0 %359
        %v361 = vmul.f32 %v360, %v352
        %v362 = vadd.f32 %v361, 1e-06
        %v363 = vrsqrt.pop %v362
        %v364 = vmul.f32 %v363, %v362
        %v365 = vmul.f32 %v364, %v363
        %v366 = vmul.f32 0.5, %v365
        %v367 = vsub.f32 1.5, %v366
        %v368 = vmul.f32 %v363, %v367
        %vm369 = vweird.f32 %v362
        %vm370 = vweird.f32 %v363
        %vm371 = vmor %vm369, %vm370
        %v372 = vsel %vm371, %v363, %v368
        %v373 = vmul.f32 %v354, %v372
        %v374 = vmul.f32 %v355, %v372
        %v375 = vld [vmem:[#allocation5] sm:$0x3]
        %v377 = vperm.slane %v375, 0
        %v378 = vperm.slane %v375, 1
        %v381 = vmul.f32 %v373, %v377
        %v382 = vmul.f32 %v374, %v378
        %v383 = vld [vmem:[#allocation7] sm:$0x3]
        %v385 = vperm.slane %v383, 0
        %v386 = vperm.slane %v383, 1
        %v389 = vadd.f32 %v381, %v385
        %v390 = vadd.f32 %v382, %v386
        %391 = vst [vmem:[%s333] sm:$0xff] %v389
        %392 = vst [vmem:[%s333 + $0x8] sm:$0xff] %v390
        %v393 = vld [vmem:[#allocation8] sm:$0xff]
        %v394 = vld [vmem:[#allocation8 + $0x8] sm:$0xff]
        %v395 = vld [vmem:[#allocation8 + $0x10] sm:$0xff]
        %v396 = vld [vmem:[#allocation8 + $0x18] sm:$0xff]
        %v397 = vld [vmem:[#allocation8 + $0x20] sm:$0xff]
        %v398 = vld [vmem:[#allocation8 + $0x28] sm:$0xff]
        %v399 = vld [vmem:[#allocation8 + $0x30] sm:$0xff]
        %v400 = vld [vmem:[#allocation8 + $0x38] sm:$0xff]
        %v401 = vld [vmem:[#allocation8 + $0x40] sm:$0xff]
        %v402 = vld [vmem:[#allocation8 + $0x48] sm:$0xff]
        %v403 = vld [vmem:[#allocation8 + $0x50] sm:$0xff]
        %v404 = vld [vmem:[#allocation8 + $0x58] sm:$0xff]
        %v405 = vld [vmem:[#allocation8 + $0x60] sm:$0xff]
        %v406 = vld [vmem:[#allocation8 + $0x68] sm:$0xff]
        %v407 = vld [vmem:[#allocation8 + $0x70] sm:$0xff]
        %v408 = vld [vmem:[#allocation8 + $0x78] sm:$0xff]
        %v409 = vld [vmem:[#allocation8 + $0x80] sm:$0xff]
        %v410 = vld [vmem:[#allocation8 + $0x88] sm:$0xff]
        %v411 = vld [vmem:[#allocation8 + $0x90] sm:$0xff]
        %v412 = vld [vmem:[#allocation8 + $0x98] sm:$0xff]
        %v413 = vld [vmem:[#allocation8 + $0xa0] sm:$0xff]
        %v414 = vld [vmem:[#allocation8 + $0xa8] sm:$0xff]
        %v415 = vld [vmem:[#allocation8 + $0xb0] sm:$0xff]
        %v416 = vld [vmem:[#allocation8 + $0xb8] sm:$0xff]
        %v417 = vld [vmem:[#allocation8 + $0xc0] sm:$0xff]
        %v418 = vld [vmem:[#allocation8 + $0xc8] sm:$0xff]
        %v419 = vld [vmem:[#allocation8 + $0xd0] sm:$0xff]
        %v420 = vld [vmem:[#allocation8 + $0xd8] sm:$0xff]
        %v421 = vld [vmem:[#allocation8 + $0xe0] sm:$0xff]
        %v422 = vld [vmem:[#allocation8 + $0xe8] sm:$0xff]
        %v423 = vld [vmem:[#allocation8 + $0xf0] sm:$0xff]
        %v424 = vld [vmem:[#allocation8 + $0xf8] sm:$0xff]
        %v425 = vld [vmem:[#allocation8 + $0x100] sm:$0xff]
        %v426 = vld [vmem:[#allocation8 + $0x108] sm:$0xff]
        %v427 = vld [vmem:[#allocation8 + $0x110] sm:$0xff]
        %v428 = vld [vmem:[#allocation8 + $0x118] sm:$0xff]
        %v429 = vld [vmem:[#allocation8 + $0x120] sm:$0xff]
        %v430 = vld [vmem:[#allocation8 + $0x128] sm:$0xff]
        %v431 = vld [vmem:[#allocation8 + $0x130] sm:$0xff]
        %v432 = vld [vmem:[#allocation8 + $0x138] sm:$0xff]
        %v433 = vld [vmem:[#allocation8 + $0x140] sm:$0xff]
        %v434 = vld [vmem:[#allocation8 + $0x148] sm:$0xff]
        %v435 = vld [vmem:[#allocation8 + $0x150] sm:$0xff]
        %v436 = vld [vmem:[#allocation8 + $0x158] sm:$0xff]
        %v437 = vld [vmem:[#allocation8 + $0x160] sm:$0xff]
        %v438 = vld [vmem:[#allocation8 + $0x168] sm:$0xff]
        %v439 = vld [vmem:[#allocation8 + $0x170] sm:$0xff]
        %v440 = vld [vmem:[#allocation8 + $0x178] sm:$0xff]
        %v441 = vld [vmem:[#allocation8 + $0x180] sm:$0xff]
        %v442 = vld [vmem:[#allocation8 + $0x188] sm:$0xff]
        %v443 = vld [vmem:[#allocation8 + $0x190] sm:$0xff]
        %v444 = vld [vmem:[#allocation8 + $0x198] sm:$0xff]
        %v445 = vld [vmem:[#allocation8 + $0x1a0] sm:$0xff]
        %v446 = vld [vmem:[#allocation8 + $0x1a8] sm:$0xff]
        %v447 = vld [vmem:[#allocation8 + $0x1b0] sm:$0xff]
        %v448 = vld [vmem:[#allocation8 + $0x1b8] sm:$0xff]
        %v449 = vld [vmem:[#allocation8 + $0x1c0] sm:$0xff]
        %v450 = vld [vmem:[#allocation8 + $0x1c8] sm:$0xff]
        %v451 = vld [vmem:[#allocation8 + $0x1d0] sm:$0xff]
        %v452 = vld [vmem:[#allocation8 + $0x1d8] sm:$0xff]
        %v453 = vld [vmem:[#allocation8 + $0x1e0] sm:$0xff]
        %v454 = vld [vmem:[#allocation8 + $0x1e8] sm:$0xff]
        %v455 = vld [vmem:[#allocation8 + $0x1f0] sm:$0xff]
        %v456 = vld [vmem:[#allocation8 + $0x1f8] sm:$0xff]
        %v457 = vld [vmem:[#allocation8 + $0x200] sm:$0xff]
        %v458 = vld [vmem:[#allocation8 + $0x208] sm:$0xff]
        %v459 = vld [vmem:[#allocation8 + $0x210] sm:$0xff]
        %v460 = vld [vmem:[#allocation8 + $0x218] sm:$0xff]
        %v461 = vld [vmem:[#allocation8 + $0x220] sm:$0xff]
        %v462 = vld [vmem:[#allocation8 + $0x228] sm:$0xff]
        %v463 = vld [vmem:[#allocation8 + $0x230] sm:$0xff]
        %v464 = vld [vmem:[#allocation8 + $0x238] sm:$0xff]
        %v465 = vld [vmem:[#allocation8 + $0x240] sm:$0xff]
        %v466 = vld [vmem:[#allocation8 + $0x248] sm:$0xff]
        %v467 = vld [vmem:[#allocation8 + $0x250] sm:$0xff]
        %v468 = vld [vmem:[#allocation8 + $0x258] sm:$0xff]
        %v469 = vld [vmem:[#allocation8 + $0x260] sm:$0xff]
        %v470 = vld [vmem:[#allocation8 + $0x268] sm:$0xff]
        %v471 = vld [vmem:[#allocation8 + $0x270] sm:$0xff]
        %v472 = vld [vmem:[#allocation8 + $0x278] sm:$0xff]
        %v473 = vld [vmem:[#allocation8 + $0x280] sm:$0xff]
        %v474 = vld [vmem:[#allocation8 + $0x288] sm:$0xff]
        %v475 = vld [vmem:[#allocation8 + $0x290] sm:$0xff]
        %v476 = vld [vmem:[#allocation8 + $0x298] sm:$0xff]
        %v477 = vld [vmem:[#allocation8 + $0x2a0] sm:$0xff]
        %v478 = vld [vmem:[#allocation8 + $0x2a8] sm:$0xff]
        %v479 = vld [vmem:[#allocation8 + $0x2b0] sm:$0xff]
        %v480 = vld [vmem:[#allocation8 + $0x2b8] sm:$0xff]
        %v481 = vld [vmem:[#allocation8 + $0x2c0] sm:$0xff]
        %v482 = vld [vmem:[#allocation8 + $0x2c8] sm:$0xff]
        %v483 = vld [vmem:[#allocation8 + $0x2d0] sm:$0xff]
        %v484 = vld [vmem:[#allocation8 + $0x2d8] sm:$0xff]
        %v485 = vld [vmem:[#allocation8 + $0x2e0] sm:$0xff]
        %v486 = vld [vmem:[#allocation8 + $0x2e8] sm:$0xff]
        %v487 = vld [vmem:[#allocation8 + $0x2f0] sm:$0xff]
        %v488 = vld [vmem:[#allocation8 + $0x2f8] sm:$0xff]
        %v489 = vld [vmem:[#allocation8 + $0x300] sm:$0xff]
        %v490 = vld [vmem:[#allocation8 + $0x308] sm:$0xff]
        %v491 = vld [vmem:[#allocation8 + $0x310] sm:$0xff]
        %v492 = vld [vmem:[#allocation8 + $0x318] sm:$0xff]
        %v493 = vld [vmem:[#allocation8 + $0x320] sm:$0xff]
        %v494 = vld [vmem:[#allocation8 + $0x328] sm:$0xff]
        %v495 = vld [vmem:[#allocation8 + $0x330] sm:$0xff]
        %v496 = vld [vmem:[#allocation8 + $0x338] sm:$0xff]
        %v497 = vld [vmem:[#allocation8 + $0x340] sm:$0xff]
        %v498 = vld [vmem:[#allocation8 + $0x348] sm:$0xff]
        %v499 = vld [vmem:[#allocation8 + $0x350] sm:$0xff]
        %v500 = vld [vmem:[#allocation8 + $0x358] sm:$0xff]
        %v501 = vld [vmem:[#allocation8 + $0x360] sm:$0xff]
        %v502 = vld [vmem:[#allocation8 + $0x368] sm:$0xff]
        %v503 = vld [vmem:[#allocation8 + $0x370] sm:$0xff]
        %v504 = vld [vmem:[#allocation8 + $0x378] sm:$0xff]
        %v505 = vld [vmem:[#allocation8 + $0x380] sm:$0xff]
        %v506 = vld [vmem:[#allocation8 + $0x388] sm:$0xff]
        %v507 = vld [vmem:[#allocation8 + $0x390] sm:$0xff]
        %v508 = vld [vmem:[#allocation8 + $0x398] sm:$0xff]
        %v509 = vld [vmem:[#allocation8 + $0x3a0] sm:$0xff]
        %v510 = vld [vmem:[#allocation8 + $0x3a8] sm:$0xff]
        %v511 = vld [vmem:[#allocation8 + $0x3b0] sm:$0xff]
        %v512 = vld [vmem:[#allocation8 + $0x3b8] sm:$0xff]
        %v513 = vld [vmem:[#allocation8 + $0x3c0] sm:$0xff]
        %v514 = vld [vmem:[#allocation8 + $0x3c8] sm:$0xff]
        %v515 = vld [vmem:[#allocation8 + $0x3d0] sm:$0xff]
        %v516 = vld [vmem:[#allocation8 + $0x3d8] sm:$0xff]
        %v517 = vld [vmem:[#allocation8 + $0x3e0] sm:$0xff]
        %v518 = vld [vmem:[#allocation8 + $0x3e8] sm:$0xff]
        %v519 = vld [vmem:[#allocation8 + $0x3f0] sm:$0xff]
        %v520 = vld [vmem:[#allocation8 + $0x3f8] sm:$0xff]
        %v521 = vld [vmem:[#allocation8 + $0x400] sm:$0xff]
        %v522 = vld [vmem:[#allocation8 + $0x408] sm:$0xff]
        %v523 = vld [vmem:[#allocation8 + $0x410] sm:$0xff]
        %v524 = vld [vmem:[#allocation8 + $0x418] sm:$0xff]
        %v525 = vld [vmem:[#allocation8 + $0x420] sm:$0xff]
        %v526 = vld [vmem:[#allocation8 + $0x428] sm:$0xff]
        %v527 = vld [vmem:[#allocation8 + $0x430] sm:$0xff]
        %v528 = vld [vmem:[#allocation8 + $0x438] sm:$0xff]
        %v529 = vld [vmem:[#allocation8 + $0x440] sm:$0xff]
        %v530 = vld [vmem:[#allocation8 + $0x448] sm:$0xff]
        %v531 = vld [vmem:[#allocation8 + $0x450] sm:$0xff]
        %v532 = vld [vmem:[#allocation8 + $0x458] sm:$0xff]
        %v533 = vld [vmem:[#allocation8 + $0x460] sm:$0xff]
        %v534 = vld [vmem:[#allocation8 + $0x468] sm:$0xff]
        %v535 = vld [vmem:[#allocation8 + $0x470] sm:$0xff]
        %v536 = vld [vmem:[#allocation8 + $0x478] sm:$0xff]
        %v537 = vld [vmem:[#allocation8 + $0x480] sm:$0xff]
        %v538 = vld [vmem:[#allocation8 + $0x488] sm:$0xff]
        %v539 = vld [vmem:[#allocation8 + $0x490] sm:$0xff]
        %v540 = vld [vmem:[#allocation8 + $0x498] sm:$0xff]
        %v541 = vld [vmem:[#allocation8 + $0x4a0] sm:$0xff]
        %v542 = vld [vmem:[#allocation8 + $0x4a8] sm:$0xff]
        %v543 = vld [vmem:[#allocation8 + $0x4b0] sm:$0xff]
        %v544 = vld [vmem:[#allocation8 + $0x4b8] sm:$0xff]
        %v545 = vld [vmem:[#allocation8 + $0x4c0] sm:$0xff]
        %v546 = vld [vmem:[#allocation8 + $0x4c8] sm:$0xff]
        %v547 = vld [vmem:[#allocation8 + $0x4d0] sm:$0xff]
        %v548 = vld [vmem:[#allocation8 + $0x4d8] sm:$0xff]
        %v549 = vld [vmem:[#allocation8 + $0x4e0] sm:$0xff]
        %v550 = vld [vmem:[#allocation8 + $0x4e8] sm:$0xff]
        %v551 = vld [vmem:[#allocation8 + $0x4f0] sm:$0xff]
        %v552 = vld [vmem:[#allocation8 + $0x4f8] sm:$0xff]
        %v553 = vld [vmem:[#allocation8 + $0x500] sm:$0xff]
        %v554 = vld [vmem:[#allocation8 + $0x508] sm:$0xff]
        %v555 = vld [vmem:[#allocation8 + $0x510] sm:$0xff]
        %v556 = vld [vmem:[#allocation8 + $0x518] sm:$0xff]
        %v557 = vld [vmem:[#allocation8 + $0x520] sm:$0xff]
        %v558 = vld [vmem:[#allocation8 + $0x528] sm:$0xff]
        %v559 = vld [vmem:[#allocation8 + $0x530] sm:$0xff]
        %v560 = vld [vmem:[#allocation8 + $0x538] sm:$0xff]
        %v561 = vld [vmem:[#allocation8 + $0x540] sm:$0xff]
        %v562 = vld [vmem:[#allocation8 + $0x548] sm:$0xff]
        %v563 = vld [vmem:[#allocation8 + $0x550] sm:$0xff]
        %v564 = vld [vmem:[#allocation8 + $0x558] sm:$0xff]
        %v565 = vld [vmem:[#allocation8 + $0x560] sm:$0xff]
        %v566 = vld [vmem:[#allocation8 + $0x568] sm:$0xff]
        %v567 = vld [vmem:[#allocation8 + $0x570] sm:$0xff]
        %v568 = vld [vmem:[#allocation8 + $0x578] sm:$0xff]
        %v569 = vld [vmem:[#allocation8 + $0x580] sm:$0xff]
        %v570 = vld [vmem:[#allocation8 + $0x588] sm:$0xff]
        %v571 = vld [vmem:[#allocation8 + $0x590] sm:$0xff]
        %v572 = vld [vmem:[#allocation8 + $0x598] sm:$0xff]
        %v573 = vld [vmem:[#allocation8 + $0x5a0] sm:$0xff]
        %v574 = vld [vmem:[#allocation8 + $0x5a8] sm:$0xff]
        %v575 = vld [vmem:[#allocation8 + $0x5b0] sm:$0xff]
        %v576 = vld [vmem:[#allocation8 + $0x5b8] sm:$0xff]
        %v577 = vld [vmem:[#allocation8 + $0x5c0] sm:$0xff]
        %v578 = vld [vmem:[#allocation8 + $0x5c8] sm:$0xff]
        %v579 = vld [vmem:[#allocation8 + $0x5d0] sm:$0xff]
        %v580 = vld [vmem:[#allocation8 + $0x5d8] sm:$0xff]
        %v581 = vld [vmem:[#allocation8 + $0x5e0] sm:$0xff]
        %v582 = vld [vmem:[#allocation8 + $0x5e8] sm:$0xff]
        %v583 = vld [vmem:[#allocation8 + $0x5f0] sm:$0xff]
        %v584 = vld [vmem:[#allocation8 + $0x5f8] sm:$0xff]
        %v585 = vld [vmem:[#allocation10] sm:$0x3f]
        %v587 = vperm.slane %v585, 0
        %v588 = vperm.slane %v585, 1
        %v589 = vperm.slane %v585, 2
        %v590 = vperm.slane %v585, 3
        %v591 = vperm.slane %v585, 4
        %v592 = vperm.slane %v585, 5
        %v599 = vand.u32 %v483, 4294901760
        %600 = vmatpush.msra.mxu0 %v599
        %v601 = vand.u32 %v477, 4294901760
        %602 = vmatpush.msra.mxu0 %v601
        %v603 = vand.u32 %v471, 4294901760
        %604 = vmatpush.msra.mxu0 %v603
        %v605 = vand.u32 %v465, 4294901760
        %606 = vmatpush.msra.mxu0 %v605
        %v607 = vand.u32 %v459, 4294901760
        %608 = vmatpush.msra.mxu0 %v607
        %v609 = vand.u32 %v453, 4294901760
        %610 = vmatpush.msra.mxu0 %v609
        %v611 = vand.u32 %v447, 4294901760
        %612 = vmatpush.msra.mxu0 %v611
        %v613 = vand.u32 %v441, 4294901760
        %614 = vmatpush.msra.mxu0 %v613
        %v615 = vand.u32 %v435, 4294901760
        %616 = vmatpush.msra.mxu0 %v615
        %v617 = vand.u32 %v429, 4294901760
        %618 = vmatpush.msra.mxu0 %v617
        %v619 = vand.u32 %v423, 4294901760
        %620 = vmatpush.msra.mxu0 %v619
        %v621 = vand.u32 %v417, 4294901760
        %622 = vmatpush.msra.mxu0 %v621
        %v623 = vand.u32 %v411, 4294901760
        %624 = vmatpush.msra.mxu0 %v623
        %v625 = vand.u32 %v405, 4294901760
        %626 = vmatpush.msra.mxu0 %v625
        %v627 = vand.u32 %v399, 4294901760
        %628 = vmatpush.msra.mxu0 %v627
        %v629 = vand.u32 %v393, 4294901760
        %630 = vmatpush.msra.mxu0 %v629
        %v631 = vand.u32 %v389, 4294901760
        %v632 = vsub.f32 %v389, %v631
        %v633 = vand.u32 %v632, 4294901760
        %v634 = vsub.f32 %v632, %v633
        %v635 = vand.u32 %v634, 4294901760
        %636 = vmatmul.f32.gmra.mxu0 %v635
        %v637 = vpop.f32.mrf.mxu0
        %v638 = vadd.f32 %v587, %v637
        %639 = vdwg.mxu0
        %v640 = vand.u32 %v483, 4294901760
        %v641 = vsub.f32 %v483, %v640
        %v642 = vand.u32 %v641, 4294901760
        %v643 = vsub.f32 %v641, %v642
        %v644 = vand.u32 %v643, 4294901760
        %645 = vmatpush.msra.mxu0 %v644
        %v646 = vand.u32 %v477, 4294901760
        %v647 = vsub.f32 %v477, %v646
        %v648 = vand.u32 %v647, 4294901760
        %v649 = vsub.f32 %v647, %v648
        %v650 = vand.u32 %v649, 4294901760
        %651 = vmatpush.msra.mxu0 %v650
        %v652 = vand.u32 %v471, 4294901760
        %v653 = vsub.f32 %v471, %v652
        %v654 = vand.u32 %v653, 4294901760
        %v655 = vsub.f32 %v653, %v654
        %v656 = vand.u32 %v655, 4294901760
        %657 = vmatpush.msra.mxu0 %v656
        %v658 = vand.u32 %v465, 4294901760
        %v659 = vsub.f32 %v465, %v658
        %v660 = vand.u32 %v659, 4294901760
        %v661 = vsub.f32 %v659, %v660
        %v662 = vand.u32 %v661, 4294901760
        %663 = vmatpush.msra.mxu0 %v662
        %v664 = vand.u32 %v459, 4294901760
        %v665 = vsub.f32 %v459, %v664
        %v666 = vand.u32 %v665, 4294901760
        %v667 = vsub.f32 %v665, %v666
        %v668 = vand.u32 %v667, 4294901760
        %669 = vmatpush.msra.mxu0 %v668
        %v670 = vand.u32 %v453, 4294901760
        %v671 = vsub.f32 %v453, %v670
        %v672 = vand.u32 %v671, 4294901760
        %v673 = vsub.f32 %v671, %v672
        %v674 = vand.u32 %v673, 4294901760
        %675 = vmatpush.msra.mxu0 %v674
        %v676 = vand.u32 %v447, 4294901760
        %v677 = vsub.f32 %v447, %v676
        %v678 = vand.u32 %v677, 4294901760
        %v679 = vsub.f32 %v677, %v678
        %v680 = vand.u32 %v679, 4294901760
        %681 = vmatpush.msra.mxu0 %v680
        %v682 = vand.u32 %v441, 4294901760
        %v683 = vsub.f32 %v441, %v682
        %v684 = vand.u32 %v683, 4294901760
        %v685 = vsub.f32 %v683, %v684
        %v686 = vand.u32 %v685, 4294901760
        %687 = vmatpush.msra.mxu0 %v686
        %v688 = vand.u32 %v435, 4294901760
        %v689 = vsub.f32 %v435, %v688
        %v690 = vand.u32 %v689, 4294901760
        %v691 = vsub.f32 %v689, %v690
        %v692 = vand.u32 %v691, 4294901760
        %693 = vmatpush.msra.mxu0 %v692
        %v694 = vand.u32 %v429, 4294901760
        %v695 = vsub.f32 %v429, %v694
        %v696 = vand.u32 %v695, 4294901760
        %v697 = vsub.f32 %v695, %v696
        %v698 = vand.u32 %v697, 4294901760
        %699 = vmatpush.msra.mxu0 %v698
        %v700 = vand.u32 %v423, 4294901760
        %v701 = vsub.f32 %v423, %v700
        %v702 = vand.u32 %v701, 4294901760
        %v703 = vsub.f32 %v701, %v702
        %v704 = vand.u32 %v703, 4294901760
        %705 = vmatpush.msra.mxu0 %v704
        %v706 = vand.u32 %v417, 4294901760
        %v707 = vsub.f32 %v417, %v706
        %v708 = vand.u32 %v707, 4294901760
        %v709 = vsub.f32 %v707, %v708
        %v710 = vand.u32 %v709, 4294901760
        %711 = vmatpush.msra.mxu0 %v710
        %v712 = vand.u32 %v411, 4294901760
        %v713 = vsub.f32 %v411, %v712
        %v714 = vand.u32 %v713, 4294901760
        %v715 = vsub.f32 %v713, %v714
        %v716 = vand.u32 %v715, 4294901760
        %717 = vmatpush.msra.mxu0 %v716
        %v718 = vand.u32 %v405, 4294901760
        %v719 = vsub.f32 %v405, %v718
        %v720 = vand.u32 %v719, 4294901760
        %v721 = vsub.f32 %v719, %v720
        %v722 = vand.u32 %v721, 4294901760
        %723 = vmatpush.msra.mxu0 %v722
        %v724 = vand.u32 %v399, 4294901760
        %v725 = vsub.f32 %v399, %v724
        %v726 = vand.u32 %v725, 4294901760
        %v727 = vsub.f32 %v725, %v726
        %v728 = vand.u32 %v727, 4294901760
        %729 = vmatpush.msra.mxu0 %v728
        %v730 = vand.u32 %v393, 4294901760
        %v731 = vsub.f32 %v393, %v730
        %v732 = vand.u32 %v731, 4294901760
        %v733 = vsub.f32 %v731, %v732
        %v734 = vand.u32 %v733, 4294901760
        %735 = vmatpush.msra.mxu0 %v734
        %v736 = vand.u32 %v389, 4294901760
        %737 = vmatmul.f32.gmra.mxu0 %v736
        %v738 = vpop.f32.mrf.mxu0
        %v739 = vadd.f32 %v638, %v738
        %740 = vdwg.mxu0
        %v741 = vand.u32 %v483, 4294901760
        %v742 = vsub.f32 %v483, %v741
        %743 = vmatpush.msra.mxu0 %v742
        %v744 = vand.u32 %v477, 4294901760
        %v745 = vsub.f32 %v477, %v744
        %746 = vmatpush.msra.mxu0 %v745
        %v747 = vand.u32 %v471, 4294901760
        %v748 = vsub.f32 %v471, %v747
        %749 = vmatpush.msra.mxu0 %v748
        %v750 = vand.u32 %v465, 4294901760
        %v751 = vsub.f32 %v465, %v750
        %752 = vmatpush.msra.mxu0 %v751
        %v753 = vand.u32 %v459, 4294901760
        %v754 = vsub.f32 %v459, %v753
        %755 = vmatpush.msra.mxu0 %v754
        %v756 = vand.u32 %v453, 4294901760
        %v757 = vsub.f32 %v453, %v756
        %758 = vmatpush.msra.mxu0 %v757
        %v759 = vand.u32 %v447, 4294901760
        %v760 = vsub.f32 %v447, %v759
        %761 = vmatpush.msra.mxu0 %v760
        %v762 = vand.u32 %v441, 4294901760
        %v763 = vsub.f32 %v441, %v762
        %764 = vmatpush.msra.mxu0 %v763
        %v765 = vand.u32 %v435, 4294901760
        %v766 = vsub.f32 %v435, %v765
        %767 = vmatpush.msra.mxu0 %v766
        %v768 = vand.u32 %v429, 4294901760
        %v769 = vsub.f32 %v429, %v768
        %770 = vmatpush.msra.mxu0 %v769
        %v771 = vand.u32 %v423, 4294901760
        %v772 = vsub.f32 %v423, %v771
        %773 = vmatpush.msra.mxu0 %v772
        %v774 = vand.u32 %v417, 4294901760
        %v775 = vsub.f32 %v417, %v774
        %776 = vmatpush.msra.mxu0 %v775
        %v777 = vand.u32 %v411, 4294901760
        %v778 = vsub.f32 %v411, %v777
        %779 = vmatpush.msra.mxu0 %v778
        %v780 = vand.u32 %v405, 4294901760
        %v781 = vsub.f32 %v405, %v780
        %782 = vmatpush.msra.mxu0 %v781
        %v783 = vand.u32 %v399, 4294901760
        %v784 = vsub.f32 %v399, %v783
        %785 = vmatpush.msra.mxu0 %v784
        %v786 = vand.u32 %v393, 4294901760
        %v787 = vsub.f32 %v393, %v786
        %788 = vmatpush.msra.mxu0 %v787
        %v789 = vand.u32 %v389, 4294901760
        %v790 = vsub.f32 %v389, %v789
        %791 = vmatmul.f32.gmra.mxu0 %v790
        %v792 = vpop.f32.mrf.mxu0
        %v793 = vadd.f32 %v739, %v792
        %794 = vdwg.mxu0
        %v795 = vand.u32 %v483, 4294901760
        %796 = vmatpush.msra.mxu0 %v795
        %v797 = vand.u32 %v477, 4294901760
        %798 = vmatpush.msra.mxu0 %v797
        %v799 = vand.u32 %v471, 4294901760
        %800 = vmatpush.msra.mxu0 %v799
        %v801 = vand.u32 %v465, 4294901760
        %802 = vmatpush.msra.mxu0 %v801
        %v803 = vand.u32 %v459, 4294901760
        %804 = vmatpush.msra.mxu0 %v803
        %v805 = vand.u32 %v453, 4294901760
        %806 = vmatpush.msra.mxu0 %v805
        %v807 = vand.u32 %v447, 4294901760
        %808 = vmatpush.msra.mxu0 %v807
        %v809 = vand.u32 %v441, 4294901760
        %810 = vmatpush.msra.mxu0 %v809
        %v811 = vand.u32 %v435, 4294901760
        %812 = vmatpush.msra.mxu0 %v811
        %v813 = vand.u32 %v429, 4294901760
        %814 = vmatpush.msra.mxu0 %v813
        %v815 = vand.u32 %v423, 4294901760
        %816 = vmatpush.msra.mxu0 %v815
        %v817 = vand.u32 %v417, 4294901760
        %818 = vmatpush.msra.mxu0 %v817
        %v819 = vand.u32 %v411, 4294901760
        %820 = vmatpush.msra.mxu0 %v819
        %v821 = vand.u32 %v405, 4294901760
        %822 = vmatpush.msra.mxu0 %v821
        %v823 = vand.u32 %v399, 4294901760
        %824 = vmatpush.msra.mxu0 %v823
        %v825 = vand.u32 %v393, 4294901760
        %826 = vmatpush.msra.mxu0 %v825
        %v827 = vand.u32 %v389, 4294901760
        %v828 = vsub.f32 %v389, %v827
        %v829 = vand.u32 %v828, 4294901760
        %830 = vmatmul.f32.gmra.mxu0 %v829
        %v831 = vpop.f32.mrf.mxu0
        %v832 = vadd.f32 %v793, %v831
        %833 = vdwg.mxu0
        %v834 = vand.u32 %v483, 4294901760
        %v835 = vsub.f32 %v483, %v834
        %v836 = vand.u32 %v835, 4294901760
        %837 = vmatpush.msra.mxu0 %v836
        %v838 = vand.u32 %v477, 4294901760
        %v839 = vsub.f32 %v477, %v838
        %v840 = vand.u32 %v839, 4294901760
        %841 = vmatpush.msra.mxu0 %v840
        %v842 = vand.u32 %v471, 4294901760
        %v843 = vsub.f32 %v471, %v842
        %v844 = vand.u32 %v843, 4294901760
        %845 = vmatpush.msra.mxu0 %v844
        %v846 = vand.u32 %v465, 4294901760
        %v847 = vsub.f32 %v465, %v846
        %v848 = vand.u32 %v847, 4294901760
        %849 = vmatpush.msra.mxu0 %v848
        %v850 = vand.u32 %v459, 4294901760
        %v851 = vsub.f32 %v459, %v850
        %v852 = vand.u32 %v851, 4294901760
        %853 = vmatpush.msra.mxu0 %v852
        %v854 = vand.u32 %v453, 4294901760
        %v855 = vsub.f32 %v453, %v854
        %v856 = vand.u32 %v855, 4294901760
        %857 = vmatpush.msra.mxu0 %v856
        %v858 = vand.u32 %v447, 4294901760
        %v859 = vsub.f32 %v447, %v858
        %v860 = vand.u32 %v859, 4294901760
        %861 = vmatpush.msra.mxu0 %v860
        %v862 = vand.u32 %v441, 4294901760
        %v863 = vsub.f32 %v441, %v862
        %v864 = vand.u32 %v863, 4294901760
        %865 = vmatpush.msra.mxu0 %v864
        %v866 = vand.u32 %v435, 4294901760
        %v867 = vsub.f32 %v435, %v866
        %v868 = vand.u32 %v867, 4294901760
        %869 = vmatpush.msra.mxu0 %v868
        %v870 = vand.u32 %v429, 4294901760
        %v871 = vsub.f32 %v429, %v870
        %v872 = vand.u32 %v871, 4294901760
        %873 = vmatpush.msra.mxu0 %v872
        %v874 = vand.u32 %v423, 4294901760
        %v875 = vsub.f32 %v423, %v874
        %v876 = vand.u32 %v875, 4294901760
        %877 = vmatpush.msra.mxu0 %v876
        %v878 = vand.u32 %v417, 4294901760
        %v879 = vsub.f32 %v417, %v878
        %v880 = vand.u32 %v879, 4294901760
        %881 = vmatpush.msra.mxu0 %v880
        %v882 = vand.u32 %v411, 4294901760
        %v883 = vsub.f32 %v411, %v882
        %v884 = vand.u32 %v883, 4294901760
        %885 = vmatpush.msra.mxu0 %v884
        %v886 = vand.u32 %v405, 4294901760
        %v887 = vsub.f32 %v405, %v886
        %v888 = vand.u32 %v887, 4294901760
        %889 = vmatpush.msra.mxu0 %v888
        %v890 = vand.u32 %v399, 4294901760
        %v891 = vsub.f32 %v399, %v890
        %v892 = vand.u32 %v891, 4294901760
        %893 = vmatpush.msra.mxu0 %v892
        %v894 = vand.u32 %v393, 4294901760
        %v895 = vsub.f32 %v393, %v894
        %v896 = vand.u32 %v895, 4294901760
        %897 = vmatpush.msra.mxu0 %v896
        %v898 = vand.u32 %v389, 4294901760
        %899 = vmatmul.f32.gmra.mxu0 %v898
        %v900 = vpop.f32.mrf.mxu0
        %v901 = vadd.f32 %v832, %v900
        %902 = vdwg.mxu0
        %v903 = vand.u32 %v483, 4294901760
        %904 = vmatpush.msra.mxu0 %v903
        %v905 = vand.u32 %v477, 4294901760
        %906 = vmatpush.msra.mxu0 %v905
        %v907 = vand.u32 %v471, 4294901760
        %908 = vmatpush.msra.mxu0 %v907
        %v909 = vand.u32 %v465, 4294901760
        %910 = vmatpush.msra.mxu0 %v909
        %v911 = vand.u32 %v459, 4294901760
        %912 = vmatpush.msra.mxu0 %v911
        %v913 = vand.u32 %v453, 4294901760
        %914 = vmatpush.msra.mxu0 %v913
        %v915 = vand.u32 %v447, 4294901760
        %916 = vmatpush.msra.mxu0 %v915
        %v917 = vand.u32 %v441, 4294901760
        %918 = vmatpush.msra.mxu0 %v917
        %v919 = vand.u32 %v435, 4294901760
        %920 = vmatpush.msra.mxu0 %v919
        %v921 = vand.u32 %v429, 4294901760
        %922 = vmatpush.msra.mxu0 %v921
        %v923 = vand.u32 %v423, 4294901760
        %924 = vmatpush.msra.mxu0 %v923
        %v925 = vand.u32 %v417, 4294901760
        %926 = vmatpush.msra.mxu0 %v925
        %v927 = vand.u32 %v411, 4294901760
        %928 = vmatpush.msra.mxu0 %v927
        %v929 = vand.u32 %v405, 4294901760
        %930 = vmatpush.msra.mxu0 %v929
        %v931 = vand.u32 %v399, 4294901760
        %932 = vmatpush.msra.mxu0 %v931
        %v933 = vand.u32 %v393, 4294901760
        %934 = vmatpush.msra.mxu0 %v933
        %v935 = vand.u32 %v389, 4294901760
        %936 = vmatmul.f32.gmra.mxu0 %v935
        %v937 = vpop.f32.mrf.mxu0
        %v938 = vadd.f32 %v901, %v937
        %939 = vdwg.mxu0
        %v940 = vand.u32 %v579, 4294901760
        %941 = vmatpush.msra.mxu0 %v940
        %v942 = vand.u32 %v573, 4294901760
        %943 = vmatpush.msra.mxu0 %v942
        %v944 = vand.u32 %v567, 4294901760
        %945 = vmatpush.msra.mxu0 %v944
        %v946 = vand.u32 %v561, 4294901760
        %947 = vmatpush.msra.mxu0 %v946
        %v948 = vand.u32 %v555, 4294901760
        %949 = vmatpush.msra.mxu0 %v948
        %v950 = vand.u32 %v549, 4294901760
        %951 = vmatpush.msra.mxu0 %v950
        %v952 = vand.u32 %v543, 4294901760
        %953 = vmatpush.msra.mxu0 %v952
        %v954 = vand.u32 %v537, 4294901760
        %955 = vmatpush.msra.mxu0 %v954
        %v956 = vand.u32 %v531, 4294901760
        %957 = vmatpush.msra.mxu0 %v956
        %v958 = vand.u32 %v525, 4294901760
        %959 = vmatpush.msra.mxu0 %v958
        %v960 = vand.u32 %v519, 4294901760
        %961 = vmatpush.msra.mxu0 %v960
        %v962 = vand.u32 %v513, 4294901760
        %963 = vmatpush.msra.mxu0 %v962
        %v964 = vand.u32 %v507, 4294901760
        %965 = vmatpush.msra.mxu0 %v964
        %v966 = vand.u32 %v501, 4294901760
        %967 = vmatpush.msra.mxu0 %v966
        %v968 = vand.u32 %v495, 4294901760
        %969 = vmatpush.msra.mxu0 %v968
        %v970 = vand.u32 %v489, 4294901760
        %971 = vmatpush.msra.mxu0 %v970
        %v972 = vand.u32 %v390, 4294901760
        %v973 = vsub.f32 %v390, %v972
        %v974 = vand.u32 %v973, 4294901760
        %v975 = vsub.f32 %v973, %v974
        %v976 = vand.u32 %v975, 4294901760
        %977 = vmatmul.f32.gmra.mxu0 %v976
        %v978 = vpop.f32.mrf.mxu0
        %v979 = vadd.f32 %v938, %v978
        %980 = vdwg.mxu0
        %v981 = vand.u32 %v579, 4294901760
        %v982 = vsub.f32 %v579, %v981
        %v983 = vand.u32 %v982, 4294901760
        %v984 = vsub.f32 %v982, %v983
        %v985 = vand.u32 %v984, 4294901760
        %986 = vmatpush.msra.mxu0 %v985
        %v987 = vand.u32 %v573, 4294901760
        %v988 = vsub.f32 %v573, %v987
        %v989 = vand.u32 %v988, 4294901760
        %v990 = vsub.f32 %v988, %v989
        %v991 = vand.u32 %v990, 4294901760
        %992 = vmatpush.msra.mxu0 %v991
        %v993 = vand.u32 %v567, 4294901760
        %v994 = vsub.f32 %v567, %v993
        %v995 = vand.u32 %v994, 4294901760
        %v996 = vsub.f32 %v994, %v995
        %v997 = vand.u32 %v996, 4294901760
        %998 = vmatpush.msra.mxu0 %v997
        %v999 = vand.u32 %v561, 4294901760
        %v1000 = vsub.f32 %v561, %v999
        %v1001 = vand.u32 %v1000, 4294901760
        %v1002 = vsub.f32 %v1000, %v1001
        %v1003 = vand.u32 %v1002, 4294901760
        %1004 = vmatpush.msra.mxu0 %v1003
        %v1005 = vand.u32 %v555, 4294901760
        %v1006 = vsub.f32 %v555, %v1005
        %v1007 = vand.u32 %v1006, 4294901760
        %v1008 = vsub.f32 %v1006, %v1007
        %v1009 = vand.u32 %v1008, 4294901760
        %1010 = vmatpush.msra.mxu0 %v1009
        %v1011 = vand.u32 %v549, 4294901760
        %v1012 = vsub.f32 %v549, %v1011
        %v1013 = vand.u32 %v1012, 4294901760
        %v1014 = vsub.f32 %v1012, %v1013
        %v1015 = vand.u32 %v1014, 4294901760
        %1016 = vmatpush.msra.mxu0 %v1015
        %v1017 = vand.u32 %v543, 4294901760
        %v1018 = vsub.f32 %v543, %v1017
        %v1019 = vand.u32 %v1018, 4294901760
        %v1020 = vsub.f32 %v1018, %v1019
        %v1021 = vand.u32 %v1020, 4294901760
        %1022 = vmatpush.msra.mxu0 %v1021
        %v1023 = vand.u32 %v537, 4294901760
        %v1024 = vsub.f32 %v537, %v1023
        %v1025 = vand.u32 %v1024, 4294901760
        %v1026 = vsub.f32 %v1024, %v1025
        %v1027 = vand.u32 %v1026, 4294901760
        %1028 = vmatpush.msra.mxu0 %v1027
        %v1029 = vand.u32 %v531, 4294901760
        %v1030 = vsub.f32 %v531, %v1029
        %v1031 = vand.u32 %v1030, 4294901760
        %v1032 = vsub.f32 %v1030, %v1031
        %v1033 = vand.u32 %v1032, 4294901760
        %1034 = vmatpush.msra.mxu0 %v1033
        %v1035 = vand.u32 %v525, 4294901760
        %v1036 = vsub.f32 %v525, %v1035
        %v1037 = vand.u32 %v1036, 4294901760
        %v1038 = vsub.f32 %v1036, %v1037
        %v1039 = vand.u32 %v1038, 4294901760
        %1040 = vmatpush.msra.mxu0 %v1039
        %v1041 = vand.u32 %v519, 4294901760
        %v1042 = vsub.f32 %v519, %v1041
        %v1043 = vand.u32 %v1042, 4294901760
        %v1044 = vsub.f32 %v1042, %v1043
        %v1045 = vand.u32 %v1044, 4294901760
        %1046 = vmatpush.msra.mxu0 %v1045
        %v1047 = vand.u32 %v513, 4294901760
        %v1048 = vsub.f32 %v513, %v1047
        %v1049 = vand.u32 %v1048, 4294901760
        %v1050 = vsub.f32 %v1048, %v1049
        %v1051 = vand.u32 %v1050, 4294901760
        %1052 = vmatpush.msra.mxu0 %v1051
        %v1053 = vand.u32 %v507, 4294901760
        %v1054 = vsub.f32 %v507, %v1053
        %v1055 = vand.u32 %v1054, 4294901760
        %v1056 = vsub.f32 %v1054, %v1055
        %v1057 = vand.u32 %v1056, 4294901760
        %1058 = vmatpush.msra.mxu0 %v1057
        %v1059 = vand.u32 %v501, 4294901760
        %v1060 = vsub.f32 %v501, %v1059
        %v1061 = vand.u32 %v1060, 4294901760
        %v1062 = vsub.f32 %v1060, %v1061
        %v1063 = vand.u32 %v1062, 4294901760
        %1064 = vmatpush.msra.mxu0 %v1063
        %v1065 = vand.u32 %v495, 4294901760
        %v1066 = vsub.f32 %v495, %v1065
        %v1067 = vand.u32 %v1066, 4294901760
        %v1068 = vsub.f32 %v1066, %v1067
        %v1069 = vand.u32 %v1068, 4294901760
        %1070 = vmatpush.msra.mxu0 %v1069
        %v1071 = vand.u32 %v489, 4294901760
        %v1072 = vsub.f32 %v489, %v1071
        %v1073 = vand.u32 %v1072, 4294901760
        %v1074 = vsub.f32 %v1072, %v1073
        %v1075 = vand.u32 %v1074, 4294901760
        %1076 = vmatpush.msra.mxu0 %v1075
        %v1077 = vand.u32 %v390, 4294901760
        %1078 = vmatmul.f32.gmra.mxu0 %v1077
        %v1079 = vpop.f32.mrf.mxu0
        %v1080 = vadd.f32 %v979, %v1079
        %1081 = vdwg.mxu0
        %v1082 = vand.u32 %v579, 4294901760
        %v1083 = vsub.f32 %v579, %v1082
        %1084 = vmatpush.msra.mxu0 %v1083
        %v1085 = vand.u32 %v573, 4294901760
        %v1086 = vsub.f32 %v573, %v1085
        %1087 = vmatpush.msra.mxu0 %v1086
        %v1088 = vand.u32 %v567, 4294901760
        %v1089 = vsub.f32 %v567, %v1088
        %1090 = vmatpush.msra.mxu0 %v1089
        %v1091 = vand.u32 %v561, 4294901760
        %v1092 = vsub.f32 %v561, %v1091
        %1093 = vmatpush.msra.mxu0 %v1092
        %v1094 = vand.u32 %v555, 4294901760
        %v1095 = vsub.f32 %v555, %v1094
        %1096 = vmatpush.msra.mxu0 %v1095
        %v1097 = vand.u32 %v549, 4294901760
        %v1098 = vsub.f32 %v549, %v1097
        %1099 = vmatpush.msra.mxu0 %v1098
        %v1100 = vand.u32 %v543, 4294901760
        %v1101 = vsub.f32 %v543, %v1100
        %1102 = vmatpush.msra.mxu0 %v1101
        %v1103 = vand.u32 %v537, 4294901760
        %v1104 = vsub.f32 %v537, %v1103
        %1105 = vmatpush.msra.mxu0 %v1104
        %v1106 = vand.u32 %v531, 4294901760
        %v1107 = vsub.f32 %v531, %v1106
        %1108 = vmatpush.msra.mxu0 %v1107
        %v1109 = vand.u32 %v525, 4294901760
        %v1110 = vsub.f32 %v525, %v1109
        %1111 = vmatpush.msra.mxu0 %v1110
        %v1112 = vand.u32 %v519, 4294901760
        %v1113 = vsub.f32 %v519, %v1112
        %1114 = vmatpush.msra.mxu0 %v1113
        %v1115 = vand.u32 %v513, 4294901760
        %v1116 = vsub.f32 %v513, %v1115
        %1117 = vmatpush.msra.mxu0 %v1116
        %v1118 = vand.u32 %v507, 4294901760
        %v1119 = vsub.f32 %v507, %v1118
        %1120 = vmatpush.msra.mxu0 %v1119
        %v1121 = vand.u32 %v501, 4294901760
        %v1122 = vsub.f32 %v501, %v1121
        %1123 = vmatpush.msra.mxu0 %v1122
        %v1124 = vand.u32 %v495, 4294901760
        %v1125 = vsub.f32 %v495, %v1124
        %1126 = vmatpush.msra.mxu0 %v1125
        %v1127 = vand.u32 %v489, 4294901760
        %v1128 = vsub.f32 %v489, %v1127
        %1129 = vmatpush.msra.mxu0 %v1128
        %v1130 = vand.u32 %v390, 4294901760
        %v1131 = vsub.f32 %v390, %v1130
        %1132 = vmatmul.f32.gmra.mxu0 %v1131
        %v1133 = vpop.f32.mrf.mxu0
        %v1134 = vadd.f32 %v1080, %v1133
        %1135 = vdwg.mxu0
        %v1136 = vand.u32 %v579, 4294901760
        %1137 = vmatpush.msra.mxu0 %v1136
        %v1138 = vand.u32 %v573, 4294901760
        %1139 = vmatpush.msra.mxu0 %v1138
        %v1140 = vand.u32 %v567, 4294901760
        %1141 = vmatpush.msra.mxu0 %v1140
        %v1142 = vand.u32 %v561, 4294901760
        %1143 = vmatpush.msra.mxu0 %v1142
        %v1144 = vand.u32 %v555, 4294901760
        %1145 = vmatpush.msra.mxu0 %v1144
        %v1146 = vand.u32 %v549, 4294901760
        %1147 = vmatpush.msra.mxu0 %v1146
        %v1148 = vand.u32 %v543, 4294901760
        %1149 = vmatpush.msra.mxu0 %v1148
        %v1150 = vand.u32 %v537, 4294901760
        %1151 = vmatpush.msra.mxu0 %v1150
        %v1152 = vand.u32 %v531, 4294901760
        %1153 = vmatpush.msra.mxu0 %v1152
        %v1154 = vand.u32 %v525, 4294901760
        %1155 = vmatpush.msra.mxu0 %v1154
        %v1156 = vand.u32 %v519, 4294901760
        %1157 = vmatpush.msra.mxu0 %v1156
        %v1158 = vand.u32 %v513, 4294901760
        %1159 = vmatpush.msra.mxu0 %v1158
        %v1160 = vand.u32 %v507, 4294901760
        %1161 = vmatpush.msra.mxu0 %v1160
        %v1162 = vand.u32 %v501, 4294901760
        %1163 = vmatpush.msra.mxu0 %v1162
        %v1164 = vand.u32 %v495, 4294901760
        %1165 = vmatpush.msra.mxu0 %v1164
        %v1166 = vand.u32 %v489, 4294901760
        %1167 = vmatpush.msra.mxu0 %v1166
        %v1168 = vand.u32 %v390, 4294901760
        %v1169 = vsub.f32 %v390, %v1168
        %v1170 = vand.u32 %v1169, 4294901760
        %1171 = vmatmul.f32.gmra.mxu0 %v1170
        %v1172 = vpop.f32.mrf.mxu0
        %v1173 = vadd.f32 %v1134, %v1172
        %1174 = vdwg.mxu0
        %v1175 = vand.u32 %v579, 4294901760
        %v1176 = vsub.f32 %v579, %v1175
        %v1177 = vand.u32 %v1176, 4294901760
        %1178 = vmatpush.msra.mxu0 %v1177
        %v1179 = vand.u32 %v573, 4294901760
        %v1180 = vsub.f32 %v573, %v1179
        %v1181 = vand.u32 %v1180, 4294901760
        %1182 = vmatpush.msra.mxu0 %v1181
        %v1183 = vand.u32 %v567, 4294901760
        %v1184 = vsub.f32 %v567, %v1183
        %v1185 = vand.u32 %v1184, 4294901760
        %1186 = vmatpush.msra.mxu0 %v1185
        %v1187 = vand.u32 %v561, 4294901760
        %v1188 = vsub.f32 %v561, %v1187
        %v1189 = vand.u32 %v1188, 4294901760
        %1190 = vmatpush.msra.mxu0 %v1189
        %v1191 = vand.u32 %v555, 4294901760
        %v1192 = vsub.f32 %v555, %v1191
        %v1193 = vand.u32 %v1192, 4294901760
        %1194 = vmatpush.msra.mxu0 %v1193
        %v1195 = vand.u32 %v549, 4294901760
        %v1196 = vsub.f32 %v549, %v1195
        %v1197 = vand.u32 %v1196, 4294901760
        %1198 = vmatpush.msra.mxu0 %v1197
        %v1199 = vand.u32 %v543, 4294901760
        %v1200 = vsub.f32 %v543, %v1199
        %v1201 = vand.u32 %v1200, 4294901760
        %1202 = vmatpush.msra.mxu0 %v1201
        %v1203 = vand.u32 %v537, 4294901760
        %v1204 = vsub.f32 %v537, %v1203
        %v1205 = vand.u32 %v1204, 4294901760
        %1206 = vmatpush.msra.mxu0 %v1205
        %v1207 = vand.u32 %v531, 4294901760
        %v1208 = vsub.f32 %v531, %v1207
        %v1209 = vand.u32 %v1208, 4294901760
        %1210 = vmatpush.msra.mxu0 %v1209
        %v1211 = vand.u32 %v525, 4294901760
        %v1212 = vsub.f32 %v525, %v1211
        %v1213 = vand.u32 %v1212, 4294901760
        %1214 = vmatpush.msra.mxu0 %v1213
        %v1215 = vand.u32 %v519, 4294901760
        %v1216 = vsub.f32 %v519, %v1215
        %v1217 = vand.u32 %v1216, 4294901760
        %1218 = vmatpush.msra.mxu0 %v1217
        %v1219 = vand.u32 %v513, 4294901760
        %v1220 = vsub.f32 %v513, %v1219
        %v1221 = vand.u32 %v1220, 4294901760
        %1222 = vmatpush.msra.mxu0 %v1221
        %v1223 = vand.u32 %v507, 4294901760
        %v1224 = vsub.f32 %v507, %v1223
        %v1225 = vand.u32 %v1224, 4294901760
        %1226 = vmatpush.msra.mxu0 %v1225
        %v1227 = vand.u32 %v501, 4294901760
        %v1228 = vsub.f32 %v501, %v1227
        %v1229 = vand.u32 %v1228, 4294901760
        %1230 = vmatpush.msra.mxu0 %v1229
        %v1231 = vand.u32 %v495, 4294901760
        %v1232 = vsub.f32 %v495, %v1231
        %v1233 = vand.u32 %v1232, 4294901760
        %1234 = vmatpush.msra.mxu0 %v1233
        %v1235 = vand.u32 %v489, 4294901760
        %v1236 = vsub.f32 %v489, %v1235
        %v1237 = vand.u32 %v1236, 4294901760
        %1238 = vmatpush.msra.mxu0 %v1237
        %v1239 = vand.u32 %v390, 4294901760
        %1240 = vmatmul.f32.gmra.mxu0 %v1239
        %v1241 = vpop.f32.mrf.mxu0
        %v1242 = vadd.f32 %v1173, %v1241
        %1243 = vdwg.mxu0
        %v1244 = vand.u32 %v579, 4294901760
        %1245 = vmatpush.msra.mxu0 %v1244
        %v1246 = vand.u32 %v573, 4294901760
        %1247 = vmatpush.msra.mxu0 %v1246
        %v1248 = vand.u32 %v567, 4294901760
        %1249 = vmatpush.msra.mxu0 %v1248
        %v1250 = vand.u32 %v561, 4294901760
        %1251 = vmatpush.msra.mxu0 %v1250
        %v1252 = vand.u32 %v555, 4294901760
        %1253 = vmatpush.msra.mxu0 %v1252
        %v1254 = vand.u32 %v549, 4294901760
        %1255 = vmatpush.msra.mxu0 %v1254
        %v1256 = vand.u32 %v543, 4294901760
        %1257 = vmatpush.msra.mxu0 %v1256
        %v1258 = vand.u32 %v537, 4294901760
        %1259 = vmatpush.msra.mxu0 %v1258
        %v1260 = vand.u32 %v531, 4294901760
        %1261 = vmatpush.msra.mxu0 %v1260
        %v1262 = vand.u32 %v525, 4294901760
        %1263 = vmatpush.msra.mxu0 %v1262
        %v1264 = vand.u32 %v519, 4294901760
        %1265 = vmatpush.msra.mxu0 %v1264
        %v1266 = vand.u32 %v513, 4294901760
        %1267 = vmatpush.msra.mxu0 %v1266
        %v1268 = vand.u32 %v507, 4294901760
        %1269 = vmatpush.msra.mxu0 %v1268
        %v1270 = vand.u32 %v501, 4294901760
        %1271 = vmatpush.msra.mxu0 %v1270
        %v1272 = vand.u32 %v495, 4294901760
        %1273 = vmatpush.msra.mxu0 %v1272
        %v1274 = vand.u32 %v489, 4294901760
        %1275 = vmatpush.msra.mxu0 %v1274
        %v1276 = vand.u32 %v390, 4294901760
        %1277 = vmatmul.f32.gmra.mxu0 %v1276
        %v1278 = vpop.f32.mrf.mxu0
        %v1279 = vadd.f32 %v1242, %v1278
        %1280 = vdwg.mxu0
        %v1281 = vand.u32 %v484, 4294901760
        %1282 = vmatpush.msra.mxu0 %v1281
        %v1283 = vand.u32 %v478, 4294901760
        %1284 = vmatpush.msra.mxu0 %v1283
        %v1285 = vand.u32 %v472, 4294901760
        %1286 = vmatpush.msra.mxu0 %v1285
        %v1287 = vand.u32 %v466, 4294901760
        %1288 = vmatpush.msra.mxu0 %v1287
        %v1289 = vand.u32 %v460, 4294901760
        %1290 = vmatpush.msra.mxu0 %v1289
        %v1291 = vand.u32 %v454, 4294901760
        %1292 = vmatpush.msra.mxu0 %v1291
        %v1293 = vand.u32 %v448, 4294901760
        %1294 = vmatpush.msra.mxu0 %v1293
        %v1295 = vand.u32 %v442, 4294901760
        %1296 = vmatpush.msra.mxu0 %v1295
        %v1297 = vand.u32 %v436, 4294901760
        %1298 = vmatpush.msra.mxu0 %v1297
        %v1299 = vand.u32 %v430, 4294901760
        %1300 = vmatpush.msra.mxu0 %v1299
        %v1301 = vand.u32 %v424, 4294901760
        %1302 = vmatpush.msra.mxu0 %v1301
        %v1303 = vand.u32 %v418, 4294901760
        %1304 = vmatpush.msra.mxu0 %v1303
        %v1305 = vand.u32 %v412, 4294901760
        %1306 = vmatpush.msra.mxu0 %v1305
        %v1307 = vand.u32 %v406, 4294901760
        %1308 = vmatpush.msra.mxu0 %v1307
        %v1309 = vand.u32 %v400, 4294901760
        %1310 = vmatpush.msra.mxu0 %v1309
        %v1311 = vand.u32 %v394, 4294901760
        %1312 = vmatpush.msra.mxu0 %v1311
        %v1313 = vand.u32 %v389, 4294901760
        %v1314 = vsub.f32 %v389, %v1313
        %v1315 = vand.u32 %v1314, 4294901760
        %v1316 = vsub.f32 %v1314, %v1315
        %v1317 = vand.u32 %v1316, 4294901760
        %1318 = vmatmul.f32.gmra.mxu0 %v1317
        %v1319 = vpop.f32.mrf.mxu0
        %v1320 = vadd.f32 %v588, %v1319
        %1321 = vdwg.mxu0
        %v1322 = vand.u32 %v484, 4294901760
        %v1323 = vsub.f32 %v484, %v1322
        %v1324 = vand.u32 %v1323, 4294901760
        %v1325 = vsub.f32 %v1323, %v1324
        %v1326 = vand.u32 %v1325, 4294901760
        %1327 = vmatpush.msra.mxu0 %v1326
        %v1328 = vand.u32 %v478, 4294901760
        %v1329 = vsub.f32 %v478, %v1328
        %v1330 = vand.u32 %v1329, 4294901760
        %v1331 = vsub.f32 %v1329, %v1330
        %v1332 = vand.u32 %v1331, 4294901760
        %1333 = vmatpush.msra.mxu0 %v1332
        %v1334 = vand.u32 %v472, 4294901760
        %v1335 = vsub.f32 %v472, %v1334
        %v1336 = vand.u32 %v1335, 4294901760
        %v1337 = vsub.f32 %v1335, %v1336
        %v1338 = vand.u32 %v1337, 4294901760
        %1339 = vmatpush.msra.mxu0 %v1338
        %v1340 = vand.u32 %v466, 4294901760
        %v1341 = vsub.f32 %v466, %v1340
        %v1342 = vand.u32 %v1341, 4294901760
        %v1343 = vsub.f32 %v1341, %v1342
        %v1344 = vand.u32 %v1343, 4294901760
        %1345 = vmatpush.msra.mxu0 %v1344
        %v1346 = vand.u32 %v460, 4294901760
        %v1347 = vsub.f32 %v460, %v1346
        %v1348 = vand.u32 %v1347, 4294901760
        %v1349 = vsub.f32 %v1347, %v1348
        %v1350 = vand.u32 %v1349, 4294901760
        %1351 = vmatpush.msra.mxu0 %v1350
        %v1352 = vand.u32 %v454, 4294901760
        %v1353 = vsub.f32 %v454, %v1352
        %v1354 = vand.u32 %v1353, 4294901760
        %v1355 = vsub.f32 %v1353, %v1354
        %v1356 = vand.u32 %v1355, 4294901760
        %1357 = vmatpush.msra.mxu0 %v1356
        %v1358 = vand.u32 %v448, 4294901760
        %v1359 = vsub.f32 %v448, %v1358
        %v1360 = vand.u32 %v1359, 4294901760
        %v1361 = vsub.f32 %v1359, %v1360
        %v1362 = vand.u32 %v1361, 4294901760
        %1363 = vmatpush.msra.mxu0 %v1362
        %v1364 = vand.u32 %v442, 4294901760
        %v1365 = vsub.f32 %v442, %v1364
        %v1366 = vand.u32 %v1365, 4294901760
        %v1367 = vsub.f32 %v1365, %v1366
        %v1368 = vand.u32 %v1367, 4294901760
        %1369 = vmatpush.msra.mxu0 %v1368
        %v1370 = vand.u32 %v436, 4294901760
        %v1371 = vsub.f32 %v436, %v1370
        %v1372 = vand.u32 %v1371, 4294901760
        %v1373 = vsub.f32 %v1371, %v1372
        %v1374 = vand.u32 %v1373, 4294901760
        %1375 = vmatpush.msra.mxu0 %v1374
        %v1376 = vand.u32 %v430, 4294901760
        %v1377 = vsub.f32 %v430, %v1376
        %v1378 = vand.u32 %v1377, 4294901760
        %v1379 = vsub.f32 %v1377, %v1378
        %v1380 = vand.u32 %v1379, 4294901760
        %1381 = vmatpush.msra.mxu0 %v1380
        %v1382 = vand.u32 %v424, 4294901760
        %v1383 = vsub.f32 %v424, %v1382
        %v1384 = vand.u32 %v1383, 4294901760
        %v1385 = vsub.f32 %v1383, %v1384
        %v1386 = vand.u32 %v1385, 4294901760
        %1387 = vmatpush.msra.mxu0 %v1386
        %v1388 = vand.u32 %v418, 4294901760
        %v1389 = vsub.f32 %v418, %v1388
        %v1390 = vand.u32 %v1389, 4294901760
        %v1391 = vsub.f32 %v1389, %v1390
        %v1392 = vand.u32 %v1391, 4294901760
        %1393 = vmatpush.msra.mxu0 %v1392
        %v1394 = vand.u32 %v412, 4294901760
        %v1395 = vsub.f32 %v412, %v1394
        %v1396 = vand.u32 %v1395, 4294901760
        %v1397 = vsub.f32 %v1395, %v1396
        %v1398 = vand.u32 %v1397, 4294901760
        %1399 = vmatpush.msra.mxu0 %v1398
        %v1400 = vand.u32 %v406, 4294901760
        %v1401 = vsub.f32 %v406, %v1400
        %v1402 = vand.u32 %v1401, 4294901760
        %v1403 = vsub.f32 %v1401, %v1402
        %v1404 = vand.u32 %v1403, 4294901760
        %1405 = vmatpush.msra.mxu0 %v1404
        %v1406 = vand.u32 %v400, 4294901760
        %v1407 = vsub.f32 %v400, %v1406
        %v1408 = vand.u32 %v1407, 4294901760
        %v1409 = vsub.f32 %v1407, %v1408
        %v1410 = vand.u32 %v1409, 4294901760
        %1411 = vmatpush.msra.mxu0 %v1410
        %v1412 = vand.u32 %v394, 4294901760
        %v1413 = vsub.f32 %v394, %v1412
        %v1414 = vand.u32 %v1413, 4294901760
        %v1415 = vsub.f32 %v1413, %v1414
        %v1416 = vand.u32 %v1415, 4294901760
        %1417 = vmatpush.msra.mxu0 %v1416
        %v1418 = vand.u32 %v389, 4294901760
        %1419 = vmatmul.f32.gmra.mxu0 %v1418
        %v1420 = vpop.f32.mrf.mxu0
        %v1421 = vadd.f32 %v1320, %v1420
        %1422 = vdwg.mxu0
        %v1423 = vand.u32 %v484, 4294901760
        %v1424 = vsub.f32 %v484, %v1423
        %1425 = vmatpush.msra.mxu0 %v1424
        %v1426 = vand.u32 %v478, 4294901760
        %v1427 = vsub.f32 %v478, %v1426
        %1428 = vmatpush.msra.mxu0 %v1427
        %v1429 = vand.u32 %v472, 4294901760
        %v1430 = vsub.f32 %v472, %v1429
        %1431 = vmatpush.msra.mxu0 %v1430
        %v1432 = vand.u32 %v466, 4294901760
        %v1433 = vsub.f32 %v466, %v1432
        %1434 = vmatpush.msra.mxu0 %v1433
        %v1435 = vand.u32 %v460, 4294901760
        %v1436 = vsub.f32 %v460, %v1435
        %1437 = vmatpush.msra.mxu0 %v1436
        %v1438 = vand.u32 %v454, 4294901760
        %v1439 = vsub.f32 %v454, %v1438
        %1440 = vmatpush.msra.mxu0 %v1439
        %v1441 = vand.u32 %v448, 4294901760
        %v1442 = vsub.f32 %v448, %v1441
        %1443 = vmatpush.msra.mxu0 %v1442
        %v1444 = vand.u32 %v442, 4294901760
        %v1445 = vsub.f32 %v442, %v1444
        %1446 = vmatpush.msra.mxu0 %v1445
        %v1447 = vand.u32 %v436, 4294901760
        %v1448 = vsub.f32 %v436, %v1447
        %1449 = vmatpush.msra.mxu0 %v1448
        %v1450 = vand.u32 %v430, 4294901760
        %v1451 = vsub.f32 %v430, %v1450
        %1452 = vmatpush.msra.mxu0 %v1451
        %v1453 = vand.u32 %v424, 4294901760
        %v1454 = vsub.f32 %v424, %v1453
        %1455 = vmatpush.msra.mxu0 %v1454
        %v1456 = vand.u32 %v418, 4294901760
        %v1457 = vsub.f32 %v418, %v1456
        %1458 = vmatpush.msra.mxu0 %v1457
        %v1459 = vand.u32 %v412, 4294901760
        %v1460 = vsub.f32 %v412, %v1459
        %1461 = vmatpush.msra.mxu0 %v1460
        %v1462 = vand.u32 %v406, 4294901760
        %v1463 = vsub.f32 %v406, %v1462
        %1464 = vmatpush.msra.mxu0 %v1463
        %v1465 = vand.u32 %v400, 4294901760
        %v1466 = vsub.f32 %v400, %v1465
        %1467 = vmatpush.msra.mxu0 %v1466
        %v1468 = vand.u32 %v394, 4294901760
        %v1469 = vsub.f32 %v394, %v1468
        %1470 = vmatpush.msra.mxu0 %v1469
        %v1471 = vand.u32 %v389, 4294901760
        %v1472 = vsub.f32 %v389, %v1471
        %1473 = vmatmul.f32.gmra.mxu0 %v1472
        %v1474 = vpop.f32.mrf.mxu0
        %v1475 = vadd.f32 %v1421, %v1474
        %1476 = vdwg.mxu0
        %v1477 = vand.u32 %v484, 4294901760
        %1478 = vmatpush.msra.mxu0 %v1477
        %v1479 = vand.u32 %v478, 4294901760
        %1480 = vmatpush.msra.mxu0 %v1479
        %v1481 = vand.u32 %v472, 4294901760
        %1482 = vmatpush.msra.mxu0 %v1481
        %v1483 = vand.u32 %v466, 4294901760
        %1484 = vmatpush.msra.mxu0 %v1483
        %v1485 = vand.u32 %v460, 4294901760
        %1486 = vmatpush.msra.mxu0 %v1485
        %v1487 = vand.u32 %v454, 4294901760
        %1488 = vmatpush.msra.mxu0 %v1487
        %v1489 = vand.u32 %v448, 4294901760
        %1490 = vmatpush.msra.mxu0 %v1489
        %v1491 = vand.u32 %v442, 4294901760
        %1492 = vmatpush.msra.mxu0 %v1491
        %v1493 = vand.u32 %v436, 4294901760
        %1494 = vmatpush.msra.mxu0 %v1493
        %v1495 = vand.u32 %v430, 4294901760
        %1496 = vmatpush.msra.mxu0 %v1495
        %v1497 = vand.u32 %v424, 4294901760
        %1498 = vmatpush.msra.mxu0 %v1497
        %v1499 = vand.u32 %v418, 4294901760
        %1500 = vmatpush.msra.mxu0 %v1499
        %v1501 = vand.u32 %v412, 4294901760
        %1502 = vmatpush.msra.mxu0 %v1501
        %v1503 = vand.u32 %v406, 4294901760
        %1504 = vmatpush.msra.mxu0 %v1503
        %v1505 = vand.u32 %v400, 4294901760
        %1506 = vmatpush.msra.mxu0 %v1505
        %v1507 = vand.u32 %v394, 4294901760
        %1508 = vmatpush.msra.mxu0 %v1507
        %v1509 = vand.u32 %v389, 4294901760
        %v1510 = vsub.f32 %v389, %v1509
        %v1511 = vand.u32 %v1510, 4294901760
        %1512 = vmatmul.f32.gmra.mxu0 %v1511
        %v1513 = vpop.f32.mrf.mxu0
        %v1514 = vadd.f32 %v1475, %v1513
        %1515 = vdwg.mxu0
        %v1516 = vand.u32 %v484, 4294901760
        %v1517 = vsub.f32 %v484, %v1516
        %v1518 = vand.u32 %v1517, 4294901760
        %1519 = vmatpush.msra.mxu0 %v1518
        %v1520 = vand.u32 %v478, 4294901760
        %v1521 = vsub.f32 %v478, %v1520
        %v1522 = vand.u32 %v1521, 4294901760
        %1523 = vmatpush.msra.mxu0 %v1522
        %v1524 = vand.u32 %v472, 4294901760
        %v1525 = vsub.f32 %v472, %v1524
        %v1526 = vand.u32 %v1525, 4294901760
        %1527 = vmatpush.msra.mxu0 %v1526
        %v1528 = vand.u32 %v466, 4294901760
        %v1529 = vsub.f32 %v466, %v1528
        %v1530 = vand.u32 %v1529, 4294901760
        %1531 = vmatpush.msra.mxu0 %v1530
        %v1532 = vand.u32 %v460, 4294901760
        %v1533 = vsub.f32 %v460, %v1532
        %v1534 = vand.u32 %v1533, 4294901760
        %1535 = vmatpush.msra.mxu0 %v1534
        %v1536 = vand.u32 %v454, 4294901760
        %v1537 = vsub.f32 %v454, %v1536
        %v1538 = vand.u32 %v1537, 4294901760
        %1539 = vmatpush.msra.mxu0 %v1538
        %v1540 = vand.u32 %v448, 4294901760
        %v1541 = vsub.f32 %v448, %v1540
        %v1542 = vand.u32 %v1541, 4294901760
        %1543 = vmatpush.msra.mxu0 %v1542
        %v1544 = vand.u32 %v442, 4294901760
        %v1545 = vsub.f32 %v442, %v1544
        %v1546 = vand.u32 %v1545, 4294901760
        %1547 = vmatpush.msra.mxu0 %v1546
        %v1548 = vand.u32 %v436, 4294901760
        %v1549 = vsub.f32 %v436, %v1548
        %v1550 = vand.u32 %v1549, 4294901760
        %1551 = vmatpush.msra.mxu0 %v1550
        %v1552 = vand.u32 %v430, 4294901760
        %v1553 = vsub.f32 %v430, %v1552
        %v1554 = vand.u32 %v1553, 4294901760
        %1555 = vmatpush.msra.mxu0 %v1554
        %v1556 = vand.u32 %v424, 4294901760
        %v1557 = vsub.f32 %v424, %v1556
        %v1558 = vand.u32 %v1557, 4294901760
        %1559 = vmatpush.msra.mxu0 %v1558
        %v1560 = vand.u32 %v418, 4294901760
        %v1561 = vsub.f32 %v418, %v1560
        %v1562 = vand.u32 %v1561, 4294901760
        %1563 = vmatpush.msra.mxu0 %v1562
        %v1564 = vand.u32 %v412, 4294901760
        %v1565 = vsub.f32 %v412, %v1564
        %v1566 = vand.u32 %v1565, 4294901760
        %1567 = vmatpush.msra.mxu0 %v1566
        %v1568 = vand.u32 %v406, 4294901760
        %v1569 = vsub.f32 %v406, %v1568
        %v1570 = vand.u32 %v1569, 4294901760
        %1571 = vmatpush.msra.mxu0 %v1570
        %v1572 = vand.u32 %v400, 4294901760
        %v1573 = vsub.f32 %v400, %v1572
        %v1574 = vand.u32 %v1573, 4294901760
        %1575 = vmatpush.msra.mxu0 %v1574
        %v1576 = vand.u32 %v394, 4294901760
        %v1577 = vsub.f32 %v394, %v1576
        %v1578 = vand.u32 %v1577, 4294901760
        %1579 = vmatpush.msra.mxu0 %v1578
        %v1580 = vand.u32 %v389, 4294901760
        %1581 = vmatmul.f32.gmra.mxu0 %v1580
        %v1582 = vpop.f32.mrf.mxu0
        %v1583 = vadd.f32 %v1514, %v1582
        %1584 = vdwg.mxu0
        %v1585 = vand.u32 %v484, 4294901760
        %1586 = vmatpush.msra.mxu0 %v1585
        %v1587 = vand.u32 %v478, 4294901760
        %1588 = vmatpush.msra.mxu0 %v1587
        %v1589 = vand.u32 %v472, 4294901760
        %1590 = vmatpush.msra.mxu0 %v1589
        %v1591 = vand.u32 %v466, 4294901760
        %1592 = vmatpush.msra.mxu0 %v1591
        %v1593 = vand.u32 %v460, 4294901760
        %1594 = vmatpush.msra.mxu0 %v1593
        %v1595 = vand.u32 %v454, 4294901760
        %1596 = vmatpush.msra.mxu0 %v1595
        %v1597 = vand.u32 %v448, 4294901760
        %1598 = vmatpush.msra.mxu0 %v1597
        %v1599 = vand.u32 %v442, 4294901760
        %1600 = vmatpush.msra.mxu0 %v1599
        %v1601 = vand.u32 %v436, 4294901760
        %1602 = vmatpush.msra.mxu0 %v1601
        %v1603 = vand.u32 %v430, 4294901760
        %1604 = vmatpush.msra.mxu0 %v1603
        %v1605 = vand.u32 %v424, 4294901760
        %1606 = vmatpush.msra.mxu0 %v1605
        %v1607 = vand.u32 %v418, 4294901760
        %1608 = vmatpush.msra.mxu0 %v1607
        %v1609 = vand.u32 %v412, 4294901760
        %1610 = vmatpush.msra.mxu0 %v1609
        %v1611 = vand.u32 %v406, 4294901760
        %1612 = vmatpush.msra.mxu0 %v1611
        %v1613 = vand.u32 %v400, 4294901760
        %1614 = vmatpush.msra.mxu0 %v1613
        %v1615 = vand.u32 %v394, 4294901760
        %1616 = vmatpush.msra.mxu0 %v1615
        %v1617 = vand.u32 %v389, 4294901760
        %1618 = vmatmul.f32.gmra.mxu0 %v1617
        %v1619 = vpop.f32.mrf.mxu0
        %v1620 = vadd.f32 %v1583, %v1619
        %1621 = vdwg.mxu0
        %v1622 = vand.u32 %v580, 4294901760
        %1623 = vmatpush.msra.mxu0 %v1622
        %v1624 = vand.u32 %v574, 4294901760
        %1625 = vmatpush.msra.mxu0 %v1624
        %v1626 = vand.u32 %v568, 4294901760
        %1627 = vmatpush.msra.mxu0 %v1626
        %v1628 = vand.u32 %v562, 4294901760
        %1629 = vmatpush.msra.mxu0 %v1628
        %v1630 = vand.u32 %v556, 4294901760
        %1631 = vmatpush.msra.mxu0 %v1630
        %v1632 = vand.u32 %v550, 4294901760
        %1633 = vmatpush.msra.mxu0 %v1632
        %v1634 = vand.u32 %v544, 4294901760
        %1635 = vmatpush.msra.mxu0 %v1634
        %v1636 = vand.u32 %v538, 4294901760
        %1637 = vmatpush.msra.mxu0 %v1636
        %v1638 = vand.u32 %v532, 4294901760
        %1639 = vmatpush.msra.mxu0 %v1638
        %v1640 = vand.u32 %v526, 4294901760
        %1641 = vmatpush.msra.mxu0 %v1640
        %v1642 = vand.u32 %v520, 4294901760
        %1643 = vmatpush.msra.mxu0 %v1642
        %v1644 = vand.u32 %v514, 4294901760
        %1645 = vmatpush.msra.mxu0 %v1644
        %v1646 = vand.u32 %v508, 4294901760
        %1647 = vmatpush.msra.mxu0 %v1646
        %v1648 = vand.u32 %v502, 4294901760
        %1649 = vmatpush.msra.mxu0 %v1648
        %v1650 = vand.u32 %v496, 4294901760
        %1651 = vmatpush.msra.mxu0 %v1650
        %v1652 = vand.u32 %v490, 4294901760
        %1653 = vmatpush.msra.mxu0 %v1652
        %v1654 = vand.u32 %v390, 4294901760
        %v1655 = vsub.f32 %v390, %v1654
        %v1656 = vand.u32 %v1655, 4294901760
        %v1657 = vsub.f32 %v1655, %v1656
        %v1658 = vand.u32 %v1657, 4294901760
        %1659 = vmatmul.f32.gmra.mxu0 %v1658
        %v1660 = vpop.f32.mrf.mxu0
        %v1661 = vadd.f32 %v1620, %v1660
        %1662 = vdwg.mxu0
        %v1663 = vand.u32 %v580, 4294901760
        %v1664 = vsub.f32 %v580, %v1663
        %v1665 = vand.u32 %v1664, 4294901760
        %v1666 = vsub.f32 %v1664, %v1665
        %v1667 = vand.u32 %v1666, 4294901760
        %1668 = vmatpush.msra.mxu0 %v1667
        %v1669 = vand.u32 %v574, 4294901760
        %v1670 = vsub.f32 %v574, %v1669
        %v1671 = vand.u32 %v1670, 4294901760
        %v1672 = vsub.f32 %v1670, %v1671
        %v1673 = vand.u32 %v1672, 4294901760
        %1674 = vmatpush.msra.mxu0 %v1673
        %v1675 = vand.u32 %v568, 4294901760
        %v1676 = vsub.f32 %v568, %v1675
        %v1677 = vand.u32 %v1676, 4294901760
        %v1678 = vsub.f32 %v1676, %v1677
        %v1679 = vand.u32 %v1678, 4294901760
        %1680 = vmatpush.msra.mxu0 %v1679
        %v1681 = vand.u32 %v562, 4294901760
        %v1682 = vsub.f32 %v562, %v1681
        %v1683 = vand.u32 %v1682, 4294901760
        %v1684 = vsub.f32 %v1682, %v1683
        %v1685 = vand.u32 %v1684, 4294901760
        %1686 = vmatpush.msra.mxu0 %v1685
        %v1687 = vand.u32 %v556, 4294901760
        %v1688 = vsub.f32 %v556, %v1687
        %v1689 = vand.u32 %v1688, 4294901760
        %v1690 = vsub.f32 %v1688, %v1689
        %v1691 = vand.u32 %v1690, 4294901760
        %1692 = vmatpush.msra.mxu0 %v1691
        %v1693 = vand.u32 %v550, 4294901760
        %v1694 = vsub.f32 %v550, %v1693
        %v1695 = vand.u32 %v1694, 4294901760
        %v1696 = vsub.f32 %v1694, %v1695
        %v1697 = vand.u32 %v1696, 4294901760
        %1698 = vmatpush.msra.mxu0 %v1697
        %v1699 = vand.u32 %v544, 4294901760
        %v1700 = vsub.f32 %v544, %v1699
        %v1701 = vand.u32 %v1700, 4294901760
        %v1702 = vsub.f32 %v1700, %v1701
        %v1703 = vand.u32 %v1702, 4294901760
        %1704 = vmatpush.msra.mxu0 %v1703
        %v1705 = vand.u32 %v538, 4294901760
        %v1706 = vsub.f32 %v538, %v1705
        %v1707 = vand.u32 %v1706, 4294901760
        %v1708 = vsub.f32 %v1706, %v1707
        %v1709 = vand.u32 %v1708, 4294901760
        %1710 = vmatpush.msra.mxu0 %v1709
        %v1711 = vand.u32 %v532, 4294901760
        %v1712 = vsub.f32 %v532, %v1711
        %v1713 = vand.u32 %v1712, 4294901760
        %v1714 = vsub.f32 %v1712, %v1713
        %v1715 = vand.u32 %v1714, 4294901760
        %1716 = vmatpush.msra.mxu0 %v1715
        %v1717 = vand.u32 %v526, 4294901760
        %v1718 = vsub.f32 %v526, %v1717
        %v1719 = vand.u32 %v1718, 4294901760
        %v1720 = vsub.f32 %v1718, %v1719
        %v1721 = vand.u32 %v1720, 4294901760
        %1722 = vmatpush.msra.mxu0 %v1721
        %v1723 = vand.u32 %v520, 4294901760
        %v1724 = vsub.f32 %v520, %v1723
        %v1725 = vand.u32 %v1724, 4294901760
        %v1726 = vsub.f32 %v1724, %v1725
        %v1727 = vand.u32 %v1726, 4294901760
        %1728 = vmatpush.msra.mxu0 %v1727
        %v1729 = vand.u32 %v514, 4294901760
        %v1730 = vsub.f32 %v514, %v1729
        %v1731 = vand.u32 %v1730, 4294901760
        %v1732 = vsub.f32 %v1730, %v1731
        %v1733 = vand.u32 %v1732, 4294901760
        %1734 = vmatpush.msra.mxu0 %v1733
        %v1735 = vand.u32 %v508, 4294901760
        %v1736 = vsub.f32 %v508, %v1735
        %v1737 = vand.u32 %v1736, 4294901760
        %v1738 = vsub.f32 %v1736, %v1737
        %v1739 = vand.u32 %v1738, 4294901760
        %1740 = vmatpush.msra.mxu0 %v1739
        %v1741 = vand.u32 %v502, 4294901760
        %v1742 = vsub.f32 %v502, %v1741
        %v1743 = vand.u32 %v1742, 4294901760
        %v1744 = vsub.f32 %v1742, %v1743
        %v1745 = vand.u32 %v1744, 4294901760
        %1746 = vmatpush.msra.mxu0 %v1745
        %v1747 = vand.u32 %v496, 4294901760
        %v1748 = vsub.f32 %v496, %v1747
        %v1749 = vand.u32 %v1748, 4294901760
        %v1750 = vsub.f32 %v1748, %v1749
        %v1751 = vand.u32 %v1750, 4294901760
        %1752 = vmatpush.msra.mxu0 %v1751
        %v1753 = vand.u32 %v490, 4294901760
        %v1754 = vsub.f32 %v490, %v1753
        %v1755 = vand.u32 %v1754, 4294901760
        %v1756 = vsub.f32 %v1754, %v1755
        %v1757 = vand.u32 %v1756, 4294901760
        %1758 = vmatpush.msra.mxu0 %v1757
        %v1759 = vand.u32 %v390, 4294901760
        %1760 = vmatmul.f32.gmra.mxu0 %v1759
        %v1761 = vpop.f32.mrf.mxu0
        %v1762 = vadd.f32 %v1661, %v1761
        %1763 = vdwg.mxu0
        %v1764 = vand.u32 %v580, 4294901760
        %v1765 = vsub.f32 %v580, %v1764
        %1766 = vmatpush.msra.mxu0 %v1765
        %v1767 = vand.u32 %v574, 4294901760
        %v1768 = vsub.f32 %v574, %v1767
        %1769 = vmatpush.msra.mxu0 %v1768
        %v1770 = vand.u32 %v568, 4294901760
        %v1771 = vsub.f32 %v568, %v1770
        %1772 = vmatpush.msra.mxu0 %v1771
        %v1773 = vand.u32 %v562, 4294901760
        %v1774 = vsub.f32 %v562, %v1773
        %1775 = vmatpush.msra.mxu0 %v1774
        %v1776 = vand.u32 %v556, 4294901760
        %v1777 = vsub.f32 %v556, %v1776
        %1778 = vmatpush.msra.mxu0 %v1777
        %v1779 = vand.u32 %v550, 4294901760
        %v1780 = vsub.f32 %v550, %v1779
        %1781 = vmatpush.msra.mxu0 %v1780
        %v1782 = vand.u32 %v544, 4294901760
        %v1783 = vsub.f32 %v544, %v1782
        %1784 = vmatpush.msra.mxu0 %v1783
        %v1785 = vand.u32 %v538, 4294901760
        %v1786 = vsub.f32 %v538, %v1785
        %1787 = vmatpush.msra.mxu0 %v1786
        %v1788 = vand.u32 %v532, 4294901760
        %v1789 = vsub.f32 %v532, %v1788
        %1790 = vmatpush.msra.mxu0 %v1789
        %v1791 = vand.u32 %v526, 4294901760
        %v1792 = vsub.f32 %v526, %v1791
        %1793 = vmatpush.msra.mxu0 %v1792
        %v1794 = vand.u32 %v520, 4294901760
        %v1795 = vsub.f32 %v520, %v1794
        %1796 = vmatpush.msra.mxu0 %v1795
        %v1797 = vand.u32 %v514, 4294901760
        %v1798 = vsub.f32 %v514, %v1797
        %1799 = vmatpush.msra.mxu0 %v1798
        %v1800 = vand.u32 %v508, 4294901760
        %v1801 = vsub.f32 %v508, %v1800
        %1802 = vmatpush.msra.mxu0 %v1801
        %v1803 = vand.u32 %v502, 4294901760
        %v1804 = vsub.f32 %v502, %v1803
        %1805 = vmatpush.msra.mxu0 %v1804
        %v1806 = vand.u32 %v496, 4294901760
        %v1807 = vsub.f32 %v496, %v1806
        %1808 = vmatpush.msra.mxu0 %v1807
        %v1809 = vand.u32 %v490, 4294901760
        %v1810 = vsub.f32 %v490, %v1809
        %1811 = vmatpush.msra.mxu0 %v1810
        %v1812 = vand.u32 %v390, 4294901760
        %v1813 = vsub.f32 %v390, %v1812
        %1814 = vmatmul.f32.gmra.mxu0 %v1813
        %v1815 = vpop.f32.mrf.mxu0
        %v1816 = vadd.f32 %v1762, %v1815
        %1817 = vdwg.mxu0
        %v1818 = vand.u32 %v580, 4294901760
        %1819 = vmatpush.msra.mxu0 %v1818
        %v1820 = vand.u32 %v574, 4294901760
        %1821 = vmatpush.msra.mxu0 %v1820
        %v1822 = vand.u32 %v568, 4294901760
        %1823 = vmatpush.msra.mxu0 %v1822
        %v1824 = vand.u32 %v562, 4294901760
        %1825 = vmatpush.msra.mxu0 %v1824
        %v1826 = vand.u32 %v556, 4294901760
        %1827 = vmatpush.msra.mxu0 %v1826
        %v1828 = vand.u32 %v550, 4294901760
        %1829 = vmatpush.msra.mxu0 %v1828
        %v1830 = vand.u32 %v544, 4294901760
        %1831 = vmatpush.msra.mxu0 %v1830
        %v1832 = vand.u32 %v538, 4294901760
        %1833 = vmatpush.msra.mxu0 %v1832
        %v1834 = vand.u32 %v532, 4294901760
        %1835 = vmatpush.msra.mxu0 %v1834
        %v1836 = vand.u32 %v526, 4294901760
        %1837 = vmatpush.msra.mxu0 %v1836
        %v1838 = vand.u32 %v520, 4294901760
        %1839 = vmatpush.msra.mxu0 %v1838
        %v1840 = vand.u32 %v514, 4294901760
        %1841 = vmatpush.msra.mxu0 %v1840
        %v1842 = vand.u32 %v508, 4294901760
        %1843 = vmatpush.msra.mxu0 %v1842
        %v1844 = vand.u32 %v502, 4294901760
        %1845 = vmatpush.msra.mxu0 %v1844
        %v1846 = vand.u32 %v496, 4294901760
        %1847 = vmatpush.msra.mxu0 %v1846
        %v1848 = vand.u32 %v490, 4294901760
        %1849 = vmatpush.msra.mxu0 %v1848
        %v1850 = vand.u32 %v390, 4294901760
        %v1851 = vsub.f32 %v390, %v1850
        %v1852 = vand.u32 %v1851, 4294901760
        %1853 = vmatmul.f32.gmra.mxu0 %v1852
        %v1854 = vpop.f32.mrf.mxu0
        %v1855 = vadd.f32 %v1816, %v1854
        %1856 = vdwg.mxu0
        %v1857 = vand.u32 %v580, 4294901760
        %v1858 = vsub.f32 %v580, %v1857
        %v1859 = vand.u32 %v1858, 4294901760
        %1860 = vmatpush.msra.mxu0 %v1859
        %v1861 = vand.u32 %v574, 4294901760
        %v1862 = vsub.f32 %v574, %v1861
        %v1863 = vand.u32 %v1862, 4294901760
        %1864 = vmatpush.msra.mxu0 %v1863
        %v1865 = vand.u32 %v568, 4294901760
        %v1866 = vsub.f32 %v568, %v1865
        %v1867 = vand.u32 %v1866, 4294901760
        %1868 = vmatpush.msra.mxu0 %v1867
        %v1869 = vand.u32 %v562, 4294901760
        %v1870 = vsub.f32 %v562, %v1869
        %v1871 = vand.u32 %v1870, 4294901760
        %1872 = vmatpush.msra.mxu0 %v1871
        %v1873 = vand.u32 %v556, 4294901760
        %v1874 = vsub.f32 %v556, %v1873
        %v1875 = vand.u32 %v1874, 4294901760
        %1876 = vmatpush.msra.mxu0 %v1875
        %v1877 = vand.u32 %v550, 4294901760
        %v1878 = vsub.f32 %v550, %v1877
        %v1879 = vand.u32 %v1878, 4294901760
        %1880 = vmatpush.msra.mxu0 %v1879
        %v1881 = vand.u32 %v544, 4294901760
        %v1882 = vsub.f32 %v544, %v1881
        %v1883 = vand.u32 %v1882, 4294901760
        %1884 = vmatpush.msra.mxu0 %v1883
        %v1885 = vand.u32 %v538, 4294901760
        %v1886 = vsub.f32 %v538, %v1885
        %v1887 = vand.u32 %v1886, 4294901760
        %1888 = vmatpush.msra.mxu0 %v1887
        %v1889 = vand.u32 %v532, 4294901760
        %v1890 = vsub.f32 %v532, %v1889
        %v1891 = vand.u32 %v1890, 4294901760
        %1892 = vmatpush.msra.mxu0 %v1891
        %v1893 = vand.u32 %v526, 4294901760
        %v1894 = vsub.f32 %v526, %v1893
        %v1895 = vand.u32 %v1894, 4294901760
        %1896 = vmatpush.msra.mxu0 %v1895
        %v1897 = vand.u32 %v520, 4294901760
        %v1898 = vsub.f32 %v520, %v1897
        %v1899 = vand.u32 %v1898, 4294901760
        %1900 = vmatpush.msra.mxu0 %v1899
        %v1901 = vand.u32 %v514, 4294901760
        %v1902 = vsub.f32 %v514, %v1901
        %v1903 = vand.u32 %v1902, 4294901760
        %1904 = vmatpush.msra.mxu0 %v1903
        %v1905 = vand.u32 %v508, 4294901760
        %v1906 = vsub.f32 %v508, %v1905
        %v1907 = vand.u32 %v1906, 4294901760
        %1908 = vmatpush.msra.mxu0 %v1907
        %v1909 = vand.u32 %v502, 4294901760
        %v1910 = vsub.f32 %v502, %v1909
        %v1911 = vand.u32 %v1910, 4294901760
        %1912 = vmatpush.msra.mxu0 %v1911
        %v1913 = vand.u32 %v496, 4294901760
        %v1914 = vsub.f32 %v496, %v1913
        %v1915 = vand.u32 %v1914, 4294901760
        %1916 = vmatpush.msra.mxu0 %v1915
        %v1917 = vand.u32 %v490, 4294901760
        %v1918 = vsub.f32 %v490, %v1917
        %v1919 = vand.u32 %v1918, 4294901760
        %1920 = vmatpush.msra.mxu0 %v1919
        %v1921 = vand.u32 %v390, 4294901760
        %1922 = vmatmul.f32.gmra.mxu0 %v1921
        %v1923 = vpop.f32.mrf.mxu0
        %v1924 = vadd.f32 %v1855, %v1923
        %1925 = vdwg.mxu0
        %v1926 = vand.u32 %v580, 4294901760
        %1927 = vmatpush.msra.mxu0 %v1926
        %v1928 = vand.u32 %v574, 4294901760
        %1929 = vmatpush.msra.mxu0 %v1928
        %v1930 = vand.u32 %v568, 4294901760
        %1931 = vmatpush.msra.mxu0 %v1930
        %v1932 = vand.u32 %v562, 4294901760
        %1933 = vmatpush.msra.mxu0 %v1932
        %v1934 = vand.u32 %v556, 4294901760
        %1935 = vmatpush.msra.mxu0 %v1934
        %v1936 = vand.u32 %v550, 4294901760
        %1937 = vmatpush.msra.mxu0 %v1936
        %v1938 = vand.u32 %v544, 4294901760
        %1939 = vmatpush.msra.mxu0 %v1938
        %v1940 = vand.u32 %v538, 4294901760
        %1941 = vmatpush.msra.mxu0 %v1940
        %v1942 = vand.u32 %v532, 4294901760
        %1943 = vmatpush.msra.mxu0 %v1942
        %v1944 = vand.u32 %v526, 4294901760
        %1945 = vmatpush.msra.mxu0 %v1944
        %v1946 = vand.u32 %v520, 4294901760
        %1947 = vmatpush.msra.mxu0 %v1946
        %v1948 = vand.u32 %v514, 4294901760
        %1949 = vmatpush.msra.mxu0 %v1948
        %v1950 = vand.u32 %v508, 4294901760
        %1951 = vmatpush.msra.mxu0 %v1950
        %v1952 = vand.u32 %v502, 4294901760
        %1953 = vmatpush.msra.mxu0 %v1952
        %v1954 = vand.u32 %v496, 4294901760
        %1955 = vmatpush.msra.mxu0 %v1954
        %v1956 = vand.u32 %v490, 4294901760
        %1957 = vmatpush.msra.mxu0 %v1956
        %v1958 = vand.u32 %v390, 4294901760
        %1959 = vmatmul.f32.gmra.mxu0 %v1958
        %v1960 = vpop.f32.mrf.mxu0
        %v1961 = vadd.f32 %v1924, %v1960
        %1962 = vdwg.mxu0
        %v1963 = vand.u32 %v485, 4294901760
        %1964 = vmatpush.msra.mxu0 %v1963
        %v1965 = vand.u32 %v479, 4294901760
        %1966 = vmatpush.msra.mxu0 %v1965
        %v1967 = vand.u32 %v473, 4294901760
        %1968 = vmatpush.msra.mxu0 %v1967
        %v1969 = vand.u32 %v467, 4294901760
        %1970 = vmatpush.msra.mxu0 %v1969
        %v1971 = vand.u32 %v461, 4294901760
        %1972 = vmatpush.msra.mxu0 %v1971
        %v1973 = vand.u32 %v455, 4294901760
        %1974 = vmatpush.msra.mxu0 %v1973
        %v1975 = vand.u32 %v449, 4294901760
        %1976 = vmatpush.msra.mxu0 %v1975
        %v1977 = vand.u32 %v443, 4294901760
        %1978 = vmatpush.msra.mxu0 %v1977
        %v1979 = vand.u32 %v437, 4294901760
        %1980 = vmatpush.msra.mxu0 %v1979
        %v1981 = vand.u32 %v431, 4294901760
        %1982 = vmatpush.msra.mxu0 %v1981
        %v1983 = vand.u32 %v425, 4294901760
        %1984 = vmatpush.msra.mxu0 %v1983
        %v1985 = vand.u32 %v419, 4294901760
        %1986 = vmatpush.msra.mxu0 %v1985
        %v1987 = vand.u32 %v413, 4294901760
        %1988 = vmatpush.msra.mxu0 %v1987
        %v1989 = vand.u32 %v407, 4294901760
        %1990 = vmatpush.msra.mxu0 %v1989
        %v1991 = vand.u32 %v401, 4294901760
        %1992 = vmatpush.msra.mxu0 %v1991
        %v1993 = vand.u32 %v395, 4294901760
        %1994 = vmatpush.msra.mxu0 %v1993
        %v1995 = vand.u32 %v389, 4294901760
        %v1996 = vsub.f32 %v389, %v1995
        %v1997 = vand.u32 %v1996, 4294901760
        %v1998 = vsub.f32 %v1996, %v1997
        %v1999 = vand.u32 %v1998, 4294901760
        %2000 = vmatmul.f32.gmra.mxu0 %v1999
        %v2001 = vpop.f32.mrf.mxu0
        %v2002 = vadd.f32 %v589, %v2001
        %2003 = vdwg.mxu0
        %v2004 = vand.u32 %v485, 4294901760
        %v2005 = vsub.f32 %v485, %v2004
        %v2006 = vand.u32 %v2005, 4294901760
        %v2007 = vsub.f32 %v2005, %v2006
        %v2008 = vand.u32 %v2007, 4294901760
        %2009 = vmatpush.msra.mxu0 %v2008
        %v2010 = vand.u32 %v479, 4294901760
        %v2011 = vsub.f32 %v479, %v2010
        %v2012 = vand.u32 %v2011, 4294901760
        %v2013 = vsub.f32 %v2011, %v2012
        %v2014 = vand.u32 %v2013, 4294901760
        %2015 = vmatpush.msra.mxu0 %v2014
        %v2016 = vand.u32 %v473, 4294901760
        %v2017 = vsub.f32 %v473, %v2016
        %v2018 = vand.u32 %v2017, 4294901760
        %v2019 = vsub.f32 %v2017, %v2018
        %v2020 = vand.u32 %v2019, 4294901760
        %2021 = vmatpush.msra.mxu0 %v2020
        %v2022 = vand.u32 %v467, 4294901760
        %v2023 = vsub.f32 %v467, %v2022
        %v2024 = vand.u32 %v2023, 4294901760
        %v2025 = vsub.f32 %v2023, %v2024
        %v2026 = vand.u32 %v2025, 4294901760
        %2027 = vmatpush.msra.mxu0 %v2026
        %v2028 = vand.u32 %v461, 4294901760
        %v2029 = vsub.f32 %v461, %v2028
        %v2030 = vand.u32 %v2029, 4294901760
        %v2031 = vsub.f32 %v2029, %v2030
        %v2032 = vand.u32 %v2031, 4294901760
        %2033 = vmatpush.msra.mxu0 %v2032
        %v2034 = vand.u32 %v455, 4294901760
        %v2035 = vsub.f32 %v455, %v2034
        %v2036 = vand.u32 %v2035, 4294901760
        %v2037 = vsub.f32 %v2035, %v2036
        %v2038 = vand.u32 %v2037, 4294901760
        %2039 = vmatpush.msra.mxu0 %v2038
        %v2040 = vand.u32 %v449, 4294901760
        %v2041 = vsub.f32 %v449, %v2040
        %v2042 = vand.u32 %v2041, 4294901760
        %v2043 = vsub.f32 %v2041, %v2042
        %v2044 = vand.u32 %v2043, 4294901760
        %2045 = vmatpush.msra.mxu0 %v2044
        %v2046 = vand.u32 %v443, 4294901760
        %v2047 = vsub.f32 %v443, %v2046
        %v2048 = vand.u32 %v2047, 4294901760
        %v2049 = vsub.f32 %v2047, %v2048
        %v2050 = vand.u32 %v2049, 4294901760
        %2051 = vmatpush.msra.mxu0 %v2050
        %v2052 = vand.u32 %v437, 4294901760
        %v2053 = vsub.f32 %v437, %v2052
        %v2054 = vand.u32 %v2053, 4294901760
        %v2055 = vsub.f32 %v2053, %v2054
        %v2056 = vand.u32 %v2055, 4294901760
        %2057 = vmatpush.msra.mxu0 %v2056
        %v2058 = vand.u32 %v431, 4294901760
        %v2059 = vsub.f32 %v431, %v2058
        %v2060 = vand.u32 %v2059, 4294901760
        %v2061 = vsub.f32 %v2059, %v2060
        %v2062 = vand.u32 %v2061, 4294901760
        %2063 = vmatpush.msra.mxu0 %v2062
        %v2064 = vand.u32 %v425, 4294901760
        %v2065 = vsub.f32 %v425, %v2064
        %v2066 = vand.u32 %v2065, 4294901760
        %v2067 = vsub.f32 %v2065, %v2066
        %v2068 = vand.u32 %v2067, 4294901760
        %2069 = vmatpush.msra.mxu0 %v2068
        %v2070 = vand.u32 %v419, 4294901760
        %v2071 = vsub.f32 %v419, %v2070
        %v2072 = vand.u32 %v2071, 4294901760
        %v2073 = vsub.f32 %v2071, %v2072
        %v2074 = vand.u32 %v2073, 4294901760
        %2075 = vmatpush.msra.mxu0 %v2074
        %v2076 = vand.u32 %v413, 4294901760
        %v2077 = vsub.f32 %v413, %v2076
        %v2078 = vand.u32 %v2077, 4294901760
        %v2079 = vsub.f32 %v2077, %v2078
        %v2080 = vand.u32 %v2079, 4294901760
        %2081 = vmatpush.msra.mxu0 %v2080
        %v2082 = vand.u32 %v407, 4294901760
        %v2083 = vsub.f32 %v407, %v2082
        %v2084 = vand.u32 %v2083, 4294901760
        %v2085 = vsub.f32 %v2083, %v2084
        %v2086 = vand.u32 %v2085, 4294901760
        %2087 = vmatpush.msra.mxu0 %v2086
        %v2088 = vand.u32 %v401, 4294901760
        %v2089 = vsub.f32 %v401, %v2088
        %v2090 = vand.u32 %v2089, 4294901760
        %v2091 = vsub.f32 %v2089, %v2090
        %v2092 = vand.u32 %v2091, 4294901760
        %2093 = vmatpush.msra.mxu0 %v2092
        %v2094 = vand.u32 %v395, 4294901760
        %v2095 = vsub.f32 %v395, %v2094
        %v2096 = vand.u32 %v2095, 4294901760
        %v2097 = vsub.f32 %v2095, %v2096
        %v2098 = vand.u32 %v2097, 4294901760
        %2099 = vmatpush.msra.mxu0 %v2098
        %v2100 = vand.u32 %v389, 4294901760
        %2101 = vmatmul.f32.gmra.mxu0 %v2100
        %v2102 = vpop.f32.mrf.mxu0
        %v2103 = vadd.f32 %v2002, %v2102
        %2104 = vdwg.mxu0
        %v2105 = vand.u32 %v485, 4294901760
        %v2106 = vsub.f32 %v485, %v2105
        %2107 = vmatpush.msra.mxu0 %v2106
        %v2108 = vand.u32 %v479, 4294901760
        %v2109 = vsub.f32 %v479, %v2108
        %2110 = vmatpush.msra.mxu0 %v2109
        %v2111 = vand.u32 %v473, 4294901760
        %v2112 = vsub.f32 %v473, %v2111
        %2113 = vmatpush.msra.mxu0 %v2112
        %v2114 = vand.u32 %v467, 4294901760
        %v2115 = vsub.f32 %v467, %v2114
        %2116 = vmatpush.msra.mxu0 %v2115
        %v2117 = vand.u32 %v461, 4294901760
        %v2118 = vsub.f32 %v461, %v2117
        %2119 = vmatpush.msra.mxu0 %v2118
        %v2120 = vand.u32 %v455, 4294901760
        %v2121 = vsub.f32 %v455, %v2120
        %2122 = vmatpush.msra.mxu0 %v2121
        %v2123 = vand.u32 %v449, 4294901760
        %v2124 = vsub.f32 %v449, %v2123
        %2125 = vmatpush.msra.mxu0 %v2124
        %v2126 = vand.u32 %v443, 4294901760
        %v2127 = vsub.f32 %v443, %v2126
        %2128 = vmatpush.msra.mxu0 %v2127
        %v2129 = vand.u32 %v437, 4294901760
        %v2130 = vsub.f32 %v437, %v2129
        %2131 = vmatpush.msra.mxu0 %v2130
        %v2132 = vand.u32 %v431, 4294901760
        %v2133 = vsub.f32 %v431, %v2132
        %2134 = vmatpush.msra.mxu0 %v2133
        %v2135 = vand.u32 %v425, 4294901760
        %v2136 = vsub.f32 %v425, %v2135
        %2137 = vmatpush.msra.mxu0 %v2136
        %v2138 = vand.u32 %v419, 4294901760
        %v2139 = vsub.f32 %v419, %v2138
        %2140 = vmatpush.msra.mxu0 %v2139
        %v2141 = vand.u32 %v413, 4294901760
        %v2142 = vsub.f32 %v413, %v2141
        %2143 = vmatpush.msra.mxu0 %v2142
        %v2144 = vand.u32 %v407, 4294901760
        %v2145 = vsub.f32 %v407, %v2144
        %2146 = vmatpush.msra.mxu0 %v2145
        %v2147 = vand.u32 %v401, 4294901760
        %v2148 = vsub.f32 %v401, %v2147
        %2149 = vmatpush.msra.mxu0 %v2148
        %v2150 = vand.u32 %v395, 4294901760
        %v2151 = vsub.f32 %v395, %v2150
        %2152 = vmatpush.msra.mxu0 %v2151
        %v2153 = vand.u32 %v389, 4294901760
        %v2154 = vsub.f32 %v389, %v2153
        %2155 = vmatmul.f32.gmra.mxu0 %v2154
        %v2156 = vpop.f32.mrf.mxu0
        %v2157 = vadd.f32 %v2103, %v2156
        %2158 = vdwg.mxu0
        %v2159 = vand.u32 %v485, 4294901760
        %2160 = vmatpush.msra.mxu0 %v2159
        %v2161 = vand.u32 %v479, 4294901760
        %2162 = vmatpush.msra.mxu0 %v2161
        %v2163 = vand.u32 %v473, 4294901760
        %2164 = vmatpush.msra.mxu0 %v2163
        %v2165 = vand.u32 %v467, 4294901760
        %2166 = vmatpush.msra.mxu0 %v2165
        %v2167 = vand.u32 %v461, 4294901760
        %2168 = vmatpush.msra.mxu0 %v2167
        %v2169 = vand.u32 %v455, 4294901760
        %2170 = vmatpush.msra.mxu0 %v2169
        %v2171 = vand.u32 %v449, 4294901760
        %2172 = vmatpush.msra.mxu0 %v2171
        %v2173 = vand.u32 %v443, 4294901760
        %2174 = vmatpush.msra.mxu0 %v2173
        %v2175 = vand.u32 %v437, 4294901760
        %2176 = vmatpush.msra.mxu0 %v2175
        %v2177 = vand.u32 %v431, 4294901760
        %2178 = vmatpush.msra.mxu0 %v2177
        %v2179 = vand.u32 %v425, 4294901760
        %2180 = vmatpush.msra.mxu0 %v2179
        %v2181 = vand.u32 %v419, 4294901760
        %2182 = vmatpush.msra.mxu0 %v2181
        %v2183 = vand.u32 %v413, 4294901760
        %2184 = vmatpush.msra.mxu0 %v2183
        %v2185 = vand.u32 %v407, 4294901760
        %2186 = vmatpush.msra.mxu0 %v2185
        %v2187 = vand.u32 %v401, 4294901760
        %2188 = vmatpush.msra.mxu0 %v2187
        %v2189 = vand.u32 %v395, 4294901760
        %2190 = vmatpush.msra.mxu0 %v2189
        %v2191 = vand.u32 %v389, 4294901760
        %v2192 = vsub.f32 %v389, %v2191
        %v2193 = vand.u32 %v2192, 4294901760
        %2194 = vmatmul.f32.gmra.mxu0 %v2193
        %v2195 = vpop.f32.mrf.mxu0
        %v2196 = vadd.f32 %v2157, %v2195
        %2197 = vdwg.mxu0
        %v2198 = vand.u32 %v485, 4294901760
        %v2199 = vsub.f32 %v485, %v2198
        %v2200 = vand.u32 %v2199, 4294901760
        %2201 = vmatpush.msra.mxu0 %v2200
        %v2202 = vand.u32 %v479, 4294901760
        %v2203 = vsub.f32 %v479, %v2202
        %v2204 = vand.u32 %v2203, 4294901760
        %2205 = vmatpush.msra.mxu0 %v2204
        %v2206 = vand.u32 %v473, 4294901760
        %v2207 = vsub.f32 %v473, %v2206
        %v2208 = vand.u32 %v2207, 4294901760
        %2209 = vmatpush.msra.mxu0 %v2208
        %v2210 = vand.u32 %v467, 4294901760
        %v2211 = vsub.f32 %v467, %v2210
        %v2212 = vand.u32 %v2211, 4294901760
        %2213 = vmatpush.msra.mxu0 %v2212
        %v2214 = vand.u32 %v461, 4294901760
        %v2215 = vsub.f32 %v461, %v2214
        %v2216 = vand.u32 %v2215, 4294901760
        %2217 = vmatpush.msra.mxu0 %v2216
        %v2218 = vand.u32 %v455, 4294901760
        %v2219 = vsub.f32 %v455, %v2218
        %v2220 = vand.u32 %v2219, 4294901760
        %2221 = vmatpush.msra.mxu0 %v2220
        %v2222 = vand.u32 %v449, 4294901760
        %v2223 = vsub.f32 %v449, %v2222
        %v2224 = vand.u32 %v2223, 4294901760
        %2225 = vmatpush.msra.mxu0 %v2224
        %v2226 = vand.u32 %v443, 4294901760
        %v2227 = vsub.f32 %v443, %v2226
        %v2228 = vand.u32 %v2227, 4294901760
        %2229 = vmatpush.msra.mxu0 %v2228
        %v2230 = vand.u32 %v437, 4294901760
        %v2231 = vsub.f32 %v437, %v2230
        %v2232 = vand.u32 %v2231, 4294901760
        %2233 = vmatpush.msra.mxu0 %v2232
        %v2234 = vand.u32 %v431, 4294901760
        %v2235 = vsub.f32 %v431, %v2234
        %v2236 = vand.u32 %v2235, 4294901760
        %2237 = vmatpush.msra.mxu0 %v2236
        %v2238 = vand.u32 %v425, 4294901760
        %v2239 = vsub.f32 %v425, %v2238
        %v2240 = vand.u32 %v2239, 4294901760
        %2241 = vmatpush.msra.mxu0 %v2240
        %v2242 = vand.u32 %v419, 4294901760
        %v2243 = vsub.f32 %v419, %v2242
        %v2244 = vand.u32 %v2243, 4294901760
        %2245 = vmatpush.msra.mxu0 %v2244
        %v2246 = vand.u32 %v413, 4294901760
        %v2247 = vsub.f32 %v413, %v2246
        %v2248 = vand.u32 %v2247, 4294901760
        %2249 = vmatpush.msra.mxu0 %v2248
        %v2250 = vand.u32 %v407, 4294901760
        %v2251 = vsub.f32 %v407, %v2250
        %v2252 = vand.u32 %v2251, 4294901760
        %2253 = vmatpush.msra.mxu0 %v2252
        %v2254 = vand.u32 %v401, 4294901760
        %v2255 = vsub.f32 %v401, %v2254
        %v2256 = vand.u32 %v2255, 4294901760
        %2257 = vmatpush.msra.mxu0 %v2256
        %v2258 = vand.u32 %v395, 4294901760
        %v2259 = vsub.f32 %v395, %v2258
        %v2260 = vand.u32 %v2259, 4294901760
        %2261 = vmatpush.msra.mxu0 %v2260
        %v2262 = vand.u32 %v389, 4294901760
        %2263 = vmatmul.f32.gmra.mxu0 %v2262
        %v2264 = vpop.f32.mrf.mxu0
        %v2265 = vadd.f32 %v2196, %v2264
        %2266 = vdwg.mxu0
        %v2267 = vand.u32 %v485, 4294901760
        %2268 = vmatpush.msra.mxu0 %v2267
        %v2269 = vand.u32 %v479, 4294901760
        %2270 = vmatpush.msra.mxu0 %v2269
        %v2271 = vand.u32 %v473, 4294901760
        %2272 = vmatpush.msra.mxu0 %v2271
        %v2273 = vand.u32 %v467, 4294901760
        %2274 = vmatpush.msra.mxu0 %v2273
        %v2275 = vand.u32 %v461, 4294901760
        %2276 = vmatpush.msra.mxu0 %v2275
        %v2277 = vand.u32 %v455, 4294901760
        %2278 = vmatpush.msra.mxu0 %v2277
        %v2279 = vand.u32 %v449, 4294901760
        %2280 = vmatpush.msra.mxu0 %v2279
        %v2281 = vand.u32 %v443, 4294901760
        %2282 = vmatpush.msra.mxu0 %v2281
        %v2283 = vand.u32 %v437, 4294901760
        %2284 = vmatpush.msra.mxu0 %v2283
        %v2285 = vand.u32 %v431, 4294901760
        %2286 = vmatpush.msra.mxu0 %v2285
        %v2287 = vand.u32 %v425, 4294901760
        %2288 = vmatpush.msra.mxu0 %v2287
        %v2289 = vand.u32 %v419, 4294901760
        %2290 = vmatpush.msra.mxu0 %v2289
        %v2291 = vand.u32 %v413, 4294901760
        %2292 = vmatpush.msra.mxu0 %v2291
        %v2293 = vand.u32 %v407, 4294901760
        %2294 = vmatpush.msra.mxu0 %v2293
        %v2295 = vand.u32 %v401, 4294901760
        %2296 = vmatpush.msra.mxu0 %v2295
        %v2297 = vand.u32 %v395, 4294901760
        %2298 = vmatpush.msra.mxu0 %v2297
        %v2299 = vand.u32 %v389, 4294901760
        %2300 = vmatmul.f32.gmra.mxu0 %v2299
        %v2301 = vpop.f32.mrf.mxu0
        %v2302 = vadd.f32 %v2265, %v2301
        %2303 = vdwg.mxu0
        %v2304 = vand.u32 %v581, 4294901760
        %2305 = vmatpush.msra.mxu0 %v2304
        %v2306 = vand.u32 %v575, 4294901760
        %2307 = vmatpush.msra.mxu0 %v2306
        %v2308 = vand.u32 %v569, 4294901760
        %2309 = vmatpush.msra.mxu0 %v2308
        %v2310 = vand.u32 %v563, 4294901760
        %2311 = vmatpush.msra.mxu0 %v2310
        %v2312 = vand.u32 %v557, 4294901760
        %2313 = vmatpush.msra.mxu0 %v2312
        %v2314 = vand.u32 %v551, 4294901760
        %2315 = vmatpush.msra.mxu0 %v2314
        %v2316 = vand.u32 %v545, 4294901760
        %2317 = vmatpush.msra.mxu0 %v2316
        %v2318 = vand.u32 %v539, 4294901760
        %2319 = vmatpush.msra.mxu0 %v2318
        %v2320 = vand.u32 %v533, 4294901760
        %2321 = vmatpush.msra.mxu0 %v2320
        %v2322 = vand.u32 %v527, 4294901760
        %2323 = vmatpush.msra.mxu0 %v2322
        %v2324 = vand.u32 %v521, 4294901760
        %2325 = vmatpush.msra.mxu0 %v2324
        %v2326 = vand.u32 %v515, 4294901760
        %2327 = vmatpush.msra.mxu0 %v2326
        %v2328 = vand.u32 %v509, 4294901760
        %2329 = vmatpush.msra.mxu0 %v2328
        %v2330 = vand.u32 %v503, 4294901760
        %2331 = vmatpush.msra.mxu0 %v2330
        %v2332 = vand.u32 %v497, 4294901760
        %2333 = vmatpush.msra.mxu0 %v2332
        %v2334 = vand.u32 %v491, 4294901760
        %2335 = vmatpush.msra.mxu0 %v2334
        %v2336 = vand.u32 %v390, 4294901760
        %v2337 = vsub.f32 %v390, %v2336
        %v2338 = vand.u32 %v2337, 4294901760
        %v2339 = vsub.f32 %v2337, %v2338
        %v2340 = vand.u32 %v2339, 4294901760
        %2341 = vmatmul.f32.gmra.mxu0 %v2340
        %v2342 = vpop.f32.mrf.mxu0
        %v2343 = vadd.f32 %v2302, %v2342
        %2344 = vdwg.mxu0
        %v2345 = vand.u32 %v581, 4294901760
        %v2346 = vsub.f32 %v581, %v2345
        %v2347 = vand.u32 %v2346, 4294901760
        %v2348 = vsub.f32 %v2346, %v2347
        %v2349 = vand.u32 %v2348, 4294901760
        %2350 = vmatpush.msra.mxu0 %v2349
        %v2351 = vand.u32 %v575, 4294901760
        %v2352 = vsub.f32 %v575, %v2351
        %v2353 = vand.u32 %v2352, 4294901760
        %v2354 = vsub.f32 %v2352, %v2353
        %v2355 = vand.u32 %v2354, 4294901760
        %2356 = vmatpush.msra.mxu0 %v2355
        %v2357 = vand.u32 %v569, 4294901760
        %v2358 = vsub.f32 %v569, %v2357
        %v2359 = vand.u32 %v2358, 4294901760
        %v2360 = vsub.f32 %v2358, %v2359
        %v2361 = vand.u32 %v2360, 4294901760
        %2362 = vmatpush.msra.mxu0 %v2361
        %v2363 = vand.u32 %v563, 4294901760
        %v2364 = vsub.f32 %v563, %v2363
        %v2365 = vand.u32 %v2364, 4294901760
        %v2366 = vsub.f32 %v2364, %v2365
        %v2367 = vand.u32 %v2366, 4294901760
        %2368 = vmatpush.msra.mxu0 %v2367
        %v2369 = vand.u32 %v557, 4294901760
        %v2370 = vsub.f32 %v557, %v2369
        %v2371 = vand.u32 %v2370, 4294901760
        %v2372 = vsub.f32 %v2370, %v2371
        %v2373 = vand.u32 %v2372, 4294901760
        %2374 = vmatpush.msra.mxu0 %v2373
        %v2375 = vand.u32 %v551, 4294901760
        %v2376 = vsub.f32 %v551, %v2375
        %v2377 = vand.u32 %v2376, 4294901760
        %v2378 = vsub.f32 %v2376, %v2377
        %v2379 = vand.u32 %v2378, 4294901760
        %2380 = vmatpush.msra.mxu0 %v2379
        %v2381 = vand.u32 %v545, 4294901760
        %v2382 = vsub.f32 %v545, %v2381
        %v2383 = vand.u32 %v2382, 4294901760
        %v2384 = vsub.f32 %v2382, %v2383
        %v2385 = vand.u32 %v2384, 4294901760
        %2386 = vmatpush.msra.mxu0 %v2385
        %v2387 = vand.u32 %v539, 4294901760
        %v2388 = vsub.f32 %v539, %v2387
        %v2389 = vand.u32 %v2388, 4294901760
        %v2390 = vsub.f32 %v2388, %v2389
        %v2391 = vand.u32 %v2390, 4294901760
        %2392 = vmatpush.msra.mxu0 %v2391
        %v2393 = vand.u32 %v533, 4294901760
        %v2394 = vsub.f32 %v533, %v2393
        %v2395 = vand.u32 %v2394, 4294901760
        %v2396 = vsub.f32 %v2394, %v2395
        %v2397 = vand.u32 %v2396, 4294901760
        %2398 = vmatpush.msra.mxu0 %v2397
        %v2399 = vand.u32 %v527, 4294901760
        %v2400 = vsub.f32 %v527, %v2399
        %v2401 = vand.u32 %v2400, 4294901760
        %v2402 = vsub.f32 %v2400, %v2401
        %v2403 = vand.u32 %v2402, 4294901760
        %2404 = vmatpush.msra.mxu0 %v2403
        %v2405 = vand.u32 %v521, 4294901760
        %v2406 = vsub.f32 %v521, %v2405
        %v2407 = vand.u32 %v2406, 4294901760
        %v2408 = vsub.f32 %v2406, %v2407
        %v2409 = vand.u32 %v2408, 4294901760
        %2410 = vmatpush.msra.mxu0 %v2409
        %v2411 = vand.u32 %v515, 4294901760
        %v2412 = vsub.f32 %v515, %v2411
        %v2413 = vand.u32 %v2412, 4294901760
        %v2414 = vsub.f32 %v2412, %v2413
        %v2415 = vand.u32 %v2414, 4294901760
        %2416 = vmatpush.msra.mxu0 %v2415
        %v2417 = vand.u32 %v509, 4294901760
        %v2418 = vsub.f32 %v509, %v2417
        %v2419 = vand.u32 %v2418, 4294901760
        %v2420 = vsub.f32 %v2418, %v2419
        %v2421 = vand.u32 %v2420, 4294901760
        %2422 = vmatpush.msra.mxu0 %v2421
        %v2423 = vand.u32 %v503, 4294901760
        %v2424 = vsub.f32 %v503, %v2423
        %v2425 = vand.u32 %v2424, 4294901760
        %v2426 = vsub.f32 %v2424, %v2425
        %v2427 = vand.u32 %v2426, 4294901760
        %2428 = vmatpush.msra.mxu0 %v2427
        %v2429 = vand.u32 %v497, 4294901760
        %v2430 = vsub.f32 %v497, %v2429
        %v2431 = vand.u32 %v2430, 4294901760
        %v2432 = vsub.f32 %v2430, %v2431
        %v2433 = vand.u32 %v2432, 4294901760
        %2434 = vmatpush.msra.mxu0 %v2433
        %v2435 = vand.u32 %v491, 4294901760
        %v2436 = vsub.f32 %v491, %v2435
        %v2437 = vand.u32 %v2436, 4294901760
        %v2438 = vsub.f32 %v2436, %v2437
        %v2439 = vand.u32 %v2438, 4294901760
        %2440 = vmatpush.msra.mxu0 %v2439
        %v2441 = vand.u32 %v390, 4294901760
        %2442 = vmatmul.f32.gmra.mxu0 %v2441
        %v2443 = vpop.f32.mrf.mxu0
        %v2444 = vadd.f32 %v2343, %v2443
        %2445 = vdwg.mxu0
        %v2446 = vand.u32 %v581, 4294901760
        %v2447 = vsub.f32 %v581, %v2446
        %2448 = vmatpush.msra.mxu0 %v2447
        %v2449 = vand.u32 %v575, 4294901760
        %v2450 = vsub.f32 %v575, %v2449
        %2451 = vmatpush.msra.mxu0 %v2450
        %v2452 = vand.u32 %v569, 4294901760
        %v2453 = vsub.f32 %v569, %v2452
        %2454 = vmatpush.msra.mxu0 %v2453
        %v2455 = vand.u32 %v563, 4294901760
        %v2456 = vsub.f32 %v563, %v2455
        %2457 = vmatpush.msra.mxu0 %v2456
        %v2458 = vand.u32 %v557, 4294901760
        %v2459 = vsub.f32 %v557, %v2458
        %2460 = vmatpush.msra.mxu0 %v2459
        %v2461 = vand.u32 %v551, 4294901760
        %v2462 = vsub.f32 %v551, %v2461
        %2463 = vmatpush.msra.mxu0 %v2462
        %v2464 = vand.u32 %v545, 4294901760
        %v2465 = vsub.f32 %v545, %v2464
        %2466 = vmatpush.msra.mxu0 %v2465
        %v2467 = vand.u32 %v539, 4294901760
        %v2468 = vsub.f32 %v539, %v2467
        %2469 = vmatpush.msra.mxu0 %v2468
        %v2470 = vand.u32 %v533, 4294901760
        %v2471 = vsub.f32 %v533, %v2470
        %2472 = vmatpush.msra.mxu0 %v2471
        %v2473 = vand.u32 %v527, 4294901760
        %v2474 = vsub.f32 %v527, %v2473
        %2475 = vmatpush.msra.mxu0 %v2474
        %v2476 = vand.u32 %v521, 4294901760
        %v2477 = vsub.f32 %v521, %v2476
        %2478 = vmatpush.msra.mxu0 %v2477
        %v2479 = vand.u32 %v515, 4294901760
        %v2480 = vsub.f32 %v515, %v2479
        %2481 = vmatpush.msra.mxu0 %v2480
        %v2482 = vand.u32 %v509, 4294901760
        %v2483 = vsub.f32 %v509, %v2482
        %2484 = vmatpush.msra.mxu0 %v2483
        %v2485 = vand.u32 %v503, 4294901760
        %v2486 = vsub.f32 %v503, %v2485
        %2487 = vmatpush.msra.mxu0 %v2486
        %v2488 = vand.u32 %v497, 4294901760
        %v2489 = vsub.f32 %v497, %v2488
        %2490 = vmatpush.msra.mxu0 %v2489
        %v2491 = vand.u32 %v491, 4294901760
        %v2492 = vsub.f32 %v491, %v2491
        %2493 = vmatpush.msra.mxu0 %v2492
        %v2494 = vand.u32 %v390, 4294901760
        %v2495 = vsub.f32 %v390, %v2494
        %2496 = vmatmul.f32.gmra.mxu0 %v2495
        %v2497 = vpop.f32.mrf.mxu0
        %v2498 = vadd.f32 %v2444, %v2497
        %2499 = vdwg.mxu0
        %v2500 = vand.u32 %v581, 4294901760
        %2501 = vmatpush.msra.mxu0 %v2500
        %v2502 = vand.u32 %v575, 4294901760
        %2503 = vmatpush.msra.mxu0 %v2502
        %v2504 = vand.u32 %v569, 4294901760
        %2505 = vmatpush.msra.mxu0 %v2504
        %v2506 = vand.u32 %v563, 4294901760
        %2507 = vmatpush.msra.mxu0 %v2506
        %v2508 = vand.u32 %v557, 4294901760
        %2509 = vmatpush.msra.mxu0 %v2508
        %v2510 = vand.u32 %v551, 4294901760
        %2511 = vmatpush.msra.mxu0 %v2510
        %v2512 = vand.u32 %v545, 4294901760
        %2513 = vmatpush.msra.mxu0 %v2512
        %v2514 = vand.u32 %v539, 4294901760
        %2515 = vmatpush.msra.mxu0 %v2514
        %v2516 = vand.u32 %v533, 4294901760
        %2517 = vmatpush.msra.mxu0 %v2516
        %v2518 = vand.u32 %v527, 4294901760
        %2519 = vmatpush.msra.mxu0 %v2518
        %v2520 = vand.u32 %v521, 4294901760
        %2521 = vmatpush.msra.mxu0 %v2520
        %v2522 = vand.u32 %v515, 4294901760
        %2523 = vmatpush.msra.mxu0 %v2522
        %v2524 = vand.u32 %v509, 4294901760
        %2525 = vmatpush.msra.mxu0 %v2524
        %v2526 = vand.u32 %v503, 4294901760
        %2527 = vmatpush.msra.mxu0 %v2526
        %v2528 = vand.u32 %v497, 4294901760
        %2529 = vmatpush.msra.mxu0 %v2528
        %v2530 = vand.u32 %v491, 4294901760
        %2531 = vmatpush.msra.mxu0 %v2530
        %v2532 = vand.u32 %v390, 4294901760
        %v2533 = vsub.f32 %v390, %v2532
        %v2534 = vand.u32 %v2533, 4294901760
        %2535 = vmatmul.f32.gmra.mxu0 %v2534
        %v2536 = vpop.f32.mrf.mxu0
        %v2537 = vadd.f32 %v2498, %v2536
        %2538 = vdwg.mxu0
        %v2539 = vand.u32 %v581, 4294901760
        %v2540 = vsub.f32 %v581, %v2539
        %v2541 = vand.u32 %v2540, 4294901760
        %2542 = vmatpush.msra.mxu0 %v2541
        %v2543 = vand.u32 %v575, 4294901760
        %v2544 = vsub.f32 %v575, %v2543
        %v2545 = vand.u32 %v2544, 4294901760
        %2546 = vmatpush.msra.mxu0 %v2545
        %v2547 = vand.u32 %v569, 4294901760
        %v2548 = vsub.f32 %v569, %v2547
        %v2549 = vand.u32 %v2548, 4294901760
        %2550 = vmatpush.msra.mxu0 %v2549
        %v2551 = vand.u32 %v563, 4294901760
        %v2552 = vsub.f32 %v563, %v2551
        %v2553 = vand.u32 %v2552, 4294901760
        %2554 = vmatpush.msra.mxu0 %v2553
        %v2555 = vand.u32 %v557, 4294901760
        %v2556 = vsub.f32 %v557, %v2555
        %v2557 = vand.u32 %v2556, 4294901760
        %2558 = vmatpush.msra.mxu0 %v2557
        %v2559 = vand.u32 %v551, 4294901760
        %v2560 = vsub.f32 %v551, %v2559
        %v2561 = vand.u32 %v2560, 4294901760
        %2562 = vmatpush.msra.mxu0 %v2561
        %v2563 = vand.u32 %v545, 4294901760
        %v2564 = vsub.f32 %v545, %v2563
        %v2565 = vand.u32 %v2564, 4294901760
        %2566 = vmatpush.msra.mxu0 %v2565
        %v2567 = vand.u32 %v539, 4294901760
        %v2568 = vsub.f32 %v539, %v2567
        %v2569 = vand.u32 %v2568, 4294901760
        %2570 = vmatpush.msra.mxu0 %v2569
        %v2571 = vand.u32 %v533, 4294901760
        %v2572 = vsub.f32 %v533, %v2571
        %v2573 = vand.u32 %v2572, 4294901760
        %2574 = vmatpush.msra.mxu0 %v2573
        %v2575 = vand.u32 %v527, 4294901760
        %v2576 = vsub.f32 %v527, %v2575
        %v2577 = vand.u32 %v2576, 4294901760
        %2578 = vmatpush.msra.mxu0 %v2577
        %v2579 = vand.u32 %v521, 4294901760
        %v2580 = vsub.f32 %v521, %v2579
        %v2581 = vand.u32 %v2580, 4294901760
        %2582 = vmatpush.msra.mxu0 %v2581
        %v2583 = vand.u32 %v515, 4294901760
        %v2584 = vsub.f32 %v515, %v2583
        %v2585 = vand.u32 %v2584, 4294901760
        %2586 = vmatpush.msra.mxu0 %v2585
        %v2587 = vand.u32 %v509, 4294901760
        %v2588 = vsub.f32 %v509, %v2587
        %v2589 = vand.u32 %v2588, 4294901760
        %2590 = vmatpush.msra.mxu0 %v2589
        %v2591 = vand.u32 %v503, 4294901760
        %v2592 = vsub.f32 %v503, %v2591
        %v2593 = vand.u32 %v2592, 4294901760
        %2594 = vmatpush.msra.mxu0 %v2593
        %v2595 = vand.u32 %v497, 4294901760
        %v2596 = vsub.f32 %v497, %v2595
        %v2597 = vand.u32 %v2596, 4294901760
        %2598 = vmatpush.msra.mxu0 %v2597
        %v2599 = vand.u32 %v491, 4294901760
        %v2600 = vsub.f32 %v491, %v2599
        %v2601 = vand.u32 %v2600, 4294901760
        %2602 = vmatpush.msra.mxu0 %v2601
        %v2603 = vand.u32 %v390, 4294901760
        %2604 = vmatmul.f32.gmra.mxu0 %v2603
        %v2605 = vpop.f32.mrf.mxu0
        %v2606 = vadd.f32 %v2537, %v2605
        %2607 = vdwg.mxu0
        %v2608 = vand.u32 %v581, 4294901760
        %2609 = vmatpush.msra.mxu0 %v2608
        %v2610 = vand.u32 %v575, 4294901760
        %2611 = vmatpush.msra.mxu0 %v2610
        %v2612 = vand.u32 %v569, 4294901760
        %2613 = vmatpush.msra.mxu0 %v2612
        %v2614 = vand.u32 %v563, 4294901760
        %2615 = vmatpush.msra.mxu0 %v2614
        %v2616 = vand.u32 %v557, 4294901760
        %2617 = vmatpush.msra.mxu0 %v2616
        %v2618 = vand.u32 %v551, 4294901760
        %2619 = vmatpush.msra.mxu0 %v2618
        %v2620 = vand.u32 %v545, 4294901760
        %2621 = vmatpush.msra.mxu0 %v2620
        %v2622 = vand.u32 %v539, 4294901760
        %2623 = vmatpush.msra.mxu0 %v2622
        %v2624 = vand.u32 %v533, 4294901760
        %2625 = vmatpush.msra.mxu0 %v2624
        %v2626 = vand.u32 %v527, 4294901760
        %2627 = vmatpush.msra.mxu0 %v2626
        %v2628 = vand.u32 %v521, 4294901760
        %2629 = vmatpush.msra.mxu0 %v2628
        %v2630 = vand.u32 %v515, 4294901760
        %2631 = vmatpush.msra.mxu0 %v2630
        %v2632 = vand.u32 %v509, 4294901760
        %2633 = vmatpush.msra.mxu0 %v2632
        %v2634 = vand.u32 %v503, 4294901760
        %2635 = vmatpush.msra.mxu0 %v2634
        %v2636 = vand.u32 %v497, 4294901760
        %2637 = vmatpush.msra.mxu0 %v2636
        %v2638 = vand.u32 %v491, 4294901760
        %2639 = vmatpush.msra.mxu0 %v2638
        %v2640 = vand.u32 %v390, 4294901760
        %2641 = vmatmul.f32.gmra.mxu0 %v2640
        %v2642 = vpop.f32.mrf.mxu0
        %v2643 = vadd.f32 %v2606, %v2642
        %2644 = vdwg.mxu0
        %v2645 = vand.u32 %v486, 4294901760
        %2646 = vmatpush.msra.mxu0 %v2645
        %v2647 = vand.u32 %v480, 4294901760
        %2648 = vmatpush.msra.mxu0 %v2647
        %v2649 = vand.u32 %v474, 4294901760
        %2650 = vmatpush.msra.mxu0 %v2649
        %v2651 = vand.u32 %v468, 4294901760
        %2652 = vmatpush.msra.mxu0 %v2651
        %v2653 = vand.u32 %v462, 4294901760
        %2654 = vmatpush.msra.mxu0 %v2653
        %v2655 = vand.u32 %v456, 4294901760
        %2656 = vmatpush.msra.mxu0 %v2655
        %v2657 = vand.u32 %v450, 4294901760
        %2658 = vmatpush.msra.mxu0 %v2657
        %v2659 = vand.u32 %v444, 4294901760
        %2660 = vmatpush.msra.mxu0 %v2659
        %v2661 = vand.u32 %v438, 4294901760
        %2662 = vmatpush.msra.mxu0 %v2661
        %v2663 = vand.u32 %v432, 4294901760
        %2664 = vmatpush.msra.mxu0 %v2663
        %v2665 = vand.u32 %v426, 4294901760
        %2666 = vmatpush.msra.mxu0 %v2665
        %v2667 = vand.u32 %v420, 4294901760
        %2668 = vmatpush.msra.mxu0 %v2667
        %v2669 = vand.u32 %v414, 4294901760
        %2670 = vmatpush.msra.mxu0 %v2669
        %v2671 = vand.u32 %v408, 4294901760
        %2672 = vmatpush.msra.mxu0 %v2671
        %v2673 = vand.u32 %v402, 4294901760
        %2674 = vmatpush.msra.mxu0 %v2673
        %v2675 = vand.u32 %v396, 4294901760
        %2676 = vmatpush.msra.mxu0 %v2675
        %v2677 = vand.u32 %v389, 4294901760
        %v2678 = vsub.f32 %v389, %v2677
        %v2679 = vand.u32 %v2678, 4294901760
        %v2680 = vsub.f32 %v2678, %v2679
        %v2681 = vand.u32 %v2680, 4294901760
        %2682 = vmatmul.f32.gmra.mxu0 %v2681
        %v2683 = vpop.f32.mrf.mxu0
        %v2684 = vadd.f32 %v590, %v2683
        %2685 = vdwg.mxu0
        %v2686 = vand.u32 %v486, 4294901760
        %v2687 = vsub.f32 %v486, %v2686
        %v2688 = vand.u32 %v2687, 4294901760
        %v2689 = vsub.f32 %v2687, %v2688
        %v2690 = vand.u32 %v2689, 4294901760
        %2691 = vmatpush.msra.mxu0 %v2690
        %v2692 = vand.u32 %v480, 4294901760
        %v2693 = vsub.f32 %v480, %v2692
        %v2694 = vand.u32 %v2693, 4294901760
        %v2695 = vsub.f32 %v2693, %v2694
        %v2696 = vand.u32 %v2695, 4294901760
        %2697 = vmatpush.msra.mxu0 %v2696
        %v2698 = vand.u32 %v474, 4294901760
        %v2699 = vsub.f32 %v474, %v2698
        %v2700 = vand.u32 %v2699, 4294901760
        %v2701 = vsub.f32 %v2699, %v2700
        %v2702 = vand.u32 %v2701, 4294901760
        %2703 = vmatpush.msra.mxu0 %v2702
        %v2704 = vand.u32 %v468, 4294901760
        %v2705 = vsub.f32 %v468, %v2704
        %v2706 = vand.u32 %v2705, 4294901760
        %v2707 = vsub.f32 %v2705, %v2706
        %v2708 = vand.u32 %v2707, 4294901760
        %2709 = vmatpush.msra.mxu0 %v2708
        %v2710 = vand.u32 %v462, 4294901760
        %v2711 = vsub.f32 %v462, %v2710
        %v2712 = vand.u32 %v2711, 4294901760
        %v2713 = vsub.f32 %v2711, %v2712
        %v2714 = vand.u32 %v2713, 4294901760
        %2715 = vmatpush.msra.mxu0 %v2714
        %v2716 = vand.u32 %v456, 4294901760
        %v2717 = vsub.f32 %v456, %v2716
        %v2718 = vand.u32 %v2717, 4294901760
        %v2719 = vsub.f32 %v2717, %v2718
        %v2720 = vand.u32 %v2719, 4294901760
        %2721 = vmatpush.msra.mxu0 %v2720
        %v2722 = vand.u32 %v450, 4294901760
        %v2723 = vsub.f32 %v450, %v2722
        %v2724 = vand.u32 %v2723, 4294901760
        %v2725 = vsub.f32 %v2723, %v2724
        %v2726 = vand.u32 %v2725, 4294901760
        %2727 = vmatpush.msra.mxu0 %v2726
        %v2728 = vand.u32 %v444, 4294901760
        %v2729 = vsub.f32 %v444, %v2728
        %v2730 = vand.u32 %v2729, 4294901760
        %v2731 = vsub.f32 %v2729, %v2730
        %v2732 = vand.u32 %v2731, 4294901760
        %2733 = vmatpush.msra.mxu0 %v2732
        %v2734 = vand.u32 %v438, 4294901760
        %v2735 = vsub.f32 %v438, %v2734
        %v2736 = vand.u32 %v2735, 4294901760
        %v2737 = vsub.f32 %v2735, %v2736
        %v2738 = vand.u32 %v2737, 4294901760
        %2739 = vmatpush.msra.mxu0 %v2738
        %v2740 = vand.u32 %v432, 4294901760
        %v2741 = vsub.f32 %v432, %v2740
        %v2742 = vand.u32 %v2741, 4294901760
        %v2743 = vsub.f32 %v2741, %v2742
        %v2744 = vand.u32 %v2743, 4294901760
        %2745 = vmatpush.msra.mxu0 %v2744
        %v2746 = vand.u32 %v426, 4294901760
        %v2747 = vsub.f32 %v426, %v2746
        %v2748 = vand.u32 %v2747, 4294901760
        %v2749 = vsub.f32 %v2747, %v2748
        %v2750 = vand.u32 %v2749, 4294901760
        %2751 = vmatpush.msra.mxu0 %v2750
        %v2752 = vand.u32 %v420, 4294901760
        %v2753 = vsub.f32 %v420, %v2752
        %v2754 = vand.u32 %v2753, 4294901760
        %v2755 = vsub.f32 %v2753, %v2754
        %v2756 = vand.u32 %v2755, 4294901760
        %2757 = vmatpush.msra.mxu0 %v2756
        %v2758 = vand.u32 %v414, 4294901760
        %v2759 = vsub.f32 %v414, %v2758
        %v2760 = vand.u32 %v2759, 4294901760
        %v2761 = vsub.f32 %v2759, %v2760
        %v2762 = vand.u32 %v2761, 4294901760
        %2763 = vmatpush.msra.mxu0 %v2762
        %v2764 = vand.u32 %v408, 4294901760
        %v2765 = vsub.f32 %v408, %v2764
        %v2766 = vand.u32 %v2765, 4294901760
        %v2767 = vsub.f32 %v2765, %v2766
        %v2768 = vand.u32 %v2767, 4294901760
        %2769 = vmatpush.msra.mxu0 %v2768
        %v2770 = vand.u32 %v402, 4294901760
        %v2771 = vsub.f32 %v402, %v2770
        %v2772 = vand.u32 %v2771, 4294901760
        %v2773 = vsub.f32 %v2771, %v2772
        %v2774 = vand.u32 %v2773, 4294901760
        %2775 = vmatpush.msra.mxu0 %v2774
        %v2776 = vand.u32 %v396, 4294901760
        %v2777 = vsub.f32 %v396, %v2776
        %v2778 = vand.u32 %v2777, 4294901760
        %v2779 = vsub.f32 %v2777, %v2778
        %v2780 = vand.u32 %v2779, 4294901760
        %2781 = vmatpush.msra.mxu0 %v2780
        %v2782 = vand.u32 %v389, 4294901760
        %2783 = vmatmul.f32.gmra.mxu0 %v2782
        %v2784 = vpop.f32.mrf.mxu0
        %v2785 = vadd.f32 %v2684, %v2784
        %2786 = vdwg.mxu0
        %v2787 = vand.u32 %v486, 4294901760
        %v2788 = vsub.f32 %v486, %v2787
        %2789 = vmatpush.msra.mxu0 %v2788
        %v2790 = vand.u32 %v480, 4294901760
        %v2791 = vsub.f32 %v480, %v2790
        %2792 = vmatpush.msra.mxu0 %v2791
        %v2793 = vand.u32 %v474, 4294901760
        %v2794 = vsub.f32 %v474, %v2793
        %2795 = vmatpush.msra.mxu0 %v2794
        %v2796 = vand.u32 %v468, 4294901760
        %v2797 = vsub.f32 %v468, %v2796
        %2798 = vmatpush.msra.mxu0 %v2797
        %v2799 = vand.u32 %v462, 4294901760
        %v2800 = vsub.f32 %v462, %v2799
        %2801 = vmatpush.msra.mxu0 %v2800
        %v2802 = vand.u32 %v456, 4294901760
        %v2803 = vsub.f32 %v456, %v2802
        %2804 = vmatpush.msra.mxu0 %v2803
        %v2805 = vand.u32 %v450, 4294901760
        %v2806 = vsub.f32 %v450, %v2805
        %2807 = vmatpush.msra.mxu0 %v2806
        %v2808 = vand.u32 %v444, 4294901760
        %v2809 = vsub.f32 %v444, %v2808
        %2810 = vmatpush.msra.mxu0 %v2809
        %v2811 = vand.u32 %v438, 4294901760
        %v2812 = vsub.f32 %v438, %v2811
        %2813 = vmatpush.msra.mxu0 %v2812
        %v2814 = vand.u32 %v432, 4294901760
        %v2815 = vsub.f32 %v432, %v2814
        %2816 = vmatpush.msra.mxu0 %v2815
        %v2817 = vand.u32 %v426, 4294901760
        %v2818 = vsub.f32 %v426, %v2817
        %2819 = vmatpush.msra.mxu0 %v2818
        %v2820 = vand.u32 %v420, 4294901760
        %v2821 = vsub.f32 %v420, %v2820
        %2822 = vmatpush.msra.mxu0 %v2821
        %v2823 = vand.u32 %v414, 4294901760
        %v2824 = vsub.f32 %v414, %v2823
        %2825 = vmatpush.msra.mxu0 %v2824
        %v2826 = vand.u32 %v408, 4294901760
        %v2827 = vsub.f32 %v408, %v2826
        %2828 = vmatpush.msra.mxu0 %v2827
        %v2829 = vand.u32 %v402, 4294901760
        %v2830 = vsub.f32 %v402, %v2829
        %2831 = vmatpush.msra.mxu0 %v2830
        %v2832 = vand.u32 %v396, 4294901760
        %v2833 = vsub.f32 %v396, %v2832
        %2834 = vmatpush.msra.mxu0 %v2833
        %v2835 = vand.u32 %v389, 4294901760
        %v2836 = vsub.f32 %v389, %v2835
        %2837 = vmatmul.f32.gmra.mxu0 %v2836
        %v2838 = vpop.f32.mrf.mxu0
        %v2839 = vadd.f32 %v2785, %v2838
        %2840 = vdwg.mxu0
        %v2841 = vand.u32 %v486, 4294901760
        %2842 = vmatpush.msra.mxu0 %v2841
        %v2843 = vand.u32 %v480, 4294901760
        %2844 = vmatpush.msra.mxu0 %v2843
        %v2845 = vand.u32 %v474, 4294901760
        %2846 = vmatpush.msra.mxu0 %v2845
        %v2847 = vand.u32 %v468, 4294901760
        %2848 = vmatpush.msra.mxu0 %v2847
        %v2849 = vand.u32 %v462, 4294901760
        %2850 = vmatpush.msra.mxu0 %v2849
        %v2851 = vand.u32 %v456, 4294901760
        %2852 = vmatpush.msra.mxu0 %v2851
        %v2853 = vand.u32 %v450, 4294901760
        %2854 = vmatpush.msra.mxu0 %v2853
        %v2855 = vand.u32 %v444, 4294901760
        %2856 = vmatpush.msra.mxu0 %v2855
        %v2857 = vand.u32 %v438, 4294901760
        %2858 = vmatpush.msra.mxu0 %v2857
        %v2859 = vand.u32 %v432, 4294901760
        %2860 = vmatpush.msra.mxu0 %v2859
        %v2861 = vand.u32 %v426, 4294901760
        %2862 = vmatpush.msra.mxu0 %v2861
        %v2863 = vand.u32 %v420, 4294901760
        %2864 = vmatpush.msra.mxu0 %v2863
        %v2865 = vand.u32 %v414, 4294901760
        %2866 = vmatpush.msra.mxu0 %v2865
        %v2867 = vand.u32 %v408, 4294901760
        %2868 = vmatpush.msra.mxu0 %v2867
        %v2869 = vand.u32 %v402, 4294901760
        %2870 = vmatpush.msra.mxu0 %v2869
        %v2871 = vand.u32 %v396, 4294901760
        %2872 = vmatpush.msra.mxu0 %v2871
        %v2873 = vand.u32 %v389, 4294901760
        %v2874 = vsub.f32 %v389, %v2873
        %v2875 = vand.u32 %v2874, 4294901760
        %2876 = vmatmul.f32.gmra.mxu0 %v2875
        %v2877 = vpop.f32.mrf.mxu0
        %v2878 = vadd.f32 %v2839, %v2877
        %2879 = vdwg.mxu0
        %v2880 = vand.u32 %v486, 4294901760
        %v2881 = vsub.f32 %v486, %v2880
        %v2882 = vand.u32 %v2881, 4294901760
        %2883 = vmatpush.msra.mxu0 %v2882
        %v2884 = vand.u32 %v480, 4294901760
        %v2885 = vsub.f32 %v480, %v2884
        %v2886 = vand.u32 %v2885, 4294901760
        %2887 = vmatpush.msra.mxu0 %v2886
        %v2888 = vand.u32 %v474, 4294901760
        %v2889 = vsub.f32 %v474, %v2888
        %v2890 = vand.u32 %v2889, 4294901760
        %2891 = vmatpush.msra.mxu0 %v2890
        %v2892 = vand.u32 %v468, 4294901760
        %v2893 = vsub.f32 %v468, %v2892
        %v2894 = vand.u32 %v2893, 4294901760
        %2895 = vmatpush.msra.mxu0 %v2894
        %v2896 = vand.u32 %v462, 4294901760
        %v2897 = vsub.f32 %v462, %v2896
        %v2898 = vand.u32 %v2897, 4294901760
        %2899 = vmatpush.msra.mxu0 %v2898
        %v2900 = vand.u32 %v456, 4294901760
        %v2901 = vsub.f32 %v456, %v2900
        %v2902 = vand.u32 %v2901, 4294901760
        %2903 = vmatpush.msra.mxu0 %v2902
        %v2904 = vand.u32 %v450, 4294901760
        %v2905 = vsub.f32 %v450, %v2904
        %v2906 = vand.u32 %v2905, 4294901760
        %2907 = vmatpush.msra.mxu0 %v2906
        %v2908 = vand.u32 %v444, 4294901760
        %v2909 = vsub.f32 %v444, %v2908
        %v2910 = vand.u32 %v2909, 4294901760
        %2911 = vmatpush.msra.mxu0 %v2910
        %v2912 = vand.u32 %v438, 4294901760
        %v2913 = vsub.f32 %v438, %v2912
        %v2914 = vand.u32 %v2913, 4294901760
        %2915 = vmatpush.msra.mxu0 %v2914
        %v2916 = vand.u32 %v432, 4294901760
        %v2917 = vsub.f32 %v432, %v2916
        %v2918 = vand.u32 %v2917, 4294901760
        %2919 = vmatpush.msra.mxu0 %v2918
        %v2920 = vand.u32 %v426, 4294901760
        %v2921 = vsub.f32 %v426, %v2920
        %v2922 = vand.u32 %v2921, 4294901760
        %2923 = vmatpush.msra.mxu0 %v2922
        %v2924 = vand.u32 %v420, 4294901760
        %v2925 = vsub.f32 %v420, %v2924
        %v2926 = vand.u32 %v2925, 4294901760
        %2927 = vmatpush.msra.mxu0 %v2926
        %v2928 = vand.u32 %v414, 4294901760
        %v2929 = vsub.f32 %v414, %v2928
        %v2930 = vand.u32 %v2929, 4294901760
        %2931 = vmatpush.msra.mxu0 %v2930
        %v2932 = vand.u32 %v408, 4294901760
        %v2933 = vsub.f32 %v408, %v2932
        %v2934 = vand.u32 %v2933, 4294901760
        %2935 = vmatpush.msra.mxu0 %v2934
        %v2936 = vand.u32 %v402, 4294901760
        %v2937 = vsub.f32 %v402, %v2936
        %v2938 = vand.u32 %v2937, 4294901760
        %2939 = vmatpush.msra.mxu0 %v2938
        %v2940 = vand.u32 %v396, 4294901760
        %v2941 = vsub.f32 %v396, %v2940
        %v2942 = vand.u32 %v2941, 4294901760
        %2943 = vmatpush.msra.mxu0 %v2942
        %v2944 = vand.u32 %v389, 4294901760
        %2945 = vmatmul.f32.gmra.mxu0 %v2944
        %v2946 = vpop.f32.mrf.mxu0
        %v2947 = vadd.f32 %v2878, %v2946
        %2948 = vdwg.mxu0
        %v2949 = vand.u32 %v486, 4294901760
        %2950 = vmatpush.msra.mxu0 %v2949
        %v2951 = vand.u32 %v480, 4294901760
        %2952 = vmatpush.msra.mxu0 %v2951
        %v2953 = vand.u32 %v474, 4294901760
        %2954 = vmatpush.msra.mxu0 %v2953
        %v2955 = vand.u32 %v468, 4294901760
        %2956 = vmatpush.msra.mxu0 %v2955
        %v2957 = vand.u32 %v462, 4294901760
        %2958 = vmatpush.msra.mxu0 %v2957
        %v2959 = vand.u32 %v456, 4294901760
        %2960 = vmatpush.msra.mxu0 %v2959
        %v2961 = vand.u32 %v450, 4294901760
        %2962 = vmatpush.msra.mxu0 %v2961
        %v2963 = vand.u32 %v444, 4294901760
        %2964 = vmatpush.msra.mxu0 %v2963
        %v2965 = vand.u32 %v438, 4294901760
        %2966 = vmatpush.msra.mxu0 %v2965
        %v2967 = vand.u32 %v432, 4294901760
        %2968 = vmatpush.msra.mxu0 %v2967
        %v2969 = vand.u32 %v426, 4294901760
        %2970 = vmatpush.msra.mxu0 %v2969
        %v2971 = vand.u32 %v420, 4294901760
        %2972 = vmatpush.msra.mxu0 %v2971
        %v2973 = vand.u32 %v414, 4294901760
        %2974 = vmatpush.msra.mxu0 %v2973
        %v2975 = vand.u32 %v408, 4294901760
        %2976 = vmatpush.msra.mxu0 %v2975
        %v2977 = vand.u32 %v402, 4294901760
        %2978 = vmatpush.msra.mxu0 %v2977
        %v2979 = vand.u32 %v396, 4294901760
        %2980 = vmatpush.msra.mxu0 %v2979
        %v2981 = vand.u32 %v389, 4294901760
        %2982 = vmatmul.f32.gmra.mxu0 %v2981
        %v2983 = vpop.f32.mrf.mxu0
        %v2984 = vadd.f32 %v2947, %v2983
        %2985 = vdwg.mxu0
        %v2986 = vand.u32 %v582, 4294901760
        %2987 = vmatpush.msra.mxu0 %v2986
        %v2988 = vand.u32 %v576, 4294901760
        %2989 = vmatpush.msra.mxu0 %v2988
        %v2990 = vand.u32 %v570, 4294901760
        %2991 = vmatpush.msra.mxu0 %v2990
        %v2992 = vand.u32 %v564, 4294901760
        %2993 = vmatpush.msra.mxu0 %v2992
        %v2994 = vand.u32 %v558, 4294901760
        %2995 = vmatpush.msra.mxu0 %v2994
        %v2996 = vand.u32 %v552, 4294901760
        %2997 = vmatpush.msra.mxu0 %v2996
        %v2998 = vand.u32 %v546, 4294901760
        %2999 = vmatpush.msra.mxu0 %v2998
        %v3000 = vand.u32 %v540, 4294901760
        %3001 = vmatpush.msra.mxu0 %v3000
        %v3002 = vand.u32 %v534, 4294901760
        %3003 = vmatpush.msra.mxu0 %v3002
        %v3004 = vand.u32 %v528, 4294901760
        %3005 = vmatpush.msra.mxu0 %v3004
        %v3006 = vand.u32 %v522, 4294901760
        %3007 = vmatpush.msra.mxu0 %v3006
        %v3008 = vand.u32 %v516, 4294901760
        %3009 = vmatpush.msra.mxu0 %v3008
        %v3010 = vand.u32 %v510, 4294901760
        %3011 = vmatpush.msra.mxu0 %v3010
        %v3012 = vand.u32 %v504, 4294901760
        %3013 = vmatpush.msra.mxu0 %v3012
        %v3014 = vand.u32 %v498, 4294901760
        %3015 = vmatpush.msra.mxu0 %v3014
        %v3016 = vand.u32 %v492, 4294901760
        %3017 = vmatpush.msra.mxu0 %v3016
        %v3018 = vand.u32 %v390, 4294901760
        %v3019 = vsub.f32 %v390, %v3018
        %v3020 = vand.u32 %v3019, 4294901760
        %v3021 = vsub.f32 %v3019, %v3020
        %v3022 = vand.u32 %v3021, 4294901760
        %3023 = vmatmul.f32.gmra.mxu0 %v3022
        %v3024 = vpop.f32.mrf.mxu0
        %v3025 = vadd.f32 %v2984, %v3024
        %3026 = vdwg.mxu0
        %v3027 = vand.u32 %v582, 4294901760
        %v3028 = vsub.f32 %v582, %v3027
        %v3029 = vand.u32 %v3028, 4294901760
        %v3030 = vsub.f32 %v3028, %v3029
        %v3031 = vand.u32 %v3030, 4294901760
        %3032 = vmatpush.msra.mxu0 %v3031
        %v3033 = vand.u32 %v576, 4294901760
        %v3034 = vsub.f32 %v576, %v3033
        %v3035 = vand.u32 %v3034, 4294901760
        %v3036 = vsub.f32 %v3034, %v3035
        %v3037 = vand.u32 %v3036, 4294901760
        %3038 = vmatpush.msra.mxu0 %v3037
        %v3039 = vand.u32 %v570, 4294901760
        %v3040 = vsub.f32 %v570, %v3039
        %v3041 = vand.u32 %v3040, 4294901760
        %v3042 = vsub.f32 %v3040, %v3041
        %v3043 = vand.u32 %v3042, 4294901760
        %3044 = vmatpush.msra.mxu0 %v3043
        %v3045 = vand.u32 %v564, 4294901760
        %v3046 = vsub.f32 %v564, %v3045
        %v3047 = vand.u32 %v3046, 4294901760
        %v3048 = vsub.f32 %v3046, %v3047
        %v3049 = vand.u32 %v3048, 4294901760
        %3050 = vmatpush.msra.mxu0 %v3049
        %v3051 = vand.u32 %v558, 4294901760
        %v3052 = vsub.f32 %v558, %v3051
        %v3053 = vand.u32 %v3052, 4294901760
        %v3054 = vsub.f32 %v3052, %v3053
        %v3055 = vand.u32 %v3054, 4294901760
        %3056 = vmatpush.msra.mxu0 %v3055
        %v3057 = vand.u32 %v552, 4294901760
        %v3058 = vsub.f32 %v552, %v3057
        %v3059 = vand.u32 %v3058, 4294901760
        %v3060 = vsub.f32 %v3058, %v3059
        %v3061 = vand.u32 %v3060, 4294901760
        %3062 = vmatpush.msra.mxu0 %v3061
        %v3063 = vand.u32 %v546, 4294901760
        %v3064 = vsub.f32 %v546, %v3063
        %v3065 = vand.u32 %v3064, 4294901760
        %v3066 = vsub.f32 %v3064, %v3065
        %v3067 = vand.u32 %v3066, 4294901760
        %3068 = vmatpush.msra.mxu0 %v3067
        %v3069 = vand.u32 %v540, 4294901760
        %v3070 = vsub.f32 %v540, %v3069
        %v3071 = vand.u32 %v3070, 4294901760
        %v3072 = vsub.f32 %v3070, %v3071
        %v3073 = vand.u32 %v3072, 4294901760
        %3074 = vmatpush.msra.mxu0 %v3073
        %v3075 = vand.u32 %v534, 4294901760
        %v3076 = vsub.f32 %v534, %v3075
        %v3077 = vand.u32 %v3076, 4294901760
        %v3078 = vsub.f32 %v3076, %v3077
        %v3079 = vand.u32 %v3078, 4294901760
        %3080 = vmatpush.msra.mxu0 %v3079
        %v3081 = vand.u32 %v528, 4294901760
        %v3082 = vsub.f32 %v528, %v3081
        %v3083 = vand.u32 %v3082, 4294901760
        %v3084 = vsub.f32 %v3082, %v3083
        %v3085 = vand.u32 %v3084, 4294901760
        %3086 = vmatpush.msra.mxu0 %v3085
        %v3087 = vand.u32 %v522, 4294901760
        %v3088 = vsub.f32 %v522, %v3087
        %v3089 = vand.u32 %v3088, 4294901760
        %v3090 = vsub.f32 %v3088, %v3089
        %v3091 = vand.u32 %v3090, 4294901760
        %3092 = vmatpush.msra.mxu0 %v3091
        %v3093 = vand.u32 %v516, 4294901760
        %v3094 = vsub.f32 %v516, %v3093
        %v3095 = vand.u32 %v3094, 4294901760
        %v3096 = vsub.f32 %v3094, %v3095
        %v3097 = vand.u32 %v3096, 4294901760
        %3098 = vmatpush.msra.mxu0 %v3097
        %v3099 = vand.u32 %v510, 4294901760
        %v3100 = vsub.f32 %v510, %v3099
        %v3101 = vand.u32 %v3100, 4294901760
        %v3102 = vsub.f32 %v3100, %v3101
        %v3103 = vand.u32 %v3102, 4294901760
        %3104 = vmatpush.msra.mxu0 %v3103
        %v3105 = vand.u32 %v504, 4294901760
        %v3106 = vsub.f32 %v504, %v3105
        %v3107 = vand.u32 %v3106, 4294901760
        %v3108 = vsub.f32 %v3106, %v3107
        %v3109 = vand.u32 %v3108, 4294901760
        %3110 = vmatpush.msra.mxu0 %v3109
        %v3111 = vand.u32 %v498, 4294901760
        %v3112 = vsub.f32 %v498, %v3111
        %v3113 = vand.u32 %v3112, 4294901760
        %v3114 = vsub.f32 %v3112, %v3113
        %v3115 = vand.u32 %v3114, 4294901760
        %3116 = vmatpush.msra.mxu0 %v3115
        %v3117 = vand.u32 %v492, 4294901760
        %v3118 = vsub.f32 %v492, %v3117
        %v3119 = vand.u32 %v3118, 4294901760
        %v3120 = vsub.f32 %v3118, %v3119
        %v3121 = vand.u32 %v3120, 4294901760
        %3122 = vmatpush.msra.mxu0 %v3121
        %v3123 = vand.u32 %v390, 4294901760
        %3124 = vmatmul.f32.gmra.mxu0 %v3123
        %v3125 = vpop.f32.mrf.mxu0
        %v3126 = vadd.f32 %v3025, %v3125
        %3127 = vdwg.mxu0
        %v3128 = vand.u32 %v582, 4294901760
        %v3129 = vsub.f32 %v582, %v3128
        %3130 = vmatpush.msra.mxu0 %v3129
        %v3131 = vand.u32 %v576, 4294901760
        %v3132 = vsub.f32 %v576, %v3131
        %3133 = vmatpush.msra.mxu0 %v3132
        %v3134 = vand.u32 %v570, 4294901760
        %v3135 = vsub.f32 %v570, %v3134
        %3136 = vmatpush.msra.mxu0 %v3135
        %v3137 = vand.u32 %v564, 4294901760
        %v3138 = vsub.f32 %v564, %v3137
        %3139 = vmatpush.msra.mxu0 %v3138
        %v3140 = vand.u32 %v558, 4294901760
        %v3141 = vsub.f32 %v558, %v3140
        %3142 = vmatpush.msra.mxu0 %v3141
        %v3143 = vand.u32 %v552, 4294901760
        %v3144 = vsub.f32 %v552, %v3143
        %3145 = vmatpush.msra.mxu0 %v3144
        %v3146 = vand.u32 %v546, 4294901760
        %v3147 = vsub.f32 %v546, %v3146
        %3148 = vmatpush.msra.mxu0 %v3147
        %v3149 = vand.u32 %v540, 4294901760
        %v3150 = vsub.f32 %v540, %v3149
        %3151 = vmatpush.msra.mxu0 %v3150
        %v3152 = vand.u32 %v534, 4294901760
        %v3153 = vsub.f32 %v534, %v3152
        %3154 = vmatpush.msra.mxu0 %v3153
        %v3155 = vand.u32 %v528, 4294901760
        %v3156 = vsub.f32 %v528, %v3155
        %3157 = vmatpush.msra.mxu0 %v3156
        %v3158 = vand.u32 %v522, 4294901760
        %v3159 = vsub.f32 %v522, %v3158
        %3160 = vmatpush.msra.mxu0 %v3159
        %v3161 = vand.u32 %v516, 4294901760
        %v3162 = vsub.f32 %v516, %v3161
        %3163 = vmatpush.msra.mxu0 %v3162
        %v3164 = vand.u32 %v510, 4294901760
        %v3165 = vsub.f32 %v510, %v3164
        %3166 = vmatpush.msra.mxu0 %v3165
        %v3167 = vand.u32 %v504, 4294901760
        %v3168 = vsub.f32 %v504, %v3167
        %3169 = vmatpush.msra.mxu0 %v3168
        %v3170 = vand.u32 %v498, 4294901760
        %v3171 = vsub.f32 %v498, %v3170
        %3172 = vmatpush.msra.mxu0 %v3171
        %v3173 = vand.u32 %v492, 4294901760
        %v3174 = vsub.f32 %v492, %v3173
        %3175 = vmatpush.msra.mxu0 %v3174
        %v3176 = vand.u32 %v390, 4294901760
        %v3177 = vsub.f32 %v390, %v3176
        %3178 = vmatmul.f32.gmra.mxu0 %v3177
        %v3179 = vpop.f32.mrf.mxu0
        %v3180 = vadd.f32 %v3126, %v3179
        %3181 = vdwg.mxu0
        %v3182 = vand.u32 %v582, 4294901760
        %3183 = vmatpush.msra.mxu0 %v3182
        %v3184 = vand.u32 %v576, 4294901760
        %3185 = vmatpush.msra.mxu0 %v3184
        %v3186 = vand.u32 %v570, 4294901760
        %3187 = vmatpush.msra.mxu0 %v3186
        %v3188 = vand.u32 %v564, 4294901760
        %3189 = vmatpush.msra.mxu0 %v3188
        %v3190 = vand.u32 %v558, 4294901760
        %3191 = vmatpush.msra.mxu0 %v3190
        %v3192 = vand.u32 %v552, 4294901760
        %3193 = vmatpush.msra.mxu0 %v3192
        %v3194 = vand.u32 %v546, 4294901760
        %3195 = vmatpush.msra.mxu0 %v3194
        %v3196 = vand.u32 %v540, 4294901760
        %3197 = vmatpush.msra.mxu0 %v3196
        %v3198 = vand.u32 %v534, 4294901760
        %3199 = vmatpush.msra.mxu0 %v3198
        %v3200 = vand.u32 %v528, 4294901760
        %3201 = vmatpush.msra.mxu0 %v3200
        %v3202 = vand.u32 %v522, 4294901760
        %3203 = vmatpush.msra.mxu0 %v3202
        %v3204 = vand.u32 %v516, 4294901760
        %3205 = vmatpush.msra.mxu0 %v3204
        %v3206 = vand.u32 %v510, 4294901760
        %3207 = vmatpush.msra.mxu0 %v3206
        %v3208 = vand.u32 %v504, 4294901760
        %3209 = vmatpush.msra.mxu0 %v3208
        %v3210 = vand.u32 %v498, 4294901760
        %3211 = vmatpush.msra.mxu0 %v3210
        %v3212 = vand.u32 %v492, 4294901760
        %3213 = vmatpush.msra.mxu0 %v3212
        %v3214 = vand.u32 %v390, 4294901760
        %v3215 = vsub.f32 %v390, %v3214
        %v3216 = vand.u32 %v3215, 4294901760
        %3217 = vmatmul.f32.gmra.mxu0 %v3216
        %v3218 = vpop.f32.mrf.mxu0
        %v3219 = vadd.f32 %v3180, %v3218
        %3220 = vdwg.mxu0
        %v3221 = vand.u32 %v582, 4294901760
        %v3222 = vsub.f32 %v582, %v3221
        %v3223 = vand.u32 %v3222, 4294901760
        %3224 = vmatpush.msra.mxu0 %v3223
        %v3225 = vand.u32 %v576, 4294901760
        %v3226 = vsub.f32 %v576, %v3225
        %v3227 = vand.u32 %v3226, 4294901760
        %3228 = vmatpush.msra.mxu0 %v3227
        %v3229 = vand.u32 %v570, 4294901760
        %v3230 = vsub.f32 %v570, %v3229
        %v3231 = vand.u32 %v3230, 4294901760
        %3232 = vmatpush.msra.mxu0 %v3231
        %v3233 = vand.u32 %v564, 4294901760
        %v3234 = vsub.f32 %v564, %v3233
        %v3235 = vand.u32 %v3234, 4294901760
        %3236 = vmatpush.msra.mxu0 %v3235
        %v3237 = vand.u32 %v558, 4294901760
        %v3238 = vsub.f32 %v558, %v3237
        %v3239 = vand.u32 %v3238, 4294901760
        %3240 = vmatpush.msra.mxu0 %v3239
        %v3241 = vand.u32 %v552, 4294901760
        %v3242 = vsub.f32 %v552, %v3241
        %v3243 = vand.u32 %v3242, 4294901760
        %3244 = vmatpush.msra.mxu0 %v3243
        %v3245 = vand.u32 %v546, 4294901760
        %v3246 = vsub.f32 %v546, %v3245
        %v3247 = vand.u32 %v3246, 4294901760
        %3248 = vmatpush.msra.mxu0 %v3247
        %v3249 = vand.u32 %v540, 4294901760
        %v3250 = vsub.f32 %v540, %v3249
        %v3251 = vand.u32 %v3250, 4294901760
        %3252 = vmatpush.msra.mxu0 %v3251
        %v3253 = vand.u32 %v534, 4294901760
        %v3254 = vsub.f32 %v534, %v3253
        %v3255 = vand.u32 %v3254, 4294901760
        %3256 = vmatpush.msra.mxu0 %v3255
        %v3257 = vand.u32 %v528, 4294901760
        %v3258 = vsub.f32 %v528, %v3257
        %v3259 = vand.u32 %v3258, 4294901760
        %3260 = vmatpush.msra.mxu0 %v3259
        %v3261 = vand.u32 %v522, 4294901760
        %v3262 = vsub.f32 %v522, %v3261
        %v3263 = vand.u32 %v3262, 4294901760
        %3264 = vmatpush.msra.mxu0 %v3263
        %v3265 = vand.u32 %v516, 4294901760
        %v3266 = vsub.f32 %v516, %v3265
        %v3267 = vand.u32 %v3266, 4294901760
        %3268 = vmatpush.msra.mxu0 %v3267
        %v3269 = vand.u32 %v510, 4294901760
        %v3270 = vsub.f32 %v510, %v3269
        %v3271 = vand.u32 %v3270, 4294901760
        %3272 = vmatpush.msra.mxu0 %v3271
        %v3273 = vand.u32 %v504, 4294901760
        %v3274 = vsub.f32 %v504, %v3273
        %v3275 = vand.u32 %v3274, 4294901760
        %3276 = vmatpush.msra.mxu0 %v3275
        %v3277 = vand.u32 %v498, 4294901760
        %v3278 = vsub.f32 %v498, %v3277
        %v3279 = vand.u32 %v3278, 4294901760
        %3280 = vmatpush.msra.mxu0 %v3279
        %v3281 = vand.u32 %v492, 4294901760
        %v3282 = vsub.f32 %v492, %v3281
        %v3283 = vand.u32 %v3282, 4294901760
        %3284 = vmatpush.msra.mxu0 %v3283
        %v3285 = vand.u32 %v390, 4294901760
        %3286 = vmatmul.f32.gmra.mxu0 %v3285
        %v3287 = vpop.f32.mrf.mxu0
        %v3288 = vadd.f32 %v3219, %v3287
        %3289 = vdwg.mxu0
        %v3290 = vand.u32 %v582, 4294901760
        %3291 = vmatpush.msra.mxu0 %v3290
        %v3292 = vand.u32 %v576, 4294901760
        %3293 = vmatpush.msra.mxu0 %v3292
        %v3294 = vand.u32 %v570, 4294901760
        %3295 = vmatpush.msra.mxu0 %v3294
        %v3296 = vand.u32 %v564, 4294901760
        %3297 = vmatpush.msra.mxu0 %v3296
        %v3298 = vand.u32 %v558, 4294901760
        %3299 = vmatpush.msra.mxu0 %v3298
        %v3300 = vand.u32 %v552, 4294901760
        %3301 = vmatpush.msra.mxu0 %v3300
        %v3302 = vand.u32 %v546, 4294901760
        %3303 = vmatpush.msra.mxu0 %v3302
        %v3304 = vand.u32 %v540, 4294901760
        %3305 = vmatpush.msra.mxu0 %v3304
        %v3306 = vand.u32 %v534, 4294901760
        %3307 = vmatpush.msra.mxu0 %v3306
        %v3308 = vand.u32 %v528, 4294901760
        %3309 = vmatpush.msra.mxu0 %v3308
        %v3310 = vand.u32 %v522, 4294901760
        %3311 = vmatpush.msra.mxu0 %v3310
        %v3312 = vand.u32 %v516, 4294901760
        %3313 = vmatpush.msra.mxu0 %v3312
        %v3314 = vand.u32 %v510, 4294901760
        %3315 = vmatpush.msra.mxu0 %v3314
        %v3316 = vand.u32 %v504, 4294901760
        %3317 = vmatpush.msra.mxu0 %v3316
        %v3318 = vand.u32 %v498, 4294901760
        %3319 = vmatpush.msra.mxu0 %v3318
        %v3320 = vand.u32 %v492, 4294901760
        %3321 = vmatpush.msra.mxu0 %v3320
        %v3322 = vand.u32 %v390, 4294901760
        %3323 = vmatmul.f32.gmra.mxu0 %v3322
        %v3324 = vpop.f32.mrf.mxu0
        %v3325 = vadd.f32 %v3288, %v3324
        %3326 = vdwg.mxu0
        %v3327 = vand.u32 %v487, 4294901760
        %3328 = vmatpush.msra.mxu0 %v3327
        %v3329 = vand.u32 %v481, 4294901760
        %3330 = vmatpush.msra.mxu0 %v3329
        %v3331 = vand.u32 %v475, 4294901760
        %3332 = vmatpush.msra.mxu0 %v3331
        %v3333 = vand.u32 %v469, 4294901760
        %3334 = vmatpush.msra.mxu0 %v3333
        %v3335 = vand.u32 %v463, 4294901760
        %3336 = vmatpush.msra.mxu0 %v3335
        %v3337 = vand.u32 %v457, 4294901760
        %3338 = vmatpush.msra.mxu0 %v3337
        %v3339 = vand.u32 %v451, 4294901760
        %3340 = vmatpush.msra.mxu0 %v3339
        %v3341 = vand.u32 %v445, 4294901760
        %3342 = vmatpush.msra.mxu0 %v3341
        %v3343 = vand.u32 %v439, 4294901760
        %3344 = vmatpush.msra.mxu0 %v3343
        %v3345 = vand.u32 %v433, 4294901760
        %3346 = vmatpush.msra.mxu0 %v3345
        %v3347 = vand.u32 %v427, 4294901760
        %3348 = vmatpush.msra.mxu0 %v3347
        %v3349 = vand.u32 %v421, 4294901760
        %3350 = vmatpush.msra.mxu0 %v3349
        %v3351 = vand.u32 %v415, 4294901760
        %3352 = vmatpush.msra.mxu0 %v3351
        %v3353 = vand.u32 %v409, 4294901760
        %3354 = vmatpush.msra.mxu0 %v3353
        %v3355 = vand.u32 %v403, 4294901760
        %3356 = vmatpush.msra.mxu0 %v3355
        %v3357 = vand.u32 %v397, 4294901760
        %3358 = vmatpush.msra.mxu0 %v3357
        %v3359 = vand.u32 %v389, 4294901760
        %v3360 = vsub.f32 %v389, %v3359
        %v3361 = vand.u32 %v3360, 4294901760
        %v3362 = vsub.f32 %v3360, %v3361
        %v3363 = vand.u32 %v3362, 4294901760
        %3364 = vmatmul.f32.gmra.mxu0 %v3363
        %v3365 = vpop.f32.mrf.mxu0
        %v3366 = vadd.f32 %v591, %v3365
        %3367 = vdwg.mxu0
        %v3368 = vand.u32 %v487, 4294901760
        %v3369 = vsub.f32 %v487, %v3368
        %v3370 = vand.u32 %v3369, 4294901760
        %v3371 = vsub.f32 %v3369, %v3370
        %v3372 = vand.u32 %v3371, 4294901760
        %3373 = vmatpush.msra.mxu0 %v3372
        %v3374 = vand.u32 %v481, 4294901760
        %v3375 = vsub.f32 %v481, %v3374
        %v3376 = vand.u32 %v3375, 4294901760
        %v3377 = vsub.f32 %v3375, %v3376
        %v3378 = vand.u32 %v3377, 4294901760
        %3379 = vmatpush.msra.mxu0 %v3378
        %v3380 = vand.u32 %v475, 4294901760
        %v3381 = vsub.f32 %v475, %v3380
        %v3382 = vand.u32 %v3381, 4294901760
        %v3383 = vsub.f32 %v3381, %v3382
        %v3384 = vand.u32 %v3383, 4294901760
        %3385 = vmatpush.msra.mxu0 %v3384
        %v3386 = vand.u32 %v469, 4294901760
        %v3387 = vsub.f32 %v469, %v3386
        %v3388 = vand.u32 %v3387, 4294901760
        %v3389 = vsub.f32 %v3387, %v3388
        %v3390 = vand.u32 %v3389, 4294901760
        %3391 = vmatpush.msra.mxu0 %v3390
        %v3392 = vand.u32 %v463, 4294901760
        %v3393 = vsub.f32 %v463, %v3392
        %v3394 = vand.u32 %v3393, 4294901760
        %v3395 = vsub.f32 %v3393, %v3394
        %v3396 = vand.u32 %v3395, 4294901760
        %3397 = vmatpush.msra.mxu0 %v3396
        %v3398 = vand.u32 %v457, 4294901760
        %v3399 = vsub.f32 %v457, %v3398
        %v3400 = vand.u32 %v3399, 4294901760
        %v3401 = vsub.f32 %v3399, %v3400
        %v3402 = vand.u32 %v3401, 4294901760
        %3403 = vmatpush.msra.mxu0 %v3402
        %v3404 = vand.u32 %v451, 4294901760
        %v3405 = vsub.f32 %v451, %v3404
        %v3406 = vand.u32 %v3405, 4294901760
        %v3407 = vsub.f32 %v3405, %v3406
        %v3408 = vand.u32 %v3407, 4294901760
        %3409 = vmatpush.msra.mxu0 %v3408
        %v3410 = vand.u32 %v445, 4294901760
        %v3411 = vsub.f32 %v445, %v3410
        %v3412 = vand.u32 %v3411, 4294901760
        %v3413 = vsub.f32 %v3411, %v3412
        %v3414 = vand.u32 %v3413, 4294901760
        %3415 = vmatpush.msra.mxu0 %v3414
        %v3416 = vand.u32 %v439, 4294901760
        %v3417 = vsub.f32 %v439, %v3416
        %v3418 = vand.u32 %v3417, 4294901760
        %v3419 = vsub.f32 %v3417, %v3418
        %v3420 = vand.u32 %v3419, 4294901760
        %3421 = vmatpush.msra.mxu0 %v3420
        %v3422 = vand.u32 %v433, 4294901760
        %v3423 = vsub.f32 %v433, %v3422
        %v3424 = vand.u32 %v3423, 4294901760
        %v3425 = vsub.f32 %v3423, %v3424
        %v3426 = vand.u32 %v3425, 4294901760
        %3427 = vmatpush.msra.mxu0 %v3426
        %v3428 = vand.u32 %v427, 4294901760
        %v3429 = vsub.f32 %v427, %v3428
        %v3430 = vand.u32 %v3429, 4294901760
        %v3431 = vsub.f32 %v3429, %v3430
        %v3432 = vand.u32 %v3431, 4294901760
        %3433 = vmatpush.msra.mxu0 %v3432
        %v3434 = vand.u32 %v421, 4294901760
        %v3435 = vsub.f32 %v421, %v3434
        %v3436 = vand.u32 %v3435, 4294901760
        %v3437 = vsub.f32 %v3435, %v3436
        %v3438 = vand.u32 %v3437, 4294901760
        %3439 = vmatpush.msra.mxu0 %v3438
        %v3440 = vand.u32 %v415, 4294901760
        %v3441 = vsub.f32 %v415, %v3440
        %v3442 = vand.u32 %v3441, 4294901760
        %v3443 = vsub.f32 %v3441, %v3442
        %v3444 = vand.u32 %v3443, 4294901760
        %3445 = vmatpush.msra.mxu0 %v3444
        %v3446 = vand.u32 %v409, 4294901760
        %v3447 = vsub.f32 %v409, %v3446
        %v3448 = vand.u32 %v3447, 4294901760
        %v3449 = vsub.f32 %v3447, %v3448
        %v3450 = vand.u32 %v3449, 4294901760
        %3451 = vmatpush.msra.mxu0 %v3450
        %v3452 = vand.u32 %v403, 4294901760
        %v3453 = vsub.f32 %v403, %v3452
        %v3454 = vand.u32 %v3453, 4294901760
        %v3455 = vsub.f32 %v3453, %v3454
        %v3456 = vand.u32 %v3455, 4294901760
        %3457 = vmatpush.msra.mxu0 %v3456
        %v3458 = vand.u32 %v397, 4294901760
        %v3459 = vsub.f32 %v397, %v3458
        %v3460 = vand.u32 %v3459, 4294901760
        %v3461 = vsub.f32 %v3459, %v3460
        %v3462 = vand.u32 %v3461, 4294901760
        %3463 = vmatpush.msra.mxu0 %v3462
        %v3464 = vand.u32 %v389, 4294901760
        %3465 = vmatmul.f32.gmra.mxu0 %v3464
        %v3466 = vpop.f32.mrf.mxu0
        %v3467 = vadd.f32 %v3366, %v3466
        %3468 = vdwg.mxu0
        %v3469 = vand.u32 %v487, 4294901760
        %v3470 = vsub.f32 %v487, %v3469
        %3471 = vmatpush.msra.mxu0 %v3470
        %v3472 = vand.u32 %v481, 4294901760
        %v3473 = vsub.f32 %v481, %v3472
        %3474 = vmatpush.msra.mxu0 %v3473
        %v3475 = vand.u32 %v475, 4294901760
        %v3476 = vsub.f32 %v475, %v3475
        %3477 = vmatpush.msra.mxu0 %v3476
        %v3478 = vand.u32 %v469, 4294901760
        %v3479 = vsub.f32 %v469, %v3478
        %3480 = vmatpush.msra.mxu0 %v3479
        %v3481 = vand.u32 %v463, 4294901760
        %v3482 = vsub.f32 %v463, %v3481
        %3483 = vmatpush.msra.mxu0 %v3482
        %v3484 = vand.u32 %v457, 4294901760
        %v3485 = vsub.f32 %v457, %v3484
        %3486 = vmatpush.msra.mxu0 %v3485
        %v3487 = vand.u32 %v451, 4294901760
        %v3488 = vsub.f32 %v451, %v3487
        %3489 = vmatpush.msra.mxu0 %v3488
        %v3490 = vand.u32 %v445, 4294901760
        %v3491 = vsub.f32 %v445, %v3490
        %3492 = vmatpush.msra.mxu0 %v3491
        %v3493 = vand.u32 %v439, 4294901760
        %v3494 = vsub.f32 %v439, %v3493
        %3495 = vmatpush.msra.mxu0 %v3494
        %v3496 = vand.u32 %v433, 4294901760
        %v3497 = vsub.f32 %v433, %v3496
        %3498 = vmatpush.msra.mxu0 %v3497
        %v3499 = vand.u32 %v427, 4294901760
        %v3500 = vsub.f32 %v427, %v3499
        %3501 = vmatpush.msra.mxu0 %v3500
        %v3502 = vand.u32 %v421, 4294901760
        %v3503 = vsub.f32 %v421, %v3502
        %3504 = vmatpush.msra.mxu0 %v3503
        %v3505 = vand.u32 %v415, 4294901760
        %v3506 = vsub.f32 %v415, %v3505
        %3507 = vmatpush.msra.mxu0 %v3506
        %v3508 = vand.u32 %v409, 4294901760
        %v3509 = vsub.f32 %v409, %v3508
        %3510 = vmatpush.msra.mxu0 %v3509
        %v3511 = vand.u32 %v403, 4294901760
        %v3512 = vsub.f32 %v403, %v3511
        %3513 = vmatpush.msra.mxu0 %v3512
        %v3514 = vand.u32 %v397, 4294901760
        %v3515 = vsub.f32 %v397, %v3514
        %3516 = vmatpush.msra.mxu0 %v3515
        %v3517 = vand.u32 %v389, 4294901760
        %v3518 = vsub.f32 %v389, %v3517
        %3519 = vmatmul.f32.gmra.mxu0 %v3518
        %v3520 = vpop.f32.mrf.mxu0
        %v3521 = vadd.f32 %v3467, %v3520
        %3522 = vdwg.mxu0
        %v3523 = vand.u32 %v487, 4294901760
        %3524 = vmatpush.msra.mxu0 %v3523
        %v3525 = vand.u32 %v481, 4294901760
        %3526 = vmatpush.msra.mxu0 %v3525
        %v3527 = vand.u32 %v475, 4294901760
        %3528 = vmatpush.msra.mxu0 %v3527
        %v3529 = vand.u32 %v469, 4294901760
        %3530 = vmatpush.msra.mxu0 %v3529
        %v3531 = vand.u32 %v463, 4294901760
        %3532 = vmatpush.msra.mxu0 %v3531
        %v3533 = vand.u32 %v457, 4294901760
        %3534 = vmatpush.msra.mxu0 %v3533
        %v3535 = vand.u32 %v451, 4294901760
        %3536 = vmatpush.msra.mxu0 %v3535
        %v3537 = vand.u32 %v445, 4294901760
        %3538 = vmatpush.msra.mxu0 %v3537
        %v3539 = vand.u32 %v439, 4294901760
        %3540 = vmatpush.msra.mxu0 %v3539
        %v3541 = vand.u32 %v433, 4294901760
        %3542 = vmatpush.msra.mxu0 %v3541
        %v3543 = vand.u32 %v427, 4294901760
        %3544 = vmatpush.msra.mxu0 %v3543
        %v3545 = vand.u32 %v421, 4294901760
        %3546 = vmatpush.msra.mxu0 %v3545
        %v3547 = vand.u32 %v415, 4294901760
        %3548 = vmatpush.msra.mxu0 %v3547
        %v3549 = vand.u32 %v409, 4294901760
        %3550 = vmatpush.msra.mxu0 %v3549
        %v3551 = vand.u32 %v403, 4294901760
        %3552 = vmatpush.msra.mxu0 %v3551
        %v3553 = vand.u32 %v397, 4294901760
        %3554 = vmatpush.msra.mxu0 %v3553
        %v3555 = vand.u32 %v389, 4294901760
        %v3556 = vsub.f32 %v389, %v3555
        %v3557 = vand.u32 %v3556, 4294901760
        %3558 = vmatmul.f32.gmra.mxu0 %v3557
        %v3559 = vpop.f32.mrf.mxu0
        %v3560 = vadd.f32 %v3521, %v3559
        %3561 = vdwg.mxu0
        %v3562 = vand.u32 %v487, 4294901760
        %v3563 = vsub.f32 %v487, %v3562
        %v3564 = vand.u32 %v3563, 4294901760
        %3565 = vmatpush.msra.mxu0 %v3564
        %v3566 = vand.u32 %v481, 4294901760
        %v3567 = vsub.f32 %v481, %v3566
        %v3568 = vand.u32 %v3567, 4294901760
        %3569 = vmatpush.msra.mxu0 %v3568
        %v3570 = vand.u32 %v475, 4294901760
        %v3571 = vsub.f32 %v475, %v3570
        %v3572 = vand.u32 %v3571, 4294901760
        %3573 = vmatpush.msra.mxu0 %v3572
        %v3574 = vand.u32 %v469, 4294901760
        %v3575 = vsub.f32 %v469, %v3574
        %v3576 = vand.u32 %v3575, 4294901760
        %3577 = vmatpush.msra.mxu0 %v3576
        %v3578 = vand.u32 %v463, 4294901760
        %v3579 = vsub.f32 %v463, %v3578
        %v3580 = vand.u32 %v3579, 4294901760
        %3581 = vmatpush.msra.mxu0 %v3580
        %v3582 = vand.u32 %v457, 4294901760
        %v3583 = vsub.f32 %v457, %v3582
        %v3584 = vand.u32 %v3583, 4294901760
        %3585 = vmatpush.msra.mxu0 %v3584
        %v3586 = vand.u32 %v451, 4294901760
        %v3587 = vsub.f32 %v451, %v3586
        %v3588 = vand.u32 %v3587, 4294901760
        %3589 = vmatpush.msra.mxu0 %v3588
        %v3590 = vand.u32 %v445, 4294901760
        %v3591 = vsub.f32 %v445, %v3590
        %v3592 = vand.u32 %v3591, 4294901760
        %3593 = vmatpush.msra.mxu0 %v3592
        %v3594 = vand.u32 %v439, 4294901760
        %v3595 = vsub.f32 %v439, %v3594
        %v3596 = vand.u32 %v3595, 4294901760
        %3597 = vmatpush.msra.mxu0 %v3596
        %v3598 = vand.u32 %v433, 4294901760
        %v3599 = vsub.f32 %v433, %v3598
        %v3600 = vand.u32 %v3599, 4294901760
        %3601 = vmatpush.msra.mxu0 %v3600
        %v3602 = vand.u32 %v427, 4294901760
        %v3603 = vsub.f32 %v427, %v3602
        %v3604 = vand.u32 %v3603, 4294901760
        %3605 = vmatpush.msra.mxu0 %v3604
        %v3606 = vand.u32 %v421, 4294901760
        %v3607 = vsub.f32 %v421, %v3606
        %v3608 = vand.u32 %v3607, 4294901760
        %3609 = vmatpush.msra.mxu0 %v3608
        %v3610 = vand.u32 %v415, 4294901760
        %v3611 = vsub.f32 %v415, %v3610
        %v3612 = vand.u32 %v3611, 4294901760
        %3613 = vmatpush.msra.mxu0 %v3612
        %v3614 = vand.u32 %v409, 4294901760
        %v3615 = vsub.f32 %v409, %v3614
        %v3616 = vand.u32 %v3615, 4294901760
        %3617 = vmatpush.msra.mxu0 %v3616
        %v3618 = vand.u32 %v403, 4294901760
        %v3619 = vsub.f32 %v403, %v3618
        %v3620 = vand.u32 %v3619, 4294901760
        %3621 = vmatpush.msra.mxu0 %v3620
        %v3622 = vand.u32 %v397, 4294901760
        %v3623 = vsub.f32 %v397, %v3622
        %v3624 = vand.u32 %v3623, 4294901760
        %3625 = vmatpush.msra.mxu0 %v3624
        %v3626 = vand.u32 %v389, 4294901760
        %3627 = vmatmul.f32.gmra.mxu0 %v3626
        %v3628 = vpop.f32.mrf.mxu0
        %v3629 = vadd.f32 %v3560, %v3628
        %3630 = vdwg.mxu0
        %v3631 = vand.u32 %v487, 4294901760
        %3632 = vmatpush.msra.mxu0 %v3631
        %v3633 = vand.u32 %v481, 4294901760
        %3634 = vmatpush.msra.mxu0 %v3633
        %v3635 = vand.u32 %v475, 4294901760
        %3636 = vmatpush.msra.mxu0 %v3635
        %v3637 = vand.u32 %v469, 4294901760
        %3638 = vmatpush.msra.mxu0 %v3637
        %v3639 = vand.u32 %v463, 4294901760
        %3640 = vmatpush.msra.mxu0 %v3639
        %v3641 = vand.u32 %v457, 4294901760
        %3642 = vmatpush.msra.mxu0 %v3641
        %v3643 = vand.u32 %v451, 4294901760
        %3644 = vmatpush.msra.mxu0 %v3643
        %v3645 = vand.u32 %v445, 4294901760
        %3646 = vmatpush.msra.mxu0 %v3645
        %v3647 = vand.u32 %v439, 4294901760
        %3648 = vmatpush.msra.mxu0 %v3647
        %v3649 = vand.u32 %v433, 4294901760
        %3650 = vmatpush.msra.mxu0 %v3649
        %v3651 = vand.u32 %v427, 4294901760
        %3652 = vmatpush.msra.mxu0 %v3651
        %v3653 = vand.u32 %v421, 4294901760
        %3654 = vmatpush.msra.mxu0 %v3653
        %v3655 = vand.u32 %v415, 4294901760
        %3656 = vmatpush.msra.mxu0 %v3655
        %v3657 = vand.u32 %v409, 4294901760
        %3658 = vmatpush.msra.mxu0 %v3657
        %v3659 = vand.u32 %v403, 4294901760
        %3660 = vmatpush.msra.mxu0 %v3659
        %v3661 = vand.u32 %v397, 4294901760
        %3662 = vmatpush.msra.mxu0 %v3661
        %v3663 = vand.u32 %v389, 4294901760
        %3664 = vmatmul.f32.gmra.mxu0 %v3663
        %v3665 = vpop.f32.mrf.mxu0
        %v3666 = vadd.f32 %v3629, %v3665
        %3667 = vdwg.mxu0
        %v3668 = vand.u32 %v583, 4294901760
        %3669 = vmatpush.msra.mxu0 %v3668
        %v3670 = vand.u32 %v577, 4294901760
        %3671 = vmatpush.msra.mxu0 %v3670
        %v3672 = vand.u32 %v571, 4294901760
        %3673 = vmatpush.msra.mxu0 %v3672
        %v3674 = vand.u32 %v565, 4294901760
        %3675 = vmatpush.msra.mxu0 %v3674
        %v3676 = vand.u32 %v559, 4294901760
        %3677 = vmatpush.msra.mxu0 %v3676
        %v3678 = vand.u32 %v553, 4294901760
        %3679 = vmatpush.msra.mxu0 %v3678
        %v3680 = vand.u32 %v547, 4294901760
        %3681 = vmatpush.msra.mxu0 %v3680
        %v3682 = vand.u32 %v541, 4294901760
        %3683 = vmatpush.msra.mxu0 %v3682
        %v3684 = vand.u32 %v535, 4294901760
        %3685 = vmatpush.msra.mxu0 %v3684
        %v3686 = vand.u32 %v529, 4294901760
        %3687 = vmatpush.msra.mxu0 %v3686
        %v3688 = vand.u32 %v523, 4294901760
        %3689 = vmatpush.msra.mxu0 %v3688
        %v3690 = vand.u32 %v517, 4294901760
        %3691 = vmatpush.msra.mxu0 %v3690
        %v3692 = vand.u32 %v511, 4294901760
        %3693 = vmatpush.msra.mxu0 %v3692
        %v3694 = vand.u32 %v505, 4294901760
        %3695 = vmatpush.msra.mxu0 %v3694
        %v3696 = vand.u32 %v499, 4294901760
        %3697 = vmatpush.msra.mxu0 %v3696
        %v3698 = vand.u32 %v493, 4294901760
        %3699 = vmatpush.msra.mxu0 %v3698
        %v3700 = vand.u32 %v390, 4294901760
        %v3701 = vsub.f32 %v390, %v3700
        %v3702 = vand.u32 %v3701, 4294901760
        %v3703 = vsub.f32 %v3701, %v3702
        %v3704 = vand.u32 %v3703, 4294901760
        %3705 = vmatmul.f32.gmra.mxu0 %v3704
        %v3706 = vpop.f32.mrf.mxu0
        %v3707 = vadd.f32 %v3666, %v3706
        %3708 = vdwg.mxu0
        %v3709 = vand.u32 %v583, 4294901760
        %v3710 = vsub.f32 %v583, %v3709
        %v3711 = vand.u32 %v3710, 4294901760
        %v3712 = vsub.f32 %v3710, %v3711
        %v3713 = vand.u32 %v3712, 4294901760
        %3714 = vmatpush.msra.mxu0 %v3713
        %v3715 = vand.u32 %v577, 4294901760
        %v3716 = vsub.f32 %v577, %v3715
        %v3717 = vand.u32 %v3716, 4294901760
        %v3718 = vsub.f32 %v3716, %v3717
        %v3719 = vand.u32 %v3718, 4294901760
        %3720 = vmatpush.msra.mxu0 %v3719
        %v3721 = vand.u32 %v571, 4294901760
        %v3722 = vsub.f32 %v571, %v3721
        %v3723 = vand.u32 %v3722, 4294901760
        %v3724 = vsub.f32 %v3722, %v3723
        %v3725 = vand.u32 %v3724, 4294901760
        %3726 = vmatpush.msra.mxu0 %v3725
        %v3727 = vand.u32 %v565, 4294901760
        %v3728 = vsub.f32 %v565, %v3727
        %v3729 = vand.u32 %v3728, 4294901760
        %v3730 = vsub.f32 %v3728, %v3729
        %v3731 = vand.u32 %v3730, 4294901760
        %3732 = vmatpush.msra.mxu0 %v3731
        %v3733 = vand.u32 %v559, 4294901760
        %v3734 = vsub.f32 %v559, %v3733
        %v3735 = vand.u32 %v3734, 4294901760
        %v3736 = vsub.f32 %v3734, %v3735
        %v3737 = vand.u32 %v3736, 4294901760
        %3738 = vmatpush.msra.mxu0 %v3737
        %v3739 = vand.u32 %v553, 4294901760
        %v3740 = vsub.f32 %v553, %v3739
        %v3741 = vand.u32 %v3740, 4294901760
        %v3742 = vsub.f32 %v3740, %v3741
        %v3743 = vand.u32 %v3742, 4294901760
        %3744 = vmatpush.msra.mxu0 %v3743
        %v3745 = vand.u32 %v547, 4294901760
        %v3746 = vsub.f32 %v547, %v3745
        %v3747 = vand.u32 %v3746, 4294901760
        %v3748 = vsub.f32 %v3746, %v3747
        %v3749 = vand.u32 %v3748, 4294901760
        %3750 = vmatpush.msra.mxu0 %v3749
        %v3751 = vand.u32 %v541, 4294901760
        %v3752 = vsub.f32 %v541, %v3751
        %v3753 = vand.u32 %v3752, 4294901760
        %v3754 = vsub.f32 %v3752, %v3753
        %v3755 = vand.u32 %v3754, 4294901760
        %3756 = vmatpush.msra.mxu0 %v3755
        %v3757 = vand.u32 %v535, 4294901760
        %v3758 = vsub.f32 %v535, %v3757
        %v3759 = vand.u32 %v3758, 4294901760
        %v3760 = vsub.f32 %v3758, %v3759
        %v3761 = vand.u32 %v3760, 4294901760
        %3762 = vmatpush.msra.mxu0 %v3761
        %v3763 = vand.u32 %v529, 4294901760
        %v3764 = vsub.f32 %v529, %v3763
        %v3765 = vand.u32 %v3764, 4294901760
        %v3766 = vsub.f32 %v3764, %v3765
        %v3767 = vand.u32 %v3766, 4294901760
        %3768 = vmatpush.msra.mxu0 %v3767
        %v3769 = vand.u32 %v523, 4294901760
        %v3770 = vsub.f32 %v523, %v3769
        %v3771 = vand.u32 %v3770, 4294901760
        %v3772 = vsub.f32 %v3770, %v3771
        %v3773 = vand.u32 %v3772, 4294901760
        %3774 = vmatpush.msra.mxu0 %v3773
        %v3775 = vand.u32 %v517, 4294901760
        %v3776 = vsub.f32 %v517, %v3775
        %v3777 = vand.u32 %v3776, 4294901760
        %v3778 = vsub.f32 %v3776, %v3777
        %v3779 = vand.u32 %v3778, 4294901760
        %3780 = vmatpush.msra.mxu0 %v3779
        %v3781 = vand.u32 %v511, 4294901760
        %v3782 = vsub.f32 %v511, %v3781
        %v3783 = vand.u32 %v3782, 4294901760
        %v3784 = vsub.f32 %v3782, %v3783
        %v3785 = vand.u32 %v3784, 4294901760
        %3786 = vmatpush.msra.mxu0 %v3785
        %v3787 = vand.u32 %v505, 4294901760
        %v3788 = vsub.f32 %v505, %v3787
        %v3789 = vand.u32 %v3788, 4294901760
        %v3790 = vsub.f32 %v3788, %v3789
        %v3791 = vand.u32 %v3790, 4294901760
        %3792 = vmatpush.msra.mxu0 %v3791
        %v3793 = vand.u32 %v499, 4294901760
        %v3794 = vsub.f32 %v499, %v3793
        %v3795 = vand.u32 %v3794, 4294901760
        %v3796 = vsub.f32 %v3794, %v3795
        %v3797 = vand.u32 %v3796, 4294901760
        %3798 = vmatpush.msra.mxu0 %v3797
        %v3799 = vand.u32 %v493, 4294901760
        %v3800 = vsub.f32 %v493, %v3799
        %v3801 = vand.u32 %v3800, 4294901760
        %v3802 = vsub.f32 %v3800, %v3801
        %v3803 = vand.u32 %v3802, 4294901760
        %3804 = vmatpush.msra.mxu0 %v3803
        %v3805 = vand.u32 %v390, 4294901760
        %3806 = vmatmul.f32.gmra.mxu0 %v3805
        %v3807 = vpop.f32.mrf.mxu0
        %v3808 = vadd.f32 %v3707, %v3807
        %3809 = vdwg.mxu0
        %v3810 = vand.u32 %v583, 4294901760
        %v3811 = vsub.f32 %v583, %v3810
        %3812 = vmatpush.msra.mxu0 %v3811
        %v3813 = vand.u32 %v577, 4294901760
        %v3814 = vsub.f32 %v577, %v3813
        %3815 = vmatpush.msra.mxu0 %v3814
        %v3816 = vand.u32 %v571, 4294901760
        %v3817 = vsub.f32 %v571, %v3816
        %3818 = vmatpush.msra.mxu0 %v3817
        %v3819 = vand.u32 %v565, 4294901760
        %v3820 = vsub.f32 %v565, %v3819
        %3821 = vmatpush.msra.mxu0 %v3820
        %v3822 = vand.u32 %v559, 4294901760
        %v3823 = vsub.f32 %v559, %v3822
        %3824 = vmatpush.msra.mxu0 %v3823
        %v3825 = vand.u32 %v553, 4294901760
        %v3826 = vsub.f32 %v553, %v3825
        %3827 = vmatpush.msra.mxu0 %v3826
        %v3828 = vand.u32 %v547, 4294901760
        %v3829 = vsub.f32 %v547, %v3828
        %3830 = vmatpush.msra.mxu0 %v3829
        %v3831 = vand.u32 %v541, 4294901760
        %v3832 = vsub.f32 %v541, %v3831
        %3833 = vmatpush.msra.mxu0 %v3832
        %v3834 = vand.u32 %v535, 4294901760
        %v3835 = vsub.f32 %v535, %v3834
        %3836 = vmatpush.msra.mxu0 %v3835
        %v3837 = vand.u32 %v529, 4294901760
        %v3838 = vsub.f32 %v529, %v3837
        %3839 = vmatpush.msra.mxu0 %v3838
        %v3840 = vand.u32 %v523, 4294901760
        %v3841 = vsub.f32 %v523, %v3840
        %3842 = vmatpush.msra.mxu0 %v3841
        %v3843 = vand.u32 %v517, 4294901760
        %v3844 = vsub.f32 %v517, %v3843
        %3845 = vmatpush.msra.mxu0 %v3844
        %v3846 = vand.u32 %v511, 4294901760
        %v3847 = vsub.f32 %v511, %v3846
        %3848 = vmatpush.msra.mxu0 %v3847
        %v3849 = vand.u32 %v505, 4294901760
        %v3850 = vsub.f32 %v505, %v3849
        %3851 = vmatpush.msra.mxu0 %v3850
        %v3852 = vand.u32 %v499, 4294901760
        %v3853 = vsub.f32 %v499, %v3852
        %3854 = vmatpush.msra.mxu0 %v3853
        %v3855 = vand.u32 %v493, 4294901760
        %v3856 = vsub.f32 %v493, %v3855
        %3857 = vmatpush.msra.mxu0 %v3856
        %v3858 = vand.u32 %v390, 4294901760
        %v3859 = vsub.f32 %v390, %v3858
        %3860 = vmatmul.f32.gmra.mxu0 %v3859
        %v3861 = vpop.f32.mrf.mxu0
        %v3862 = vadd.f32 %v3808, %v3861
        %3863 = vdwg.mxu0
        %v3864 = vand.u32 %v583, 4294901760
        %3865 = vmatpush.msra.mxu0 %v3864
        %v3866 = vand.u32 %v577, 4294901760
        %3867 = vmatpush.msra.mxu0 %v3866
        %v3868 = vand.u32 %v571, 4294901760
        %3869 = vmatpush.msra.mxu0 %v3868
        %v3870 = vand.u32 %v565, 4294901760
        %3871 = vmatpush.msra.mxu0 %v3870
        %v3872 = vand.u32 %v559, 4294901760
        %3873 = vmatpush.msra.mxu0 %v3872
        %v3874 = vand.u32 %v553, 4294901760
        %3875 = vmatpush.msra.mxu0 %v3874
        %v3876 = vand.u32 %v547, 4294901760
        %3877 = vmatpush.msra.mxu0 %v3876
        %v3878 = vand.u32 %v541, 4294901760
        %3879 = vmatpush.msra.mxu0 %v3878
        %v3880 = vand.u32 %v535, 4294901760
        %3881 = vmatpush.msra.mxu0 %v3880
        %v3882 = vand.u32 %v529, 4294901760
        %3883 = vmatpush.msra.mxu0 %v3882
        %v3884 = vand.u32 %v523, 4294901760
        %3885 = vmatpush.msra.mxu0 %v3884
        %v3886 = vand.u32 %v517, 4294901760
        %3887 = vmatpush.msra.mxu0 %v3886
        %v3888 = vand.u32 %v511, 4294901760
        %3889 = vmatpush.msra.mxu0 %v3888
        %v3890 = vand.u32 %v505, 4294901760
        %3891 = vmatpush.msra.mxu0 %v3890
        %v3892 = vand.u32 %v499, 4294901760
        %3893 = vmatpush.msra.mxu0 %v3892
        %v3894 = vand.u32 %v493, 4294901760
        %3895 = vmatpush.msra.mxu0 %v3894
        %v3896 = vand.u32 %v390, 4294901760
        %v3897 = vsub.f32 %v390, %v3896
        %v3898 = vand.u32 %v3897, 4294901760
        %3899 = vmatmul.f32.gmra.mxu0 %v3898
        %v3900 = vpop.f32.mrf.mxu0
        %v3901 = vadd.f32 %v3862, %v3900
        %3902 = vdwg.mxu0
        %v3903 = vand.u32 %v583, 4294901760
        %v3904 = vsub.f32 %v583, %v3903
        %v3905 = vand.u32 %v3904, 4294901760
        %3906 = vmatpush.msra.mxu0 %v3905
        %v3907 = vand.u32 %v577, 4294901760
        %v3908 = vsub.f32 %v577, %v3907
        %v3909 = vand.u32 %v3908, 4294901760
        %3910 = vmatpush.msra.mxu0 %v3909
        %v3911 = vand.u32 %v571, 4294901760
        %v3912 = vsub.f32 %v571, %v3911
        %v3913 = vand.u32 %v3912, 4294901760
        %3914 = vmatpush.msra.mxu0 %v3913
        %v3915 = vand.u32 %v565, 4294901760
        %v3916 = vsub.f32 %v565, %v3915
        %v3917 = vand.u32 %v3916, 4294901760
        %3918 = vmatpush.msra.mxu0 %v3917
        %v3919 = vand.u32 %v559, 4294901760
        %v3920 = vsub.f32 %v559, %v3919
        %v3921 = vand.u32 %v3920, 4294901760
        %3922 = vmatpush.msra.mxu0 %v3921
        %v3923 = vand.u32 %v553, 4294901760
        %v3924 = vsub.f32 %v553, %v3923
        %v3925 = vand.u32 %v3924, 4294901760
        %3926 = vmatpush.msra.mxu0 %v3925
        %v3927 = vand.u32 %v547, 4294901760
        %v3928 = vsub.f32 %v547, %v3927
        %v3929 = vand.u32 %v3928, 4294901760
        %3930 = vmatpush.msra.mxu0 %v3929
        %v3931 = vand.u32 %v541, 4294901760
        %v3932 = vsub.f32 %v541, %v3931
        %v3933 = vand.u32 %v3932, 4294901760
        %3934 = vmatpush.msra.mxu0 %v3933
        %v3935 = vand.u32 %v535, 4294901760
        %v3936 = vsub.f32 %v535, %v3935
        %v3937 = vand.u32 %v3936, 4294901760
        %3938 = vmatpush.msra.mxu0 %v3937
        %v3939 = vand.u32 %v529, 4294901760
        %v3940 = vsub.f32 %v529, %v3939
        %v3941 = vand.u32 %v3940, 4294901760
        %3942 = vmatpush.msra.mxu0 %v3941
        %v3943 = vand.u32 %v523, 4294901760
        %v3944 = vsub.f32 %v523, %v3943
        %v3945 = vand.u32 %v3944, 4294901760
        %3946 = vmatpush.msra.mxu0 %v3945
        %v3947 = vand.u32 %v517, 4294901760
        %v3948 = vsub.f32 %v517, %v3947
        %v3949 = vand.u32 %v3948, 4294901760
        %3950 = vmatpush.msra.mxu0 %v3949
        %v3951 = vand.u32 %v511, 4294901760
        %v3952 = vsub.f32 %v511, %v3951
        %v3953 = vand.u32 %v3952, 4294901760
        %3954 = vmatpush.msra.mxu0 %v3953
        %v3955 = vand.u32 %v505, 4294901760
        %v3956 = vsub.f32 %v505, %v3955
        %v3957 = vand.u32 %v3956, 4294901760
        %3958 = vmatpush.msra.mxu0 %v3957
        %v3959 = vand.u32 %v499, 4294901760
        %v3960 = vsub.f32 %v499, %v3959
        %v3961 = vand.u32 %v3960, 4294901760
        %3962 = vmatpush.msra.mxu0 %v3961
        %v3963 = vand.u32 %v493, 4294901760
        %v3964 = vsub.f32 %v493, %v3963
        %v3965 = vand.u32 %v3964, 4294901760
        %3966 = vmatpush.msra.mxu0 %v3965
        %v3967 = vand.u32 %v390, 4294901760
        %3968 = vmatmul.f32.gmra.mxu0 %v3967
        %v3969 = vpop.f32.mrf.mxu0
        %v3970 = vadd.f32 %v3901, %v3969
        %3971 = vdwg.mxu0
        %v3972 = vand.u32 %v583, 4294901760
        %3973 = vmatpush.msra.mxu0 %v3972
        %v3974 = vand.u32 %v577, 4294901760
        %3975 = vmatpush.msra.mxu0 %v3974
        %v3976 = vand.u32 %v571, 4294901760
        %3977 = vmatpush.msra.mxu0 %v3976
        %v3978 = vand.u32 %v565, 4294901760
        %3979 = vmatpush.msra.mxu0 %v3978
        %v3980 = vand.u32 %v559, 4294901760
        %3981 = vmatpush.msra.mxu0 %v3980
        %v3982 = vand.u32 %v553, 4294901760
        %3983 = vmatpush.msra.mxu0 %v3982
        %v3984 = vand.u32 %v547, 4294901760
        %3985 = vmatpush.msra.mxu0 %v3984
        %v3986 = vand.u32 %v541, 4294901760
        %3987 = vmatpush.msra.mxu0 %v3986
        %v3988 = vand.u32 %v535, 4294901760
        %3989 = vmatpush.msra.mxu0 %v3988
        %v3990 = vand.u32 %v529, 4294901760
        %3991 = vmatpush.msra.mxu0 %v3990
        %v3992 = vand.u32 %v523, 4294901760
        %3993 = vmatpush.msra.mxu0 %v3992
        %v3994 = vand.u32 %v517, 4294901760
        %3995 = vmatpush.msra.mxu0 %v3994
        %v3996 = vand.u32 %v511, 4294901760
        %3997 = vmatpush.msra.mxu0 %v3996
        %v3998 = vand.u32 %v505, 4294901760
        %3999 = vmatpush.msra.mxu0 %v3998
        %v4000 = vand.u32 %v499, 4294901760
        %4001 = vmatpush.msra.mxu0 %v4000
        %v4002 = vand.u32 %v493, 4294901760
        %4003 = vmatpush.msra.mxu0 %v4002
        %v4004 = vand.u32 %v390, 4294901760
        %4005 = vmatmul.f32.gmra.mxu0 %v4004
        %v4006 = vpop.f32.mrf.mxu0
        %v4007 = vadd.f32 %v3970, %v4006
        %4008 = vdwg.mxu0
        %v4009 = vand.u32 %v488, 4294901760
        %4010 = vmatpush.msra.mxu0 %v4009
        %v4011 = vand.u32 %v482, 4294901760
        %4012 = vmatpush.msra.mxu0 %v4011
        %v4013 = vand.u32 %v476, 4294901760
        %4014 = vmatpush.msra.mxu0 %v4013
        %v4015 = vand.u32 %v470, 4294901760
        %4016 = vmatpush.msra.mxu0 %v4015
        %v4017 = vand.u32 %v464, 4294901760
        %4018 = vmatpush.msra.mxu0 %v4017
        %v4019 = vand.u32 %v458, 4294901760
        %4020 = vmatpush.msra.mxu0 %v4019
        %v4021 = vand.u32 %v452, 4294901760
        %4022 = vmatpush.msra.mxu0 %v4021
        %v4023 = vand.u32 %v446, 4294901760
        %4024 = vmatpush.msra.mxu0 %v4023
        %v4025 = vand.u32 %v440, 4294901760
        %4026 = vmatpush.msra.mxu0 %v4025
        %v4027 = vand.u32 %v434, 4294901760
        %4028 = vmatpush.msra.mxu0 %v4027
        %v4029 = vand.u32 %v428, 4294901760
        %4030 = vmatpush.msra.mxu0 %v4029
        %v4031 = vand.u32 %v422, 4294901760
        %4032 = vmatpush.msra.mxu0 %v4031
        %v4033 = vand.u32 %v416, 4294901760
        %4034 = vmatpush.msra.mxu0 %v4033
        %v4035 = vand.u32 %v410, 4294901760
        %4036 = vmatpush.msra.mxu0 %v4035
        %v4037 = vand.u32 %v404, 4294901760
        %4038 = vmatpush.msra.mxu0 %v4037
        %v4039 = vand.u32 %v398, 4294901760
        %4040 = vmatpush.msra.mxu0 %v4039
        %v4041 = vand.u32 %v389, 4294901760
        %v4042 = vsub.f32 %v389, %v4041
        %v4043 = vand.u32 %v4042, 4294901760
        %v4044 = vsub.f32 %v4042, %v4043
        %v4045 = vand.u32 %v4044, 4294901760
        %4046 = vmatmul.f32.gmra.mxu0 %v4045
        %v4047 = vpop.f32.mrf.mxu0
        %v4048 = vadd.f32 %v592, %v4047
        %4049 = vdwg.mxu0
        %v4050 = vand.u32 %v488, 4294901760
        %v4051 = vsub.f32 %v488, %v4050
        %v4052 = vand.u32 %v4051, 4294901760
        %v4053 = vsub.f32 %v4051, %v4052
        %v4054 = vand.u32 %v4053, 4294901760
        %4055 = vmatpush.msra.mxu0 %v4054
        %v4056 = vand.u32 %v482, 4294901760
        %v4057 = vsub.f32 %v482, %v4056
        %v4058 = vand.u32 %v4057, 4294901760
        %v4059 = vsub.f32 %v4057, %v4058
        %v4060 = vand.u32 %v4059, 4294901760
        %4061 = vmatpush.msra.mxu0 %v4060
        %v4062 = vand.u32 %v476, 4294901760
        %v4063 = vsub.f32 %v476, %v4062
        %v4064 = vand.u32 %v4063, 4294901760
        %v4065 = vsub.f32 %v4063, %v4064
        %v4066 = vand.u32 %v4065, 4294901760
        %4067 = vmatpush.msra.mxu0 %v4066
        %v4068 = vand.u32 %v470, 4294901760
        %v4069 = vsub.f32 %v470, %v4068
        %v4070 = vand.u32 %v4069, 4294901760
        %v4071 = vsub.f32 %v4069, %v4070
        %v4072 = vand.u32 %v4071, 4294901760
        %4073 = vmatpush.msra.mxu0 %v4072
        %v4074 = vand.u32 %v464, 4294901760
        %v4075 = vsub.f32 %v464, %v4074
        %v4076 = vand.u32 %v4075, 4294901760
        %v4077 = vsub.f32 %v4075, %v4076
        %v4078 = vand.u32 %v4077, 4294901760
        %4079 = vmatpush.msra.mxu0 %v4078
        %v4080 = vand.u32 %v458, 4294901760
        %v4081 = vsub.f32 %v458, %v4080
        %v4082 = vand.u32 %v4081, 4294901760
        %v4083 = vsub.f32 %v4081, %v4082
        %v4084 = vand.u32 %v4083, 4294901760
        %4085 = vmatpush.msra.mxu0 %v4084
        %v4086 = vand.u32 %v452, 4294901760
        %v4087 = vsub.f32 %v452, %v4086
        %v4088 = vand.u32 %v4087, 4294901760
        %v4089 = vsub.f32 %v4087, %v4088
        %v4090 = vand.u32 %v4089, 4294901760
        %4091 = vmatpush.msra.mxu0 %v4090
        %v4092 = vand.u32 %v446, 4294901760
        %v4093 = vsub.f32 %v446, %v4092
        %v4094 = vand.u32 %v4093, 4294901760
        %v4095 = vsub.f32 %v4093, %v4094
        %v4096 = vand.u32 %v4095, 4294901760
        %4097 = vmatpush.msra.mxu0 %v4096
        %v4098 = vand.u32 %v440, 4294901760
        %v4099 = vsub.f32 %v440, %v4098
        %v4100 = vand.u32 %v4099, 4294901760
        %v4101 = vsub.f32 %v4099, %v4100
        %v4102 = vand.u32 %v4101, 4294901760
        %4103 = vmatpush.msra.mxu0 %v4102
        %v4104 = vand.u32 %v434, 4294901760
        %v4105 = vsub.f32 %v434, %v4104
        %v4106 = vand.u32 %v4105, 4294901760
        %v4107 = vsub.f32 %v4105, %v4106
        %v4108 = vand.u32 %v4107, 4294901760
        %4109 = vmatpush.msra.mxu0 %v4108
        %v4110 = vand.u32 %v428, 4294901760
        %v4111 = vsub.f32 %v428, %v4110
        %v4112 = vand.u32 %v4111, 4294901760
        %v4113 = vsub.f32 %v4111, %v4112
        %v4114 = vand.u32 %v4113, 4294901760
        %4115 = vmatpush.msra.mxu0 %v4114
        %v4116 = vand.u32 %v422, 4294901760
        %v4117 = vsub.f32 %v422, %v4116
        %v4118 = vand.u32 %v4117, 4294901760
        %v4119 = vsub.f32 %v4117, %v4118
        %v4120 = vand.u32 %v4119, 4294901760
        %4121 = vmatpush.msra.mxu0 %v4120
        %v4122 = vand.u32 %v416, 4294901760
        %v4123 = vsub.f32 %v416, %v4122
        %v4124 = vand.u32 %v4123, 4294901760
        %v4125 = vsub.f32 %v4123, %v4124
        %v4126 = vand.u32 %v4125, 4294901760
        %4127 = vmatpush.msra.mxu0 %v4126
        %v4128 = vand.u32 %v410, 4294901760
        %v4129 = vsub.f32 %v410, %v4128
        %v4130 = vand.u32 %v4129, 4294901760
        %v4131 = vsub.f32 %v4129, %v4130
        %v4132 = vand.u32 %v4131, 4294901760
        %4133 = vmatpush.msra.mxu0 %v4132
        %v4134 = vand.u32 %v404, 4294901760
        %v4135 = vsub.f32 %v404, %v4134
        %v4136 = vand.u32 %v4135, 4294901760
        %v4137 = vsub.f32 %v4135, %v4136
        %v4138 = vand.u32 %v4137, 4294901760
        %4139 = vmatpush.msra.mxu0 %v4138
        %v4140 = vand.u32 %v398, 4294901760
        %v4141 = vsub.f32 %v398, %v4140
        %v4142 = vand.u32 %v4141, 4294901760
        %v4143 = vsub.f32 %v4141, %v4142
        %v4144 = vand.u32 %v4143, 4294901760
        %4145 = vmatpush.msra.mxu0 %v4144
        %v4146 = vand.u32 %v389, 4294901760
        %4147 = vmatmul.f32.gmra.mxu0 %v4146
        %v4148 = vpop.f32.mrf.mxu0
        %v4149 = vadd.f32 %v4048, %v4148
        %4150 = vdwg.mxu0
        %v4151 = vand.u32 %v488, 4294901760
        %v4152 = vsub.f32 %v488, %v4151
        %4153 = vmatpush.msra.mxu0 %v4152
        %v4154 = vand.u32 %v482, 4294901760
        %v4155 = vsub.f32 %v482, %v4154
        %4156 = vmatpush.msra.mxu0 %v4155
        %v4157 = vand.u32 %v476, 4294901760
        %v4158 = vsub.f32 %v476, %v4157
        %4159 = vmatpush.msra.mxu0 %v4158
        %v4160 = vand.u32 %v470, 4294901760
        %v4161 = vsub.f32 %v470, %v4160
        %4162 = vmatpush.msra.mxu0 %v4161
        %v4163 = vand.u32 %v464, 4294901760
        %v4164 = vsub.f32 %v464, %v4163
        %4165 = vmatpush.msra.mxu0 %v4164
        %v4166 = vand.u32 %v458, 4294901760
        %v4167 = vsub.f32 %v458, %v4166
        %4168 = vmatpush.msra.mxu0 %v4167
        %v4169 = vand.u32 %v452, 4294901760
        %v4170 = vsub.f32 %v452, %v4169
        %4171 = vmatpush.msra.mxu0 %v4170
        %v4172 = vand.u32 %v446, 4294901760
        %v4173 = vsub.f32 %v446, %v4172
        %4174 = vmatpush.msra.mxu0 %v4173
        %v4175 = vand.u32 %v440, 4294901760
        %v4176 = vsub.f32 %v440, %v4175
        %4177 = vmatpush.msra.mxu0 %v4176
        %v4178 = vand.u32 %v434, 4294901760
        %v4179 = vsub.f32 %v434, %v4178
        %4180 = vmatpush.msra.mxu0 %v4179
        %v4181 = vand.u32 %v428, 4294901760
        %v4182 = vsub.f32 %v428, %v4181
        %4183 = vmatpush.msra.mxu0 %v4182
        %v4184 = vand.u32 %v422, 4294901760
        %v4185 = vsub.f32 %v422, %v4184
        %4186 = vmatpush.msra.mxu0 %v4185
        %v4187 = vand.u32 %v416, 4294901760
        %v4188 = vsub.f32 %v416, %v4187
        %4189 = vmatpush.msra.mxu0 %v4188
        %v4190 = vand.u32 %v410, 4294901760
        %v4191 = vsub.f32 %v410, %v4190
        %4192 = vmatpush.msra.mxu0 %v4191
        %v4193 = vand.u32 %v404, 4294901760
        %v4194 = vsub.f32 %v404, %v4193
        %4195 = vmatpush.msra.mxu0 %v4194
        %v4196 = vand.u32 %v398, 4294901760
        %v4197 = vsub.f32 %v398, %v4196
        %4198 = vmatpush.msra.mxu0 %v4197
        %v4199 = vand.u32 %v389, 4294901760
        %v4200 = vsub.f32 %v389, %v4199
        %4201 = vmatmul.f32.gmra.mxu0 %v4200
        %v4202 = vpop.f32.mrf.mxu0
        %v4203 = vadd.f32 %v4149, %v4202
        %4204 = vdwg.mxu0
        %v4205 = vand.u32 %v488, 4294901760
        %4206 = vmatpush.msra.mxu0 %v4205
        %v4207 = vand.u32 %v482, 4294901760
        %4208 = vmatpush.msra.mxu0 %v4207
        %v4209 = vand.u32 %v476, 4294901760
        %4210 = vmatpush.msra.mxu0 %v4209
        %v4211 = vand.u32 %v470, 4294901760
        %4212 = vmatpush.msra.mxu0 %v4211
        %v4213 = vand.u32 %v464, 4294901760
        %4214 = vmatpush.msra.mxu0 %v4213
        %v4215 = vand.u32 %v458, 4294901760
        %4216 = vmatpush.msra.mxu0 %v4215
        %v4217 = vand.u32 %v452, 4294901760
        %4218 = vmatpush.msra.mxu0 %v4217
        %v4219 = vand.u32 %v446, 4294901760
        %4220 = vmatpush.msra.mxu0 %v4219
        %v4221 = vand.u32 %v440, 4294901760
        %4222 = vmatpush.msra.mxu0 %v4221
        %v4223 = vand.u32 %v434, 4294901760
        %4224 = vmatpush.msra.mxu0 %v4223
        %v4225 = vand.u32 %v428, 4294901760
        %4226 = vmatpush.msra.mxu0 %v4225
        %v4227 = vand.u32 %v422, 4294901760
        %4228 = vmatpush.msra.mxu0 %v4227
        %v4229 = vand.u32 %v416, 4294901760
        %4230 = vmatpush.msra.mxu0 %v4229
        %v4231 = vand.u32 %v410, 4294901760
        %4232 = vmatpush.msra.mxu0 %v4231
        %v4233 = vand.u32 %v404, 4294901760
        %4234 = vmatpush.msra.mxu0 %v4233
        %v4235 = vand.u32 %v398, 4294901760
        %4236 = vmatpush.msra.mxu0 %v4235
        %v4237 = vand.u32 %v389, 4294901760
        %v4238 = vsub.f32 %v389, %v4237
        %v4239 = vand.u32 %v4238, 4294901760
        %4240 = vmatmul.f32.gmra.mxu0 %v4239
        %v4241 = vpop.f32.mrf.mxu0
        %v4242 = vadd.f32 %v4203, %v4241
        %4243 = vdwg.mxu0
        %v4244 = vand.u32 %v488, 4294901760
        %v4245 = vsub.f32 %v488, %v4244
        %v4246 = vand.u32 %v4245, 4294901760
        %4247 = vmatpush.msra.mxu0 %v4246
        %v4248 = vand.u32 %v482, 4294901760
        %v4249 = vsub.f32 %v482, %v4248
        %v4250 = vand.u32 %v4249, 4294901760
        %4251 = vmatpush.msra.mxu0 %v4250
        %v4252 = vand.u32 %v476, 4294901760
        %v4253 = vsub.f32 %v476, %v4252
        %v4254 = vand.u32 %v4253, 4294901760
        %4255 = vmatpush.msra.mxu0 %v4254
        %v4256 = vand.u32 %v470, 4294901760
        %v4257 = vsub.f32 %v470, %v4256
        %v4258 = vand.u32 %v4257, 4294901760
        %4259 = vmatpush.msra.mxu0 %v4258
        %v4260 = vand.u32 %v464, 4294901760
        %v4261 = vsub.f32 %v464, %v4260
        %v4262 = vand.u32 %v4261, 4294901760
        %4263 = vmatpush.msra.mxu0 %v4262
        %v4264 = vand.u32 %v458, 4294901760
        %v4265 = vsub.f32 %v458, %v4264
        %v4266 = vand.u32 %v4265, 4294901760
        %4267 = vmatpush.msra.mxu0 %v4266
        %v4268 = vand.u32 %v452, 4294901760
        %v4269 = vsub.f32 %v452, %v4268
        %v4270 = vand.u32 %v4269, 4294901760
        %4271 = vmatpush.msra.mxu0 %v4270
        %v4272 = vand.u32 %v446, 4294901760
        %v4273 = vsub.f32 %v446, %v4272
        %v4274 = vand.u32 %v4273, 4294901760
        %4275 = vmatpush.msra.mxu0 %v4274
        %v4276 = vand.u32 %v440, 4294901760
        %v4277 = vsub.f32 %v440, %v4276
        %v4278 = vand.u32 %v4277, 4294901760
        %4279 = vmatpush.msra.mxu0 %v4278
        %v4280 = vand.u32 %v434, 4294901760
        %v4281 = vsub.f32 %v434, %v4280
        %v4282 = vand.u32 %v4281, 4294901760
        %4283 = vmatpush.msra.mxu0 %v4282
        %v4284 = vand.u32 %v428, 4294901760
        %v4285 = vsub.f32 %v428, %v4284
        %v4286 = vand.u32 %v4285, 4294901760
        %4287 = vmatpush.msra.mxu0 %v4286
        %v4288 = vand.u32 %v422, 4294901760
        %v4289 = vsub.f32 %v422, %v4288
        %v4290 = vand.u32 %v4289, 4294901760
        %4291 = vmatpush.msra.mxu0 %v4290
        %v4292 = vand.u32 %v416, 4294901760
        %v4293 = vsub.f32 %v416, %v4292
        %v4294 = vand.u32 %v4293, 4294901760
        %4295 = vmatpush.msra.mxu0 %v4294
        %v4296 = vand.u32 %v410, 4294901760
        %v4297 = vsub.f32 %v410, %v4296
        %v4298 = vand.u32 %v4297, 4294901760
        %4299 = vmatpush.msra.mxu0 %v4298
        %v4300 = vand.u32 %v404, 4294901760
        %v4301 = vsub.f32 %v404, %v4300
        %v4302 = vand.u32 %v4301, 4294901760
        %4303 = vmatpush.msra.mxu0 %v4302
        %v4304 = vand.u32 %v398, 4294901760
        %v4305 = vsub.f32 %v398, %v4304
        %v4306 = vand.u32 %v4305, 4294901760
        %4307 = vmatpush.msra.mxu0 %v4306
        %v4308 = vand.u32 %v389, 4294901760
        %4309 = vmatmul.f32.gmra.mxu0 %v4308
        %v4310 = vpop.f32.mrf.mxu0
        %v4311 = vadd.f32 %v4242, %v4310
        %4312 = vdwg.mxu0
        %v4313 = vand.u32 %v488, 4294901760
        %4314 = vmatpush.msra.mxu0 %v4313
        %v4315 = vand.u32 %v482, 4294901760
        %4316 = vmatpush.msra.mxu0 %v4315
        %v4317 = vand.u32 %v476, 4294901760
        %4318 = vmatpush.msra.mxu0 %v4317
        %v4319 = vand.u32 %v470, 4294901760
        %4320 = vmatpush.msra.mxu0 %v4319
        %v4321 = vand.u32 %v464, 4294901760
        %4322 = vmatpush.msra.mxu0 %v4321
        %v4323 = vand.u32 %v458, 4294901760
        %4324 = vmatpush.msra.mxu0 %v4323
        %v4325 = vand.u32 %v452, 4294901760
        %4326 = vmatpush.msra.mxu0 %v4325
        %v4327 = vand.u32 %v446, 4294901760
        %4328 = vmatpush.msra.mxu0 %v4327
        %v4329 = vand.u32 %v440, 4294901760
        %4330 = vmatpush.msra.mxu0 %v4329
        %v4331 = vand.u32 %v434, 4294901760
        %4332 = vmatpush.msra.mxu0 %v4331
        %v4333 = vand.u32 %v428, 4294901760
        %4334 = vmatpush.msra.mxu0 %v4333
        %v4335 = vand.u32 %v422, 4294901760
        %4336 = vmatpush.msra.mxu0 %v4335
        %v4337 = vand.u32 %v416, 4294901760
        %4338 = vmatpush.msra.mxu0 %v4337
        %v4339 = vand.u32 %v410, 4294901760
        %4340 = vmatpush.msra.mxu0 %v4339
        %v4341 = vand.u32 %v404, 4294901760
        %4342 = vmatpush.msra.mxu0 %v4341
        %v4343 = vand.u32 %v398, 4294901760
        %4344 = vmatpush.msra.mxu0 %v4343
        %v4345 = vand.u32 %v389, 4294901760
        %4346 = vmatmul.f32.gmra.mxu0 %v4345
        %v4347 = vpop.f32.mrf.mxu0
        %v4348 = vadd.f32 %v4311, %v4347
        %4349 = vdwg.mxu0
        %v4350 = vand.u32 %v584, 4294901760
        %4351 = vmatpush.msra.mxu0 %v4350
        %v4352 = vand.u32 %v578, 4294901760
        %4353 = vmatpush.msra.mxu0 %v4352
        %v4354 = vand.u32 %v572, 4294901760
        %4355 = vmatpush.msra.mxu0 %v4354
        %v4356 = vand.u32 %v566, 4294901760
        %4357 = vmatpush.msra.mxu0 %v4356
        %v4358 = vand.u32 %v560, 4294901760
        %4359 = vmatpush.msra.mxu0 %v4358
        %v4360 = vand.u32 %v554, 4294901760
        %4361 = vmatpush.msra.mxu0 %v4360
        %v4362 = vand.u32 %v548, 4294901760
        %4363 = vmatpush.msra.mxu0 %v4362
        %v4364 = vand.u32 %v542, 4294901760
        %4365 = vmatpush.msra.mxu0 %v4364
        %v4366 = vand.u32 %v536, 4294901760
        %4367 = vmatpush.msra.mxu0 %v4366
        %v4368 = vand.u32 %v530, 4294901760
        %4369 = vmatpush.msra.mxu0 %v4368
        %v4370 = vand.u32 %v524, 4294901760
        %4371 = vmatpush.msra.mxu0 %v4370
        %v4372 = vand.u32 %v518, 4294901760
        %4373 = vmatpush.msra.mxu0 %v4372
        %v4374 = vand.u32 %v512, 4294901760
        %4375 = vmatpush.msra.mxu0 %v4374
        %v4376 = vand.u32 %v506, 4294901760
        %4377 = vmatpush.msra.mxu0 %v4376
        %v4378 = vand.u32 %v500, 4294901760
        %4379 = vmatpush.msra.mxu0 %v4378
        %v4380 = vand.u32 %v494, 4294901760
        %4381 = vmatpush.msra.mxu0 %v4380
        %v4382 = vand.u32 %v390, 4294901760
        %v4383 = vsub.f32 %v390, %v4382
        %v4384 = vand.u32 %v4383, 4294901760
        %v4385 = vsub.f32 %v4383, %v4384
        %v4386 = vand.u32 %v4385, 4294901760
        %4387 = vmatmul.f32.gmra.mxu0 %v4386
        %v4388 = vpop.f32.mrf.mxu0
        %v4389 = vadd.f32 %v4348, %v4388
        %4390 = vdwg.mxu0
        %v4391 = vand.u32 %v584, 4294901760
        %v4392 = vsub.f32 %v584, %v4391
        %v4393 = vand.u32 %v4392, 4294901760
        %v4394 = vsub.f32 %v4392, %v4393
        %v4395 = vand.u32 %v4394, 4294901760
        %4396 = vmatpush.msra.mxu0 %v4395
        %v4397 = vand.u32 %v578, 4294901760
        %v4398 = vsub.f32 %v578, %v4397
        %v4399 = vand.u32 %v4398, 4294901760
        %v4400 = vsub.f32 %v4398, %v4399
        %v4401 = vand.u32 %v4400, 4294901760
        %4402 = vmatpush.msra.mxu0 %v4401
        %v4403 = vand.u32 %v572, 4294901760
        %v4404 = vsub.f32 %v572, %v4403
        %v4405 = vand.u32 %v4404, 4294901760
        %v4406 = vsub.f32 %v4404, %v4405
        %v4407 = vand.u32 %v4406, 4294901760
        %4408 = vmatpush.msra.mxu0 %v4407
        %v4409 = vand.u32 %v566, 4294901760
        %v4410 = vsub.f32 %v566, %v4409
        %v4411 = vand.u32 %v4410, 4294901760
        %v4412 = vsub.f32 %v4410, %v4411
        %v4413 = vand.u32 %v4412, 4294901760
        %4414 = vmatpush.msra.mxu0 %v4413
        %v4415 = vand.u32 %v560, 4294901760
        %v4416 = vsub.f32 %v560, %v4415
        %v4417 = vand.u32 %v4416, 4294901760
        %v4418 = vsub.f32 %v4416, %v4417
        %v4419 = vand.u32 %v4418, 4294901760
        %4420 = vmatpush.msra.mxu0 %v4419
        %v4421 = vand.u32 %v554, 4294901760
        %v4422 = vsub.f32 %v554, %v4421
        %v4423 = vand.u32 %v4422, 4294901760
        %v4424 = vsub.f32 %v4422, %v4423
        %v4425 = vand.u32 %v4424, 4294901760
        %4426 = vmatpush.msra.mxu0 %v4425
        %v4427 = vand.u32 %v548, 4294901760
        %v4428 = vsub.f32 %v548, %v4427
        %v4429 = vand.u32 %v4428, 4294901760
        %v4430 = vsub.f32 %v4428, %v4429
        %v4431 = vand.u32 %v4430, 4294901760
        %4432 = vmatpush.msra.mxu0 %v4431
        %v4433 = vand.u32 %v542, 4294901760
        %v4434 = vsub.f32 %v542, %v4433
        %v4435 = vand.u32 %v4434, 4294901760
        %v4436 = vsub.f32 %v4434, %v4435
        %v4437 = vand.u32 %v4436, 4294901760
        %4438 = vmatpush.msra.mxu0 %v4437
        %v4439 = vand.u32 %v536, 4294901760
        %v4440 = vsub.f32 %v536, %v4439
        %v4441 = vand.u32 %v4440, 4294901760
        %v4442 = vsub.f32 %v4440, %v4441
        %v4443 = vand.u32 %v4442, 4294901760
        %4444 = vmatpush.msra.mxu0 %v4443
        %v4445 = vand.u32 %v530, 4294901760
        %v4446 = vsub.f32 %v530, %v4445
        %v4447 = vand.u32 %v4446, 4294901760
        %v4448 = vsub.f32 %v4446, %v4447
        %v4449 = vand.u32 %v4448, 4294901760
        %4450 = vmatpush.msra.mxu0 %v4449
        %v4451 = vand.u32 %v524, 4294901760
        %v4452 = vsub.f32 %v524, %v4451
        %v4453 = vand.u32 %v4452, 4294901760
        %v4454 = vsub.f32 %v4452, %v4453
        %v4455 = vand.u32 %v4454, 4294901760
        %4456 = vmatpush.msra.mxu0 %v4455
        %v4457 = vand.u32 %v518, 4294901760
        %v4458 = vsub.f32 %v518, %v4457
        %v4459 = vand.u32 %v4458, 4294901760
        %v4460 = vsub.f32 %v4458, %v4459
        %v4461 = vand.u32 %v4460, 4294901760
        %4462 = vmatpush.msra.mxu0 %v4461
        %v4463 = vand.u32 %v512, 4294901760
        %v4464 = vsub.f32 %v512, %v4463
        %v4465 = vand.u32 %v4464, 4294901760
        %v4466 = vsub.f32 %v4464, %v4465
        %v4467 = vand.u32 %v4466, 4294901760
        %4468 = vmatpush.msra.mxu0 %v4467
        %v4469 = vand.u32 %v506, 4294901760
        %v4470 = vsub.f32 %v506, %v4469
        %v4471 = vand.u32 %v4470, 4294901760
        %v4472 = vsub.f32 %v4470, %v4471
        %v4473 = vand.u32 %v4472, 4294901760
        %4474 = vmatpush.msra.mxu0 %v4473
        %v4475 = vand.u32 %v500, 4294901760
        %v4476 = vsub.f32 %v500, %v4475
        %v4477 = vand.u32 %v4476, 4294901760
        %v4478 = vsub.f32 %v4476, %v4477
        %v4479 = vand.u32 %v4478, 4294901760
        %4480 = vmatpush.msra.mxu0 %v4479
        %v4481 = vand.u32 %v494, 4294901760
        %v4482 = vsub.f32 %v494, %v4481
        %v4483 = vand.u32 %v4482, 4294901760
        %v4484 = vsub.f32 %v4482, %v4483
        %v4485 = vand.u32 %v4484, 4294901760
        %4486 = vmatpush.msra.mxu0 %v4485
        %v4487 = vand.u32 %v390, 4294901760
        %4488 = vmatmul.f32.gmra.mxu0 %v4487
        %v4489 = vpop.f32.mrf.mxu0
        %v4490 = vadd.f32 %v4389, %v4489
        %4491 = vdwg.mxu0
        %v4492 = vand.u32 %v584, 4294901760
        %v4493 = vsub.f32 %v584, %v4492
        %4494 = vmatpush.msra.mxu0 %v4493
        %v4495 = vand.u32 %v578, 4294901760
        %v4496 = vsub.f32 %v578, %v4495
        %4497 = vmatpush.msra.mxu0 %v4496
        %v4498 = vand.u32 %v572, 4294901760
        %v4499 = vsub.f32 %v572, %v4498
        %4500 = vmatpush.msra.mxu0 %v4499
        %v4501 = vand.u32 %v566, 4294901760
        %v4502 = vsub.f32 %v566, %v4501
        %4503 = vmatpush.msra.mxu0 %v4502
        %v4504 = vand.u32 %v560, 4294901760
        %v4505 = vsub.f32 %v560, %v4504
        %4506 = vmatpush.msra.mxu0 %v4505
        %v4507 = vand.u32 %v554, 4294901760
        %v4508 = vsub.f32 %v554, %v4507
        %4509 = vmatpush.msra.mxu0 %v4508
        %v4510 = vand.u32 %v548, 4294901760
        %v4511 = vsub.f32 %v548, %v4510
        %4512 = vmatpush.msra.mxu0 %v4511
        %v4513 = vand.u32 %v542, 4294901760
        %v4514 = vsub.f32 %v542, %v4513
        %4515 = vmatpush.msra.mxu0 %v4514
        %v4516 = vand.u32 %v536, 4294901760
        %v4517 = vsub.f32 %v536, %v4516
        %4518 = vmatpush.msra.mxu0 %v4517
        %v4519 = vand.u32 %v530, 4294901760
        %v4520 = vsub.f32 %v530, %v4519
        %4521 = vmatpush.msra.mxu0 %v4520
        %v4522 = vand.u32 %v524, 4294901760
        %v4523 = vsub.f32 %v524, %v4522
        %4524 = vmatpush.msra.mxu0 %v4523
        %v4525 = vand.u32 %v518, 4294901760
        %v4526 = vsub.f32 %v518, %v4525
        %4527 = vmatpush.msra.mxu0 %v4526
        %v4528 = vand.u32 %v512, 4294901760
        %v4529 = vsub.f32 %v512, %v4528
        %4530 = vmatpush.msra.mxu0 %v4529
        %v4531 = vand.u32 %v506, 4294901760
        %v4532 = vsub.f32 %v506, %v4531
        %4533 = vmatpush.msra.mxu0 %v4532
        %v4534 = vand.u32 %v500, 4294901760
        %v4535 = vsub.f32 %v500, %v4534
        %4536 = vmatpush.msra.mxu0 %v4535
        %v4537 = vand.u32 %v494, 4294901760
        %v4538 = vsub.f32 %v494, %v4537
        %4539 = vmatpush.msra.mxu0 %v4538
        %v4540 = vand.u32 %v390, 4294901760
        %v4541 = vsub.f32 %v390, %v4540
        %4542 = vmatmul.f32.gmra.mxu0 %v4541
        %v4543 = vpop.f32.mrf.mxu0
        %v4544 = vadd.f32 %v4490, %v4543
        %4545 = vdwg.mxu0
        %v4546 = vand.u32 %v584, 4294901760
        %4547 = vmatpush.msra.mxu0 %v4546
        %v4548 = vand.u32 %v578, 4294901760
        %4549 = vmatpush.msra.mxu0 %v4548
        %v4550 = vand.u32 %v572, 4294901760
        %4551 = vmatpush.msra.mxu0 %v4550
        %v4552 = vand.u32 %v566, 4294901760
        %4553 = vmatpush.msra.mxu0 %v4552
        %v4554 = vand.u32 %v560, 4294901760
        %4555 = vmatpush.msra.mxu0 %v4554
        %v4556 = vand.u32 %v554, 4294901760
        %4557 = vmatpush.msra.mxu0 %v4556
        %v4558 = vand.u32 %v548, 4294901760
        %4559 = vmatpush.msra.mxu0 %v4558
        %v4560 = vand.u32 %v542, 4294901760
        %4561 = vmatpush.msra.mxu0 %v4560
        %v4562 = vand.u32 %v536, 4294901760
        %4563 = vmatpush.msra.mxu0 %v4562
        %v4564 = vand.u32 %v530, 4294901760
        %4565 = vmatpush.msra.mxu0 %v4564
        %v4566 = vand.u32 %v524, 4294901760
        %4567 = vmatpush.msra.mxu0 %v4566
        %v4568 = vand.u32 %v518, 4294901760
        %4569 = vmatpush.msra.mxu0 %v4568
        %v4570 = vand.u32 %v512, 4294901760
        %4571 = vmatpush.msra.mxu0 %v4570
        %v4572 = vand.u32 %v506, 4294901760
        %4573 = vmatpush.msra.mxu0 %v4572
        %v4574 = vand.u32 %v500, 4294901760
        %4575 = vmatpush.msra.mxu0 %v4574
        %v4576 = vand.u32 %v494, 4294901760
        %4577 = vmatpush.msra.mxu0 %v4576
        %v4578 = vand.u32 %v390, 4294901760
        %v4579 = vsub.f32 %v390, %v4578
        %v4580 = vand.u32 %v4579, 4294901760
        %4581 = vmatmul.f32.gmra.mxu0 %v4580
        %v4582 = vpop.f32.mrf.mxu0
        %v4583 = vadd.f32 %v4544, %v4582
        %4584 = vdwg.mxu0
        %v4585 = vand.u32 %v584, 4294901760
        %v4586 = vsub.f32 %v584, %v4585
        %v4587 = vand.u32 %v4586, 4294901760
        %4588 = vmatpush.msra.mxu0 %v4587
        %v4589 = vand.u32 %v578, 4294901760
        %v4590 = vsub.f32 %v578, %v4589
        %v4591 = vand.u32 %v4590, 4294901760
        %4592 = vmatpush.msra.mxu0 %v4591
        %v4593 = vand.u32 %v572, 4294901760
        %v4594 = vsub.f32 %v572, %v4593
        %v4595 = vand.u32 %v4594, 4294901760
        %4596 = vmatpush.msra.mxu0 %v4595
        %v4597 = vand.u32 %v566, 4294901760
        %v4598 = vsub.f32 %v566, %v4597
        %v4599 = vand.u32 %v4598, 4294901760
        %4600 = vmatpush.msra.mxu0 %v4599
        %v4601 = vand.u32 %v560, 4294901760
        %v4602 = vsub.f32 %v560, %v4601
        %v4603 = vand.u32 %v4602, 4294901760
        %4604 = vmatpush.msra.mxu0 %v4603
        %v4605 = vand.u32 %v554, 4294901760
        %v4606 = vsub.f32 %v554, %v4605
        %v4607 = vand.u32 %v4606, 4294901760
        %4608 = vmatpush.msra.mxu0 %v4607
        %v4609 = vand.u32 %v548, 4294901760
        %v4610 = vsub.f32 %v548, %v4609
        %v4611 = vand.u32 %v4610, 4294901760
        %4612 = vmatpush.msra.mxu0 %v4611
        %v4613 = vand.u32 %v542, 4294901760
        %v4614 = vsub.f32 %v542, %v4613
        %v4615 = vand.u32 %v4614, 4294901760
        %4616 = vmatpush.msra.mxu0 %v4615
        %v4617 = vand.u32 %v536, 4294901760
        %v4618 = vsub.f32 %v536, %v4617
        %v4619 = vand.u32 %v4618, 4294901760
        %4620 = vmatpush.msra.mxu0 %v4619
        %v4621 = vand.u32 %v530, 4294901760
        %v4622 = vsub.f32 %v530, %v4621
        %v4623 = vand.u32 %v4622, 4294901760
        %4624 = vmatpush.msra.mxu0 %v4623
        %v4625 = vand.u32 %v524, 4294901760
        %v4626 = vsub.f32 %v524, %v4625
        %v4627 = vand.u32 %v4626, 4294901760
        %4628 = vmatpush.msra.mxu0 %v4627
        %v4629 = vand.u32 %v518, 4294901760
        %v4630 = vsub.f32 %v518, %v4629
        %v4631 = vand.u32 %v4630, 4294901760
        %4632 = vmatpush.msra.mxu0 %v4631
        %v4633 = vand.u32 %v512, 4294901760
        %v4634 = vsub.f32 %v512, %v4633
        %v4635 = vand.u32 %v4634, 4294901760
        %4636 = vmatpush.msra.mxu0 %v4635
        %v4637 = vand.u32 %v506, 4294901760
        %v4638 = vsub.f32 %v506, %v4637
        %v4639 = vand.u32 %v4638, 4294901760
        %4640 = vmatpush.msra.mxu0 %v4639
        %v4641 = vand.u32 %v500, 4294901760
        %v4642 = vsub.f32 %v500, %v4641
        %v4643 = vand.u32 %v4642, 4294901760
        %4644 = vmatpush.msra.mxu0 %v4643
        %v4645 = vand.u32 %v494, 4294901760
        %v4646 = vsub.f32 %v494, %v4645
        %v4647 = vand.u32 %v4646, 4294901760
        %4648 = vmatpush.msra.mxu0 %v4647
        %v4649 = vand.u32 %v390, 4294901760
        %4650 = vmatmul.f32.gmra.mxu0 %v4649
        %v4651 = vpop.f32.mrf.mxu0
        %v4652 = vadd.f32 %v4583, %v4651
        %4653 = vdwg.mxu0
        %v4654 = vand.u32 %v584, 4294901760
        %4655 = vmatpush.msra.mxu0 %v4654
        %v4656 = vand.u32 %v578, 4294901760
        %4657 = vmatpush.msra.mxu0 %v4656
        %v4658 = vand.u32 %v572, 4294901760
        %4659 = vmatpush.msra.mxu0 %v4658
        %v4660 = vand.u32 %v566, 4294901760
        %4661 = vmatpush.msra.mxu0 %v4660
        %v4662 = vand.u32 %v560, 4294901760
        %4663 = vmatpush.msra.mxu0 %v4662
        %v4664 = vand.u32 %v554, 4294901760
        %4665 = vmatpush.msra.mxu0 %v4664
        %v4666 = vand.u32 %v548, 4294901760
        %4667 = vmatpush.msra.mxu0 %v4666
        %v4668 = vand.u32 %v542, 4294901760
        %4669 = vmatpush.msra.mxu0 %v4668
        %v4670 = vand.u32 %v536, 4294901760
        %4671 = vmatpush.msra.mxu0 %v4670
        %v4672 = vand.u32 %v530, 4294901760
        %4673 = vmatpush.msra.mxu0 %v4672
        %v4674 = vand.u32 %v524, 4294901760
        %4675 = vmatpush.msra.mxu0 %v4674
        %v4676 = vand.u32 %v518, 4294901760
        %4677 = vmatpush.msra.mxu0 %v4676
        %v4678 = vand.u32 %v512, 4294901760
        %4679 = vmatpush.msra.mxu0 %v4678
        %v4680 = vand.u32 %v506, 4294901760
        %4681 = vmatpush.msra.mxu0 %v4680
        %v4682 = vand.u32 %v500, 4294901760
        %4683 = vmatpush.msra.mxu0 %v4682
        %v4684 = vand.u32 %v494, 4294901760
        %4685 = vmatpush.msra.mxu0 %v4684
        %v4686 = vand.u32 %v390, 4294901760
        %4687 = vmatmul.f32.gmra.mxu0 %v4686
        %v4688 = vpop.f32.mrf.mxu0
        %v4689 = vadd.f32 %v4652, %v4688
        %4690 = vdwg.mxu0
        %4691 = vst [vmem:[%s340] sm:$0xff] %v1279
        %4692 = vst [vmem:[%s340 + $0x8] sm:$0xff] %v1961
        %4693 = vst [vmem:[%s340 + $0x10] sm:$0xff] %v2643
        %4694 = vst [vmem:[%s340 + $0x18] sm:$0xff] %v3325
        %4695 = vst [vmem:[%s340 + $0x20] sm:$0xff] %v4007
        %4696 = vst [vmem:[%s340 + $0x28] sm:$0xff] %v4689
        %s4697 = sand.u32 %s147, 1
        %s4698 = scalar_lea.sflag [#allocation4], %s4697
        %s4699 = sand.u32 %s147, 1
        %s4700 = smul.addr %s4699, 16
        %s4701 = scalar_lea.vmem [#allocation11], %s4700
        %s4702 = sand.u32 %s173, 1
        %s4703 = scalar_lea.sflag [#allocation13], %s4702
        %s4704 = sand.u32 %s173, 1
        %s4705 = smul.addr %s4704, 48
        %s4706 = scalar_lea.vmem [#allocation12], %s4705
        // Predicated region
        $region61: #{tpu_custom_call.1} parent=39 // pred_check
          %p4707 = pneg %p157
        $region62: #{tpu_custom_call.1} parent=39 // pred_check_branch
          %4709 = sbr.rel (%p4707) target = $region64
        $region63: #{tpu_custom_call.1} parent=39 // pred_region
          %4711 = vsyncadd %s4698, 0
          %s4712 = smul.addr %s29, 2
          %s4713 = smul.addr %s4712, 8
          %s4714 = scalar_lea.hbm %s5, %s4713
          %s4716 = sshll.u32 %s4701, 4
          %s4717 = int_to_ptr.vmem [resolvable:$true] %s4716
          %s4718 = sshll.u32 %s4714, 4
          %s4719 = int_to_ptr.hbm [resolvable:$true] %s4718
          %4721 = dma.vmem_to_hbm [thread:$0]  %s4717, 256, %s4719, %s4698
        $region64: #{tpu_custom_call.1} parent=39 // pred_fallthru
          _
        // Predicated region
        $region65: #{tpu_custom_call.1} parent=39 // pred_check
          %p4722 = pneg %p183
        $region66: #{tpu_custom_call.1} parent=39 // pred_check_branch
          %4724 = sbr.rel (%p4722) target = $region68
        $region67: #{tpu_custom_call.1} parent=39 // pred_region
          %4726 = vsyncadd %s4703, 0
          %s4727 = smul.addr %s29, 6
          %s4728 = smul.addr %s4727, 8
          %s4729 = scalar_lea.hbm %s6, %s4728
          %s4731 = sshll.u32 %s4706, 4
          %s4732 = int_to_ptr.vmem [resolvable:$true] %s4731
          %s4733 = sshll.u32 %s4729, 4
          %s4734 = int_to_ptr.hbm [resolvable:$true] %s4733
          %4736 = dma.vmem_to_hbm [thread:$0]  %s4732, 768, %s4734, %s4703
        $region68: #{tpu_custom_call.1} parent=39 // pred_fallthru
          _
      $region40: #{tpu_custom_call.1} parent=5 // pred_fallthru
        _
      %p4737 = scmp.le.s32.totalorder 2, %s24
      // Predicated region
      $region69: #{tpu_custom_call.1} parent=5 // pred_check
        %p4738 = pneg %p4737
      $region70: #{tpu_custom_call.1} parent=5 // pred_check_branch
        %4740 = sbr.rel (%p4738) target = $region72
      $region71: #{tpu_custom_call.1} parent=5 // pred_region
        %s4741 = ssub.s32 %s24, 2
        // Predicated region
        $region73: #{tpu_custom_call.1} parent=71 // pred_check
          %p4742 = pneg %p163
        $region74: #{tpu_custom_call.1} parent=71 // pred_check_branch
          %4744 = sbr.rel (%p4742) target = $region76
        $region75: #{tpu_custom_call.1} parent=71 // pred_region
          %s4745 = sand.u32 %s148, 1
          %s4746 = scalar_lea.sflag [#allocation4], %s4745
          %s4747 = sand.u32 %s148, 1
          %s4748 = smul.addr %s4747, 16
          %s4749 = scalar_lea.vmem [#allocation11], %s4748
          %4751 = dma.done %s4746, 256
        $region76: #{tpu_custom_call.1} parent=71 // pred_fallthru
          _
        // Predicated region
        $region77: #{tpu_custom_call.1} parent=71 // pred_check
          %p4752 = pneg %p189
        $region78: #{tpu_custom_call.1} parent=71 // pred_check_branch
          %4754 = sbr.rel (%p4752) target = $region80
        $region79: #{tpu_custom_call.1} parent=71 // pred_region
          %s4755 = sand.u32 %s174, 1
          %s4756 = scalar_lea.sflag [#allocation13], %s4755
          %s4757 = sand.u32 %s174, 1
          %s4758 = smul.addr %s4757, 48
          %s4759 = scalar_lea.vmem [#allocation12], %s4758
          %4761 = dma.done %s4756, 768
        $region80: #{tpu_custom_call.1} parent=71 // pred_fallthru
          _
      $region72: #{tpu_custom_call.1} parent=5 // pred_fallthru
        _
    $region6: #{tpu_custom_call.1} parent=1 // loop_footer
      %s28 = sadd.s32 1, %s24
    $region7: #{tpu_custom_call.1} parent=1 // loop_footer_branch
      %23 = sbr.rel target = $region3
    $region8: #{tpu_custom_call.1} parent=1 // loop_exit
      _
    %4762 = vsyncpa [#allocation3], 1
    %s4763 = scalar_lea.sflag [#allocation3], 1
    %4764 = vsyncpa %s4763, 1
    %4765 = vsyncpa [#allocation6], 1
    %4766 = vsyncpa [#allocation9], 1
    %4767 = vsyncpa [#allocation4], 1
    %s4768 = scalar_lea.sflag [#allocation4], 1
    %4769 = vsyncpa %s4768, 1
    %4770 = vsyncpa [#allocation13], 1
    %s4771 = scalar_lea.sflag [#allocation13], 1
    %4772 = vsyncpa %s4771, 1

</llo_original>
